<compile_context>
chip_gen: v7x
topology: tpu7x:2x2x1
jax: 0.10.0
libtpu: 0.0.40
codegen_flags: <defaults>
</compile_context>

<pallas_src>
import jax
import jax.numpy as jnp
import numpy as np
from jax.experimental import pallas as pl
from jax.experimental.pallas import tpu as pltpu

LEVEL_CHANNELS = (256, 512, 1024, 2048)   # R50-FPN body layer1..layer4
IN_FEATURES = sum(LEVEL_CHANNELS)         # 3840 (fasterRCNN branch)
LANE = 128


# ---------------------------------------------------------------------------
# Fused kernel: per level (spatial max -> ReLU -> partial matmul, f32 acc),
# then bias + L2 normalize.  Feature refs are channels-last (B, HW_l, C_l)
# bf16 so C_l (a multiple of 128) sits on the lane axis and the spatial max is
# a sublane-direction reduce over full 128-lane vregs.
# ---------------------------------------------------------------------------
def _fused_kernel(f1_ref, f2_ref, f3_ref, f4_ref, w_ref, b_ref, o_ref):
    acc = None
    off = 0
    for ref, c in zip((f1_ref, f2_ref, f3_ref, f4_ref), LEVEL_CHANNELS):
        x = ref[...]                                   # (B, HW, C_l) bf16
        pooled = jnp.max(x, axis=1)                    # (B, C_l) bf16 (max is exact)
        pooled = jnp.maximum(pooled, 0.0)              # ReLU, still bf16 (exact)
        # K-slice offsets (0, 256, 768, 1792) are all multiples of 8 -> tile
        # aligned static slices of the weight ref.
        part = jnp.dot(pooled.astype(w_ref.dtype), w_ref[off:off + c, :],
                       preferred_element_type=jnp.float32)   # MXU, f32 accumulate
        acc = part if acc is None else acc + part
        off += c
    y = acc + b_ref[...]                               # (B, D_pad) f32
    # Matches the module exactly: x / sqrt(sum x^2), no epsilon.  rsqrt -> EUP.
    inv_norm = jax.lax.rsqrt(jnp.sum(y * y, axis=-1, keepdims=True))
    o_ref[...] = (y * inv_norm).astype(o_ref.dtype)    # lane-dense store (D_pad % 128 == 0)


def embedding_net_image_forward(feature_maps, fc_w, fc_b):
    """Fused fasterRCNN-branch forward.

    feature_maps : list of 4 channels-last arrays (B, H_l*W_l, C_l), bf16,
                   with C_l = (256, 512, 1024, 2048).
    fc_w         : (3840, dim_out_fc) f32      fc_b : (dim_out_fc,) f32
    Returns (B, dim_out_fc) f32 L2-normalized embeddings.
    """
    assert len(feature_maps) == len(LEVEL_CHANNELS)
    for fm, c in zip(feature_maps, LEVEL_CHANNELS):
        assert fm.ndim == 3 and fm.shape[-1] == c, (fm.shape, c)
    B = feature_maps[0].shape[0]
    D = fc_w.shape[1]
    D_pad = ((D + LANE - 1) // LANE) * LANE

    # Lane-dense N: zero-pad fc weight/bias columns to a multiple of 128.  The
    # padded columns of y are exactly 0 => the L2 norm is unchanged; sliced off
    # below.  bf16 weight halves its DMA bytes (products exact, f32 accumulate).
    w16 = fc_w.astype(jnp.bfloat16)
    if D_pad == D:
        w_pad = w16
        b_pad = fc_b.reshape(1, D).astype(jnp.float32)
    else:
        w_pad = jnp.zeros((IN_FEATURES, D_pad), jnp.bfloat16).at[:, :D].set(w16)
        b_pad = jnp.zeros((1, D_pad), jnp.float32).at[:, :D].set(
            fc_b.reshape(1, D).astype(jnp.float32))

    in_specs = (
        [pl.BlockSpec(fm.shape, lambda: (0, 0, 0)) for fm in feature_maps]
        + [pl.BlockSpec((IN_FEATURES, D_pad), lambda: (0, 0)),
           pl.BlockSpec((1, D_pad), lambda: (0, 0))]
    )

    feat_bytes = sum(int(fm.size) * fm.dtype.itemsize for fm in feature_maps)
    io_bytes = feat_bytes + IN_FEATURES * D_pad * 2 + D_pad * 4 + B * D_pad * 4
    vmem_limit = int(min(max(3 * io_bytes, 32 << 20), 56 << 20))

    out = pl.pallas_call(
        _fused_kernel,
        out_shape=jax.ShapeDtypeStruct((B, D_pad), jnp.float32),
        in_specs=in_specs,
        out_specs=pl.BlockSpec((B, D_pad), lambda: (0, 0)),
        compiler_params=pltpu.CompilerParams(vmem_limit_bytes=vmem_limit),
        cost_estimate=pl.CostEstimate(
            flops=2 * B * IN_FEATURES * D_pad + sum(int(fm.size) for fm in feature_maps),
            transcendentals=B,
            bytes_accessed=io_bytes),
    )(*feature_maps, w_pad, b_pad)

    return out[:, :D] if D_pad != D else out


def nchw_to_kernel_layout(fm_nchw, compute_dtype=jnp.bfloat16):
    """Optional adapter for torch-style NCHW f32 backbone outputs.  Costs one
    extra HBM pass per feature map; prefer configuring the backbone to emit
    channels-last bf16 directly (as done in __main__)."""
    b, c, h, w = fm_nchw.shape
    return jnp.transpose(fm_nchw, (0, 2, 3, 1)).reshape(b, h * w, c).astype(compute_dtype)


# ---------------------------------------------------------------------------
# Pure-JAX reference mirroring the PyTorch forward (per-level spatial max ->
# concat -> ReLU -> Linear -> x / sqrt(sum x^2)), consuming the same
# channels-last inputs and the same bf16-quantized fc weight as the kernel.
# ---------------------------------------------------------------------------
def _reference_forward(feature_maps, fc_w, fc_b):
    pooled = [jnp.max(fm.astype(jnp.float32), axis=1) for fm in feature_maps]
    feats = jnp.maximum(jnp.concatenate(pooled, axis=1), 0.0)
    w = fc_w.astype(jnp.bfloat16).astype(jnp.float32)
    y = feats.astype(jnp.bfloat16).astype(jnp.float32) @ w + fc_b.astype(jnp.float32)
    return y / jnp.sqrt(jnp.sum(y * y, axis=-1, keepdims=True))


if __name__ == "__main__":
    key = jax.random.PRNGKey(0)

    B = 2
    dim_out_fc = 32
    level_spatial = (16, 8, 4, 2)          # H_l = W_l per level (toy sizes)

    keys = jax.random.split(key, len(LEVEL_CHANNELS) + 2)
    # Backbone stand-in: channels-last bf16 feature maps (B, H*W, C_l).
    feature_maps = [
        jax.random.normal(keys[i], (B, s * s, c), dtype=jnp.float32).astype(jnp.bfloat16)
        for i, (c, s) in enumerate(zip(LEVEL_CHANNELS, level_spatial))
    ]

    # fc params: kaiming_uniform_(fan_in, relu) => bound = sqrt(6 / fan_in)
    bound = float(np.sqrt(6.0 / IN_FEATURES))
    fc_w = jax.random.uniform(keys[-2], (IN_FEATURES, dim_out_fc),
                              minval=-bound, maxval=bound, dtype=jnp.float32)
    fc_b = jax.random.uniform(keys[-1], (dim_out_fc,),
                              minval=-1.0 / float(np.sqrt(IN_FEATURES)),
                              maxval=1.0 / float(np.sqrt(IN_FEATURES)),
                              dtype=jnp.float32)

    fwd = jax.jit(embedding_net_image_forward)
    out = jax.block_until_ready(fwd(feature_maps, fc_w, fc_b))

    ref = _reference_forward(feature_maps, fc_w, fc_b)
    np.testing.assert_allclose(np.asarray(out), np.asarray(ref), rtol=1e-3, atol=1e-3)
    assert out.shape == (B, dim_out_fc)

    print("KERNEL_OK")
</pallas_src>

<mosaic_0001>
module attributes {stable_mosaic.version = 11 : i64} {
  func.func @_fused_kernel(%arg0: memref<2x256x256xbf16, #tpu.memory_space<vmem>>, %arg1: memref<2x64x512xbf16, #tpu.memory_space<vmem>>, %arg2: memref<2x16x1024xbf16, #tpu.memory_space<vmem>>, %arg3: memref<2x4x2048xbf16, #tpu.memory_space<vmem>>, %arg4: memref<3840x128xbf16, #tpu.memory_space<vmem>>, %arg5: memref<1x128xf32, #tpu.memory_space<vmem>>, %arg6: memref<2x128xf32, #tpu.memory_space<vmem>>) attributes {dimension_semantics = [], scalar_prefetch = 0 : i64, scratch_operands = 0 : i64, tpu.core_type = #tpu.core_type<tc>} {
    %c0 = arith.constant 0 : index
    %c0_0 = arith.constant 0 : index
    %c0_1 = arith.constant 0 : index
    %0 = vector.load %arg0[%c0, %c0_0, %c0_1] : memref<2x256x256xbf16, #tpu.memory_space<vmem>>, vector<2x256x256xbf16>
    %cst = arith.constant dense<0xFF80> : vector<2x256xbf16>
    %1 = vector.multi_reduction <maximumf>, %0, %cst [1] : vector<2x256x256xbf16> to vector<2x256xbf16>
    %cst_2 = arith.constant 0.000000e+00 : bf16
    %2 = vector.broadcast %cst_2 : bf16 to vector<2x256xbf16>
    %3 = arith.maximumf %1, %2 : vector<2x256xbf16>
    %c0_3 = arith.constant 0 : index
    %c0_4 = arith.constant 0 : index
    %4 = vector.load %arg4[%c0_3, %c0_4] : memref<3840x128xbf16, #tpu.memory_space<vmem>>, vector<256x128xbf16>
    %cst_5 = arith.constant dense<0.000000e+00> : vector<2x128xf32>
    %5 = tpu.matmul %3, %4, %cst_5 {dimension_numbers = #tpu.dot_dimension_numbers<[1], [0], [0], [1], [0, 0, 1, 1], [], []>} : vector<2x256xbf16>, vector<256x128xbf16>, vector<2x128xf32> -> vector<2x128xf32>
    %c0_6 = arith.constant 0 : index
    %c0_7 = arith.constant 0 : index
    %c0_8 = arith.constant 0 : index
    %6 = vector.load %arg1[%c0_6, %c0_7, %c0_8] : memref<2x64x512xbf16, #tpu.memory_space<vmem>>, vector<2x64x512xbf16>
    %cst_9 = arith.constant dense<0xFF80> : vector<2x512xbf16>
    %7 = vector.multi_reduction <maximumf>, %6, %cst_9 [1] : vector<2x64x512xbf16> to vector<2x512xbf16>
    %cst_10 = arith.constant 0.000000e+00 : bf16
    %8 = vector.broadcast %cst_10 : bf16 to vector<2x512xbf16>
    %9 = arith.maximumf %7, %8 : vector<2x512xbf16>
    %c256 = arith.constant 256 : index
    %c0_11 = arith.constant 0 : index
    %10 = vector.load %arg4[%c256, %c0_11] : memref<3840x128xbf16, #tpu.memory_space<vmem>>, vector<512x128xbf16>
    %cst_12 = arith.constant dense<0.000000e+00> : vector<2x128xf32>
    %11 = tpu.matmul %9, %10, %cst_12 {dimension_numbers = #tpu.dot_dimension_numbers<[1], [0], [0], [1], [0, 0, 1, 1], [], []>} : vector<2x512xbf16>, vector<512x128xbf16>, vector<2x128xf32> -> vector<2x128xf32>
    %12 = arith.addf %5, %11 : vector<2x128xf32>
    %c0_13 = arith.constant 0 : index
    %c0_14 = arith.constant 0 : index
    %c0_15 = arith.constant 0 : index
    %13 = vector.load %arg2[%c0_13, %c0_14, %c0_15] : memref<2x16x1024xbf16, #tpu.memory_space<vmem>>, vector<2x16x1024xbf16>
    %cst_16 = arith.constant dense<0xFF80> : vector<2x1024xbf16>
    %14 = vector.multi_reduction <maximumf>, %13, %cst_16 [1] : vector<2x16x1024xbf16> to vector<2x1024xbf16>
    %cst_17 = arith.constant 0.000000e+00 : bf16
    %15 = vector.broadcast %cst_17 : bf16 to vector<2x1024xbf16>
    %16 = arith.maximumf %14, %15 : vector<2x1024xbf16>
    %c768 = arith.constant 768 : index
    %c0_18 = arith.constant 0 : index
    %17 = vector.load %arg4[%c768, %c0_18] : memref<3840x128xbf16, #tpu.memory_space<vmem>>, vector<1024x128xbf16>
    %cst_19 = arith.constant dense<0.000000e+00> : vector<2x128xf32>
    %18 = tpu.matmul %16, %17, %cst_19 {dimension_numbers = #tpu.dot_dimension_numbers<[1], [0], [0], [1], [0, 0, 1, 1], [], []>} : vector<2x1024xbf16>, vector<1024x128xbf16>, vector<2x128xf32> -> vector<2x128xf32>
    %19 = arith.addf %12, %18 : vector<2x128xf32>
    %c0_20 = arith.constant 0 : index
    %c0_21 = arith.constant 0 : index
    %c0_22 = arith.constant 0 : index
    %20 = vector.load %arg3[%c0_20, %c0_21, %c0_22] : memref<2x4x2048xbf16, #tpu.memory_space<vmem>>, vector<2x4x2048xbf16>
    %cst_23 = arith.constant dense<0xFF80> : vector<2x2048xbf16>
    %21 = vector.multi_reduction <maximumf>, %20, %cst_23 [1] : vector<2x4x2048xbf16> to vector<2x2048xbf16>
    %cst_24 = arith.constant 0.000000e+00 : bf16
    %22 = vector.broadcast %cst_24 : bf16 to vector<2x2048xbf16>
    %23 = arith.maximumf %21, %22 : vector<2x2048xbf16>
    %c1792 = arith.constant 1792 : index
    %c0_25 = arith.constant 0 : index
    %24 = vector.load %arg4[%c1792, %c0_25] : memref<3840x128xbf16, #tpu.memory_space<vmem>>, vector<2048x128xbf16>
    %cst_26 = arith.constant dense<0.000000e+00> : vector<2x128xf32>
    %25 = tpu.matmul %23, %24, %cst_26 {dimension_numbers = #tpu.dot_dimension_numbers<[1], [0], [0], [1], [0, 0, 1, 1], [], []>} : vector<2x2048xbf16>, vector<2048x128xbf16>, vector<2x128xf32> -> vector<2x128xf32>
    %26 = arith.addf %19, %25 : vector<2x128xf32>
    %c0_27 = arith.constant 0 : index
    %c0_28 = arith.constant 0 : index
    %27 = vector.load %arg5[%c0_27, %c0_28] : memref<1x128xf32, #tpu.memory_space<vmem>>, vector<1x128xf32>
    %28 = vector.broadcast %27 : vector<1x128xf32> to vector<2x128xf32>
    %29 = arith.addf %26, %28 : vector<2x128xf32>
    %30 = arith.mulf %29, %29 : vector<2x128xf32>
    %cst_29 = arith.constant dense<0.000000e+00> : vector<2xf32>
    %31 = vector.multi_reduction <add>, %30, %cst_29 [1] : vector<2x128xf32> to vector<2xf32>
    %32 = vector.shape_cast %31 : vector<2xf32> to vector<2x1xf32>
    %33 = math.rsqrt %32 : vector<2x1xf32>
    %34 = vector.broadcast %33 : vector<2x1xf32> to vector<2x128xf32>
    %35 = arith.mulf %29, %34 : vector<2x128xf32>
    %c0_30 = arith.constant 0 : index
    %c0_31 = arith.constant 0 : index
    %36 = vector.load %arg6[%c0_30, %c0_31] : memref<2x128xf32, #tpu.memory_space<vmem>>, vector<2x128xf32>
    tpu.vector_store %arg6[%c0_30, %c0_31], %35 {strides = array<i32>} : memref<2x128xf32, #tpu.memory_space<vmem>>, vector<2x128xf32>,
    return
  }
}

</mosaic_0001>

<llo_original>
// kernel: embedding_net_image_forward.1
$region0: #{embedding_net_image_forward.1}
  #allocation0 [shape = 'u32[]', space=smem, size = 0x4, offset = 0x4, fixed_abs, tag = 'smem constant byte address 0x4 - core index']
  #allocation1 [shape = 'u32[144,128]{1,0:T(1,128)}', space=vmem, size = 0x12000, scoped, tag = 'internal scratch']
  %s0 = inlined_call_operand.vmem [shape: bf16[2,256,256], index: 0, kind: input, shape index: {}]
  %s1 = inlined_call_operand.vmem [shape: bf16[2,64,512], index: 1, kind: input, shape index: {}]
  %s2 = inlined_call_operand.vmem [shape: bf16[2,16,1024], index: 2, kind: input, shape index: {}]
  %s3 = inlined_call_operand.vmem [shape: bf16[2,4,2048], index: 3, kind: input, shape index: {}]
  %s4 = inlined_call_operand.vmem [shape: bf16[3840,128], index: 4, kind: input, shape index: {}]
  %s5 = inlined_call_operand.vmem [shape: f32[1,128], index: 5, kind: input, shape index: {}]
  %s6 = inlined_call_operand.hbm [shape: f32[2,128], index: 6, kind: output, shape index: {}]
  %s7 = sld [smem:[#allocation0]]
  $region34: #{embedding_net_image_forward.1} parent=0
    _
  %s9 = ssub.s32 1, %s7
  %s10 = scalar_select 0, %s9, %s7
  $region1: #{embedding_net_image_forward.1} parent=0
    #allocation2 [shape = 'u8[1024]{0}', space=vmem, size = 0x400, scoped, tag = 'output window, operand 0, single buffered']
    #allocation3 [shape = 's32[1]{0}', space=sflag, size = 0x4, scoped, tag = 'scoped memory for embedding_net_image_forward.1']
    %11 = vsyncpa [#allocation3], 0
    // Predicated region
    $region2: #{embedding_net_image_forward.1} parent=1 // pred_check
      _
    $region3: #{embedding_net_image_forward.1} parent=1 // pred_check_branch
      %13 = sbr.rel (0) target = $region5
    $region4: #{embedding_net_image_forward.1} parent=1 // pred_region
      _
    $region5: #{embedding_net_image_forward.1} parent=1 // pred_fallthru
      _
    // Predicated region
    $region6: #{embedding_net_image_forward.1} parent=1 // pred_check
      _
    $region7: #{embedding_net_image_forward.1} parent=1 // pred_check_branch
      %15 = sbr.rel (0) target = $region9
    $region8: #{embedding_net_image_forward.1} parent=1 // pred_region
      _
    $region9: #{embedding_net_image_forward.1} parent=1 // pred_fallthru
      _
    // Predicated region
    $region10: #{embedding_net_image_forward.1} parent=1 // pred_check
      _
    $region11: #{embedding_net_image_forward.1} parent=1 // pred_check_branch
      %17 = sbr.rel (0) target = $region13
    $region12: #{embedding_net_image_forward.1} parent=1 // pred_region
      _
    $region13: #{embedding_net_image_forward.1} parent=1 // pred_fallthru
      _
    // Predicated region
    $region14: #{embedding_net_image_forward.1} parent=1 // pred_check
      _
    $region15: #{embedding_net_image_forward.1} parent=1 // pred_check_branch
      %19 = sbr.rel (0) target = $region17
    $region16: #{embedding_net_image_forward.1} parent=1 // pred_region
      _
    $region17: #{embedding_net_image_forward.1} parent=1 // pred_fallthru
      _
    // Predicated region
    $region18: #{embedding_net_image_forward.1} parent=1 // pred_check
      _
    $region19: #{embedding_net_image_forward.1} parent=1 // pred_check_branch
      %21 = sbr.rel (0) target = $region21
    $region20: #{embedding_net_image_forward.1} parent=1 // pred_region
      _
    $region21: #{embedding_net_image_forward.1} parent=1 // pred_fallthru
      _
    // Predicated region
    $region22: #{embedding_net_image_forward.1} parent=1 // pred_check
      _
    $region23: #{embedding_net_image_forward.1} parent=1 // pred_check_branch
      %23 = sbr.rel (0) target = $region25
    $region24: #{embedding_net_image_forward.1} parent=1 // pred_region
      _
    $region25: #{embedding_net_image_forward.1} parent=1 // pred_fallthru
      _
    %v26 = vld [vmem:[%s0] sm:$0xff]
    %v27 = vld [vmem:[%s0 + $0x8] sm:$0xff]
    %v28 = vld [vmem:[%s0 + $0x10] sm:$0xff]
    %v29 = vld [vmem:[%s0 + $0x18] sm:$0xff]
    %v30 = vld [vmem:[%s0 + $0x20] sm:$0xff]
    %v31 = vld [vmem:[%s0 + $0x28] sm:$0xff]
    %v32 = vld [vmem:[%s0 + $0x30] sm:$0xff]
    %v33 = vld [vmem:[%s0 + $0x38] sm:$0xff]
    %v34 = vld [vmem:[%s0 + $0x40] sm:$0xff]
    %v35 = vld [vmem:[%s0 + $0x48] sm:$0xff]
    %v36 = vld [vmem:[%s0 + $0x50] sm:$0xff]
    %v37 = vld [vmem:[%s0 + $0x58] sm:$0xff]
    %v38 = vld [vmem:[%s0 + $0x60] sm:$0xff]
    %v39 = vld [vmem:[%s0 + $0x68] sm:$0xff]
    %v40 = vld [vmem:[%s0 + $0x70] sm:$0xff]
    %v41 = vld [vmem:[%s0 + $0x78] sm:$0xff]
    %v42 = vld [vmem:[%s0 + $0x80] sm:$0xff]
    %v43 = vld [vmem:[%s0 + $0x88] sm:$0xff]
    %v44 = vld [vmem:[%s0 + $0x90] sm:$0xff]
    %v45 = vld [vmem:[%s0 + $0x98] sm:$0xff]
    %v46 = vld [vmem:[%s0 + $0xa0] sm:$0xff]
    %v47 = vld [vmem:[%s0 + $0xa8] sm:$0xff]
    %v48 = vld [vmem:[%s0 + $0xb0] sm:$0xff]
    %v49 = vld [vmem:[%s0 + $0xb8] sm:$0xff]
    %v50 = vld [vmem:[%s0 + $0xc0] sm:$0xff]
    %v51 = vld [vmem:[%s0 + $0xc8] sm:$0xff]
    %v52 = vld [vmem:[%s0 + $0xd0] sm:$0xff]
    %v53 = vld [vmem:[%s0 + $0xd8] sm:$0xff]
    %v54 = vld [vmem:[%s0 + $0xe0] sm:$0xff]
    %v55 = vld [vmem:[%s0 + $0xe8] sm:$0xff]
    %v56 = vld [vmem:[%s0 + $0xf0] sm:$0xff]
    %v57 = vld [vmem:[%s0 + $0xf8] sm:$0xff]
    %v58 = vld [vmem:[%s0 + $0x100] sm:$0xff]
    %v59 = vld [vmem:[%s0 + $0x108] sm:$0xff]
    %v60 = vld [vmem:[%s0 + $0x110] sm:$0xff]
    %v61 = vld [vmem:[%s0 + $0x118] sm:$0xff]
    %v62 = vld [vmem:[%s0 + $0x120] sm:$0xff]
    %v63 = vld [vmem:[%s0 + $0x128] sm:$0xff]
    %v64 = vld [vmem:[%s0 + $0x130] sm:$0xff]
    %v65 = vld [vmem:[%s0 + $0x138] sm:$0xff]
    %v66 = vld [vmem:[%s0 + $0x140] sm:$0xff]
    %v67 = vld [vmem:[%s0 + $0x148] sm:$0xff]
    %v68 = vld [vmem:[%s0 + $0x150] sm:$0xff]
    %v69 = vld [vmem:[%s0 + $0x158] sm:$0xff]
    %v70 = vld [vmem:[%s0 + $0x160] sm:$0xff]
    %v71 = vld [vmem:[%s0 + $0x168] sm:$0xff]
    %v72 = vld [vmem:[%s0 + $0x170] sm:$0xff]
    %v73 = vld [vmem:[%s0 + $0x178] sm:$0xff]
    %v74 = vld [vmem:[%s0 + $0x180] sm:$0xff]
    %v75 = vld [vmem:[%s0 + $0x188] sm:$0xff]
    %v76 = vld [vmem:[%s0 + $0x190] sm:$0xff]
    %v77 = vld [vmem:[%s0 + $0x198] sm:$0xff]
    %v78 = vld [vmem:[%s0 + $0x1a0] sm:$0xff]
    %v79 = vld [vmem:[%s0 + $0x1a8] sm:$0xff]
    %v80 = vld [vmem:[%s0 + $0x1b0] sm:$0xff]
    %v81 = vld [vmem:[%s0 + $0x1b8] sm:$0xff]
    %v82 = vld [vmem:[%s0 + $0x1c0] sm:$0xff]
    %v83 = vld [vmem:[%s0 + $0x1c8] sm:$0xff]
    %v84 = vld [vmem:[%s0 + $0x1d0] sm:$0xff]
    %v85 = vld [vmem:[%s0 + $0x1d8] sm:$0xff]
    %v86 = vld [vmem:[%s0 + $0x1e0] sm:$0xff]
    %v87 = vld [vmem:[%s0 + $0x1e8] sm:$0xff]
    %v88 = vld [vmem:[%s0 + $0x1f0] sm:$0xff]
    %v89 = vld [vmem:[%s0 + $0x1f8] sm:$0xff]
    %v154 = vunpack.c.l.b16 %v26
    %v155 = vunpack.c.h.b16 %v26
    %v156 = vunpack.c.l.b16 %v27
    %v157 = vunpack.c.h.b16 %v27
    %v158 = vunpack.c.l.b16 %v28
    %v159 = vunpack.c.h.b16 %v28
    %v160 = vunpack.c.l.b16 %v29
    %v161 = vunpack.c.h.b16 %v29
    %v162 = vunpack.c.l.b16 %v30
    %v163 = vunpack.c.h.b16 %v30
    %v164 = vunpack.c.l.b16 %v31
    %v165 = vunpack.c.h.b16 %v31
    %v166 = vunpack.c.l.b16 %v32
    %v167 = vunpack.c.h.b16 %v32
    %v168 = vunpack.c.l.b16 %v33
    %v169 = vunpack.c.h.b16 %v33
    %v170 = vunpack.c.l.b16 %v34
    %v171 = vunpack.c.h.b16 %v34
    %v172 = vunpack.c.l.b16 %v35
    %v173 = vunpack.c.h.b16 %v35
    %v174 = vunpack.c.l.b16 %v36
    %v175 = vunpack.c.h.b16 %v36
    %v176 = vunpack.c.l.b16 %v37
    %v177 = vunpack.c.h.b16 %v37
    %v178 = vunpack.c.l.b16 %v38
    %v179 = vunpack.c.h.b16 %v38
    %v180 = vunpack.c.l.b16 %v39
    %v181 = vunpack.c.h.b16 %v39
    %v182 = vunpack.c.l.b16 %v40
    %v183 = vunpack.c.h.b16 %v40
    %v184 = vunpack.c.l.b16 %v41
    %v185 = vunpack.c.h.b16 %v41
    %v186 = vunpack.c.l.b16 %v42
    %v187 = vunpack.c.h.b16 %v42
    %v188 = vunpack.c.l.b16 %v43
    %v189 = vunpack.c.h.b16 %v43
    %v190 = vunpack.c.l.b16 %v44
    %v191 = vunpack.c.h.b16 %v44
    %v192 = vunpack.c.l.b16 %v45
    %v193 = vunpack.c.h.b16 %v45
    %v194 = vunpack.c.l.b16 %v46
    %v195 = vunpack.c.h.b16 %v46
    %v196 = vunpack.c.l.b16 %v47
    %v197 = vunpack.c.h.b16 %v47
    %v198 = vunpack.c.l.b16 %v48
    %v199 = vunpack.c.h.b16 %v48
    %v200 = vunpack.c.l.b16 %v49
    %v201 = vunpack.c.h.b16 %v49
    %v202 = vunpack.c.l.b16 %v50
    %v203 = vunpack.c.h.b16 %v50
    %v204 = vunpack.c.l.b16 %v51
    %v205 = vunpack.c.h.b16 %v51
    %v206 = vunpack.c.l.b16 %v52
    %v207 = vunpack.c.h.b16 %v52
    %v208 = vunpack.c.l.b16 %v53
    %v209 = vunpack.c.h.b16 %v53
    %v210 = vunpack.c.l.b16 %v54
    %v211 = vunpack.c.h.b16 %v54
    %v212 = vunpack.c.l.b16 %v55
    %v213 = vunpack.c.h.b16 %v55
    %v214 = vunpack.c.l.b16 %v56
    %v215 = vunpack.c.h.b16 %v56
    %v216 = vunpack.c.l.b16 %v57
    %v217 = vunpack.c.h.b16 %v57
    %v218 = vunpack.c.l.b16 %v58
    %v219 = vunpack.c.h.b16 %v58
    %v220 = vunpack.c.l.b16 %v59
    %v221 = vunpack.c.h.b16 %v59
    %v222 = vunpack.c.l.b16 %v60
    %v223 = vunpack.c.h.b16 %v60
    %v224 = vunpack.c.l.b16 %v61
    %v225 = vunpack.c.h.b16 %v61
    %v226 = vunpack.c.l.b16 %v62
    %v227 = vunpack.c.h.b16 %v62
    %v228 = vunpack.c.l.b16 %v63
    %v229 = vunpack.c.h.b16 %v63
    %v230 = vunpack.c.l.b16 %v64
    %v231 = vunpack.c.h.b16 %v64
    %v232 = vunpack.c.l.b16 %v65
    %v233 = vunpack.c.h.b16 %v65
    %v234 = vunpack.c.l.b16 %v66
    %v235 = vunpack.c.h.b16 %v66
    %v236 = vunpack.c.l.b16 %v67
    %v237 = vunpack.c.h.b16 %v67
    %v238 = vunpack.c.l.b16 %v68
    %v239 = vunpack.c.h.b16 %v68
    %v240 = vunpack.c.l.b16 %v69
    %v241 = vunpack.c.h.b16 %v69
    %v242 = vunpack.c.l.b16 %v70
    %v243 = vunpack.c.h.b16 %v70
    %v244 = vunpack.c.l.b16 %v71
    %v245 = vunpack.c.h.b16 %v71
    %v246 = vunpack.c.l.b16 %v72
    %v247 = vunpack.c.h.b16 %v72
    %v248 = vunpack.c.l.b16 %v73
    %v249 = vunpack.c.h.b16 %v73
    %v250 = vunpack.c.l.b16 %v74
    %v251 = vunpack.c.h.b16 %v74
    %v252 = vunpack.c.l.b16 %v75
    %v253 = vunpack.c.h.b16 %v75
    %v254 = vunpack.c.l.b16 %v76
    %v255 = vunpack.c.h.b16 %v76
    %v256 = vunpack.c.l.b16 %v77
    %v257 = vunpack.c.h.b16 %v77
    %v258 = vunpack.c.l.b16 %v78
    %v259 = vunpack.c.h.b16 %v78
    %v260 = vunpack.c.l.b16 %v79
    %v261 = vunpack.c.h.b16 %v79
    %v262 = vunpack.c.l.b16 %v80
    %v263 = vunpack.c.h.b16 %v80
    %v264 = vunpack.c.l.b16 %v81
    %v265 = vunpack.c.h.b16 %v81
    %v266 = vunpack.c.l.b16 %v82
    %v267 = vunpack.c.h.b16 %v82
    %v268 = vunpack.c.l.b16 %v83
    %v269 = vunpack.c.h.b16 %v83
    %v270 = vunpack.c.l.b16 %v84
    %v271 = vunpack.c.h.b16 %v84
    %v272 = vunpack.c.l.b16 %v85
    %v273 = vunpack.c.h.b16 %v85
    %v274 = vunpack.c.l.b16 %v86
    %v275 = vunpack.c.h.b16 %v86
    %v276 = vunpack.c.l.b16 %v87
    %v277 = vunpack.c.h.b16 %v87
    %v278 = vunpack.c.l.b16 %v88
    %v279 = vunpack.c.h.b16 %v88
    %v280 = vunpack.c.l.b16 %v89
    %v281 = vunpack.c.h.b16 %v89
    %v282 = vpack.c.b16 %v156, %v154
    %v283 = vpack.c.b16 %v157, %v155
    %v284 = vpack.c.b16 %v160, %v158
    %v285 = vpack.c.b16 %v161, %v159
    %v286 = vpack.c.b16 %v164, %v162
    %v287 = vpack.c.b16 %v165, %v163
    %v288 = vpack.c.b16 %v168, %v166
    %v289 = vpack.c.b16 %v169, %v167
    %v290 = vpack.c.b16 %v172, %v170
    %v291 = vpack.c.b16 %v173, %v171
    %v292 = vpack.c.b16 %v176, %v174
    %v293 = vpack.c.b16 %v177, %v175
    %v294 = vpack.c.b16 %v180, %v178
    %v295 = vpack.c.b16 %v181, %v179
    %v296 = vpack.c.b16 %v184, %v182
    %v297 = vpack.c.b16 %v185, %v183
    %v298 = vpack.c.b16 %v188, %v186
    %v299 = vpack.c.b16 %v189, %v187
    %v300 = vpack.c.b16 %v192, %v190
    %v301 = vpack.c.b16 %v193, %v191
    %v302 = vpack.c.b16 %v196, %v194
    %v303 = vpack.c.b16 %v197, %v195
    %v304 = vpack.c.b16 %v200, %v198
    %v305 = vpack.c.b16 %v201, %v199
    %v306 = vpack.c.b16 %v204, %v202
    %v307 = vpack.c.b16 %v205, %v203
    %v308 = vpack.c.b16 %v208, %v206
    %v309 = vpack.c.b16 %v209, %v207
    %v310 = vpack.c.b16 %v212, %v210
    %v311 = vpack.c.b16 %v213, %v211
    %v312 = vpack.c.b16 %v216, %v214
    %v313 = vpack.c.b16 %v217, %v215
    %v314 = vpack.c.b16 %v220, %v218
    %v315 = vpack.c.b16 %v221, %v219
    %v316 = vpack.c.b16 %v224, %v222
    %v317 = vpack.c.b16 %v225, %v223
    %v318 = vpack.c.b16 %v228, %v226
    %v319 = vpack.c.b16 %v229, %v227
    %v320 = vpack.c.b16 %v232, %v230
    %v321 = vpack.c.b16 %v233, %v231
    %v322 = vpack.c.b16 %v236, %v234
    %v323 = vpack.c.b16 %v237, %v235
    %v324 = vpack.c.b16 %v240, %v238
    %v325 = vpack.c.b16 %v241, %v239
    %v326 = vpack.c.b16 %v244, %v242
    %v327 = vpack.c.b16 %v245, %v243
    %v328 = vpack.c.b16 %v248, %v246
    %v329 = vpack.c.b16 %v249, %v247
    %v330 = vpack.c.b16 %v252, %v250
    %v331 = vpack.c.b16 %v253, %v251
    %v332 = vpack.c.b16 %v256, %v254
    %v333 = vpack.c.b16 %v257, %v255
    %v334 = vpack.c.b16 %v260, %v258
    %v335 = vpack.c.b16 %v261, %v259
    %v336 = vpack.c.b16 %v264, %v262
    %v337 = vpack.c.b16 %v265, %v263
    %v338 = vpack.c.b16 %v268, %v266
    %v339 = vpack.c.b16 %v269, %v267
    %v340 = vpack.c.b16 %v272, %v270
    %v341 = vpack.c.b16 %v273, %v271
    %v342 = vpack.c.b16 %v276, %v274
    %v343 = vpack.c.b16 %v277, %v275
    %v344 = vpack.c.b16 %v280, %v278
    %v345 = vpack.c.b16 %v281, %v279
    %v410 = vmax.bf16 %v282, %v284
    %v411 = vmax.bf16 %v410, %v286
    %v412 = vmax.bf16 %v411, %v288
    %v413 = vmax.bf16 %v412, %v290
    %v414 = vmax.bf16 %v413, %v292
    %v415 = vmax.bf16 %v414, %v294
    %v416 = vmax.bf16 %v415, %v296
    %v417 = vmax.bf16 %v416, %v298
    %v418 = vmax.bf16 %v417, %v300
    %v419 = vmax.bf16 %v418, %v302
    %v420 = vmax.bf16 %v419, %v304
    %v421 = vmax.bf16 %v420, %v306
    %v422 = vmax.bf16 %v421, %v308
    %v423 = vmax.bf16 %v422, %v310
    %v424 = vmax.bf16 %v423, %v312
    %v425 = vunpack.i.l.bf16 %v424
    %v426 = vunpack.i.h.bf16 %v424
    %v427 = vmax.f32 %v425, %v426
    %v428 = vrot.slane %v427, 4
    %v429 = vmax.f32 %v427, %v428
    %v430 = vrot.slane %v429, 2
    %v431 = vmax.f32 %v429, %v430
    %v432 = vrot.slane %v431, 1
    %v433 = vmax.f32 %v431, %v432
    %v434 = vpack.i.bf16 %v433, %v433
    %v435 = vmax.bf16 %v283, %v285
    %v436 = vmax.bf16 %v435, %v287
    %v437 = vmax.bf16 %v436, %v289
    %v438 = vmax.bf16 %v437, %v291
    %v439 = vmax.bf16 %v438, %v293
    %v440 = vmax.bf16 %v439, %v295
    %v441 = vmax.bf16 %v440, %v297
    %v442 = vmax.bf16 %v441, %v299
    %v443 = vmax.bf16 %v442, %v301
    %v444 = vmax.bf16 %v443, %v303
    %v445 = vmax.bf16 %v444, %v305
    %v446 = vmax.bf16 %v445, %v307
    %v447 = vmax.bf16 %v446, %v309
    %v448 = vmax.bf16 %v447, %v311
    %v449 = vmax.bf16 %v448, %v313
    %v450 = vunpack.i.l.bf16 %v449
    %v451 = vunpack.i.h.bf16 %v449
    %v452 = vmax.f32 %v450, %v451
    %v453 = vrot.slane %v452, 4
    %v454 = vmax.f32 %v452, %v453
    %v455 = vrot.slane %v454, 2
    %v456 = vmax.f32 %v454, %v455
    %v457 = vrot.slane %v456, 1
    %v458 = vmax.f32 %v456, %v457
    %v459 = vpack.i.bf16 %v458, %v458
    %v460 = vmax.bf16 %v314, %v316
    %v461 = vmax.bf16 %v460, %v318
    %v462 = vmax.bf16 %v461, %v320
    %v463 = vmax.bf16 %v462, %v322
    %v464 = vmax.bf16 %v463, %v324
    %v465 = vmax.bf16 %v464, %v326
    %v466 = vmax.bf16 %v465, %v328
    %v467 = vmax.bf16 %v466, %v330
    %v468 = vmax.bf16 %v467, %v332
    %v469 = vmax.bf16 %v468, %v334
    %v470 = vmax.bf16 %v469, %v336
    %v471 = vmax.bf16 %v470, %v338
    %v472 = vmax.bf16 %v471, %v340
    %v473 = vmax.bf16 %v472, %v342
    %v474 = vmax.bf16 %v473, %v344
    %v475 = vunpack.i.l.bf16 %v474
    %v476 = vunpack.i.h.bf16 %v474
    %v477 = vmax.f32 %v475, %v476
    %v478 = vrot.slane %v477, 4
    %v479 = vmax.f32 %v477, %v478
    %v480 = vrot.slane %v479, 2
    %v481 = vmax.f32 %v479, %v480
    %v482 = vrot.slane %v481, 1
    %v483 = vmax.f32 %v481, %v482
    %v484 = vpack.i.bf16 %v483, %v483
    %v485 = vmax.bf16 %v315, %v317
    %v486 = vmax.bf16 %v485, %v319
    %v487 = vmax.bf16 %v486, %v321
    %v488 = vmax.bf16 %v487, %v323
    %v489 = vmax.bf16 %v488, %v325
    %v490 = vmax.bf16 %v489, %v327
    %v491 = vmax.bf16 %v490, %v329
    %v492 = vmax.bf16 %v491, %v331
    %v493 = vmax.bf16 %v492, %v333
    %v494 = vmax.bf16 %v493, %v335
    %v495 = vmax.bf16 %v494, %v337
    %v496 = vmax.bf16 %v495, %v339
    %v497 = vmax.bf16 %v496, %v341
    %v498 = vmax.bf16 %v497, %v343
    %v499 = vmax.bf16 %v498, %v345
    %v500 = vunpack.i.l.bf16 %v499
    %v501 = vunpack.i.h.bf16 %v499
    %v502 = vmax.f32 %v500, %v501
    %v503 = vrot.slane %v502, 4
    %v504 = vmax.f32 %v502, %v503
    %v505 = vrot.slane %v504, 2
    %v506 = vmax.f32 %v504, %v505
    %v507 = vrot.slane %v506, 1
    %v508 = vmax.f32 %v506, %v507
    %v509 = vpack.i.bf16 %v508, %v508
    %v510 = vmax.bf16 %v434, 0
    %v511 = vmax.bf16 %v459, 0
    %v512 = vmax.bf16 %v484, 0
    %v513 = vmax.bf16 %v509, 0
    %v514 = vld [vmem:[%s4] sm:$0xf]
    %v515 = vld [vmem:[%s4 + $0x4] sm:$0xf]
    %v516 = vld [vmem:[%s4 + $0x8] sm:$0xf]
    %v517 = vld [vmem:[%s4 + $0xc] sm:$0xf]
    %v518 = vld [vmem:[%s4 + $0x10] sm:$0xf]
    %v519 = vld [vmem:[%s4 + $0x14] sm:$0xf]
    %v520 = vld [vmem:[%s4 + $0x18] sm:$0xf]
    %v521 = vld [vmem:[%s4 + $0x1c] sm:$0xf]
    %v522 = vld [vmem:[%s4 + $0x20] sm:$0xf]
    %v523 = vld [vmem:[%s4 + $0x24] sm:$0xf]
    %v524 = vld [vmem:[%s4 + $0x28] sm:$0xf]
    %v525 = vld [vmem:[%s4 + $0x2c] sm:$0xf]
    %v526 = vld [vmem:[%s4 + $0x30] sm:$0xf]
    %v527 = vld [vmem:[%s4 + $0x34] sm:$0xf]
    %v528 = vld [vmem:[%s4 + $0x38] sm:$0xf]
    %v529 = vld [vmem:[%s4 + $0x3c] sm:$0xf]
    %v530 = vld [vmem:[%s4 + $0x40] sm:$0xf]
    %v531 = vld [vmem:[%s4 + $0x44] sm:$0xf]
    %v532 = vld [vmem:[%s4 + $0x48] sm:$0xf]
    %v533 = vld [vmem:[%s4 + $0x4c] sm:$0xf]
    %v534 = vld [vmem:[%s4 + $0x50] sm:$0xf]
    %v535 = vld [vmem:[%s4 + $0x54] sm:$0xf]
    %v536 = vld [vmem:[%s4 + $0x58] sm:$0xf]
    %v537 = vld [vmem:[%s4 + $0x5c] sm:$0xf]
    %v538 = vld [vmem:[%s4 + $0x60] sm:$0xf]
    %v539 = vld [vmem:[%s4 + $0x64] sm:$0xf]
    %v540 = vld [vmem:[%s4 + $0x68] sm:$0xf]
    %v541 = vld [vmem:[%s4 + $0x6c] sm:$0xf]
    %v542 = vld [vmem:[%s4 + $0x70] sm:$0xf]
    %v543 = vld [vmem:[%s4 + $0x74] sm:$0xf]
    %v544 = vld [vmem:[%s4 + $0x78] sm:$0xf]
    %v545 = vld [vmem:[%s4 + $0x7c] sm:$0xf]
    %v546 = vld [vmem:[%s1] sm:$0xff]
    %v547 = vld [vmem:[%s1 + $0x8] sm:$0xff]
    %v548 = vld [vmem:[%s1 + $0x10] sm:$0xff]
    %v549 = vld [vmem:[%s1 + $0x18] sm:$0xff]
    %v550 = vld [vmem:[%s1 + $0x20] sm:$0xff]
    %v551 = vld [vmem:[%s1 + $0x28] sm:$0xff]
    %v552 = vld [vmem:[%s1 + $0x30] sm:$0xff]
    %v553 = vld [vmem:[%s1 + $0x38] sm:$0xff]
    %v554 = vld [vmem:[%s1 + $0x40] sm:$0xff]
    %v555 = vld [vmem:[%s1 + $0x48] sm:$0xff]
    %v556 = vld [vmem:[%s1 + $0x50] sm:$0xff]
    %v557 = vld [vmem:[%s1 + $0x58] sm:$0xff]
    %v558 = vld [vmem:[%s1 + $0x60] sm:$0xff]
    %v559 = vld [vmem:[%s1 + $0x68] sm:$0xff]
    %v560 = vld [vmem:[%s1 + $0x70] sm:$0xff]
    %v561 = vld [vmem:[%s1 + $0x78] sm:$0xff]
    %v562 = vld [vmem:[%s1 + $0x80] sm:$0xff]
    %v563 = vld [vmem:[%s1 + $0x88] sm:$0xff]
    %v564 = vld [vmem:[%s1 + $0x90] sm:$0xff]
    %v565 = vld [vmem:[%s1 + $0x98] sm:$0xff]
    %v566 = vld [vmem:[%s1 + $0xa0] sm:$0xff]
    %v567 = vld [vmem:[%s1 + $0xa8] sm:$0xff]
    %v568 = vld [vmem:[%s1 + $0xb0] sm:$0xff]
    %v569 = vld [vmem:[%s1 + $0xb8] sm:$0xff]
    %v570 = vld [vmem:[%s1 + $0xc0] sm:$0xff]
    %v571 = vld [vmem:[%s1 + $0xc8] sm:$0xff]
    %v572 = vld [vmem:[%s1 + $0xd0] sm:$0xff]
    %v573 = vld [vmem:[%s1 + $0xd8] sm:$0xff]
    %v574 = vld [vmem:[%s1 + $0xe0] sm:$0xff]
    %v575 = vld [vmem:[%s1 + $0xe8] sm:$0xff]
    %v576 = vld [vmem:[%s1 + $0xf0] sm:$0xff]
    %v577 = vld [vmem:[%s1 + $0xf8] sm:$0xff]
    %v610 = vunpack.c.l.b16 %v546
    %v611 = vunpack.c.h.b16 %v546
    %v612 = vunpack.c.l.b16 %v547
    %v613 = vunpack.c.h.b16 %v547
    %v614 = vunpack.c.l.b16 %v548
    %v615 = vunpack.c.h.b16 %v548
    %v616 = vunpack.c.l.b16 %v549
    %v617 = vunpack.c.h.b16 %v549
    %v618 = vunpack.c.l.b16 %v550
    %v619 = vunpack.c.h.b16 %v550
    %v620 = vunpack.c.l.b16 %v551
    %v621 = vunpack.c.h.b16 %v551
    %v622 = vunpack.c.l.b16 %v552
    %v623 = vunpack.c.h.b16 %v552
    %v624 = vunpack.c.l.b16 %v553
    %v625 = vunpack.c.h.b16 %v553
    %v626 = vunpack.c.l.b16 %v554
    %v627 = vunpack.c.h.b16 %v554
    %v628 = vunpack.c.l.b16 %v555
    %v629 = vunpack.c.h.b16 %v555
    %v630 = vunpack.c.l.b16 %v556
    %v631 = vunpack.c.h.b16 %v556
    %v632 = vunpack.c.l.b16 %v557
    %v633 = vunpack.c.h.b16 %v557
    %v634 = vunpack.c.l.b16 %v558
    %v635 = vunpack.c.h.b16 %v558
    %v636 = vunpack.c.l.b16 %v559
    %v637 = vunpack.c.h.b16 %v559
    %v638 = vunpack.c.l.b16 %v560
    %v639 = vunpack.c.h.b16 %v560
    %v640 = vunpack.c.l.b16 %v561
    %v641 = vunpack.c.h.b16 %v561
    %v642 = vunpack.c.l.b16 %v562
    %v643 = vunpack.c.h.b16 %v562
    %v644 = vunpack.c.l.b16 %v563
    %v645 = vunpack.c.h.b16 %v563
    %v646 = vunpack.c.l.b16 %v564
    %v647 = vunpack.c.h.b16 %v564
    %v648 = vunpack.c.l.b16 %v565
    %v649 = vunpack.c.h.b16 %v565
    %v650 = vunpack.c.l.b16 %v566
    %v651 = vunpack.c.h.b16 %v566
    %v652 = vunpack.c.l.b16 %v567
    %v653 = vunpack.c.h.b16 %v567
    %v654 = vunpack.c.l.b16 %v568
    %v655 = vunpack.c.h.b16 %v568
    %v656 = vunpack.c.l.b16 %v569
    %v657 = vunpack.c.h.b16 %v569
    %v658 = vunpack.c.l.b16 %v570
    %v659 = vunpack.c.h.b16 %v570
    %v660 = vunpack.c.l.b16 %v571
    %v661 = vunpack.c.h.b16 %v571
    %v662 = vunpack.c.l.b16 %v572
    %v663 = vunpack.c.h.b16 %v572
    %v664 = vunpack.c.l.b16 %v573
    %v665 = vunpack.c.h.b16 %v573
    %v666 = vunpack.c.l.b16 %v574
    %v667 = vunpack.c.h.b16 %v574
    %v668 = vunpack.c.l.b16 %v575
    %v669 = vunpack.c.h.b16 %v575
    %v670 = vunpack.c.l.b16 %v576
    %v671 = vunpack.c.h.b16 %v576
    %v672 = vunpack.c.l.b16 %v577
    %v673 = vunpack.c.h.b16 %v577
    %v674 = vpack.c.b16 %v614, %v610
    %v675 = vpack.c.b16 %v615, %v611
    %v676 = vpack.c.b16 %v616, %v612
    %v677 = vpack.c.b16 %v617, %v613
    %v678 = vpack.c.b16 %v622, %v618
    %v679 = vpack.c.b16 %v623, %v619
    %v680 = vpack.c.b16 %v624, %v620
    %v681 = vpack.c.b16 %v625, %v621
    %v682 = vpack.c.b16 %v630, %v626
    %v683 = vpack.c.b16 %v631, %v627
    %v684 = vpack.c.b16 %v632, %v628
    %v685 = vpack.c.b16 %v633, %v629
    %v686 = vpack.c.b16 %v638, %v634
    %v687 = vpack.c.b16 %v639, %v635
    %v688 = vpack.c.b16 %v640, %v636
    %v689 = vpack.c.b16 %v641, %v637
    %v690 = vpack.c.b16 %v646, %v642
    %v691 = vpack.c.b16 %v647, %v643
    %v692 = vpack.c.b16 %v648, %v644
    %v693 = vpack.c.b16 %v649, %v645
    %v694 = vpack.c.b16 %v654, %v650
    %v695 = vpack.c.b16 %v655, %v651
    %v696 = vpack.c.b16 %v656, %v652
    %v697 = vpack.c.b16 %v657, %v653
    %v698 = vpack.c.b16 %v662, %v658
    %v699 = vpack.c.b16 %v663, %v659
    %v700 = vpack.c.b16 %v664, %v660
    %v701 = vpack.c.b16 %v665, %v661
    %v702 = vpack.c.b16 %v670, %v666
    %v703 = vpack.c.b16 %v671, %v667
    %v704 = vpack.c.b16 %v672, %v668
    %v705 = vpack.c.b16 %v673, %v669
    %v738 = vmax.bf16 %v674, %v678
    %v739 = vmax.bf16 %v738, %v682
    %v740 = vmax.bf16 %v739, %v686
    %v741 = vunpack.i.l.bf16 %v740
    %v742 = vunpack.i.h.bf16 %v740
    %v743 = vmax.f32 %v741, %v742
    %v744 = vrot.slane %v743, 4
    %v745 = vmax.f32 %v743, %v744
    %v746 = vrot.slane %v745, 2
    %v747 = vmax.f32 %v745, %v746
    %v748 = vrot.slane %v747, 1
    %v749 = vmax.f32 %v747, %v748
    %v750 = vpack.i.bf16 %v749, %v749
    %v751 = vmax.bf16 %v675, %v679
    %v752 = vmax.bf16 %v751, %v683
    %v753 = vmax.bf16 %v752, %v687
    %v754 = vunpack.i.l.bf16 %v753
    %v755 = vunpack.i.h.bf16 %v753
    %v756 = vmax.f32 %v754, %v755
    %v757 = vrot.slane %v756, 4
    %v758 = vmax.f32 %v756, %v757
    %v759 = vrot.slane %v758, 2
    %v760 = vmax.f32 %v758, %v759
    %v761 = vrot.slane %v760, 1
    %v762 = vmax.f32 %v760, %v761
    %v763 = vpack.i.bf16 %v762, %v762
    %v764 = vmax.bf16 %v676, %v680
    %v765 = vmax.bf16 %v764, %v684
    %v766 = vmax.bf16 %v765, %v688
    %v767 = vunpack.i.l.bf16 %v766
    %v768 = vunpack.i.h.bf16 %v766
    %v769 = vmax.f32 %v767, %v768
    %v770 = vrot.slane %v769, 4
    %v771 = vmax.f32 %v769, %v770
    %v772 = vrot.slane %v771, 2
    %v773 = vmax.f32 %v771, %v772
    %v774 = vrot.slane %v773, 1
    %v775 = vmax.f32 %v773, %v774
    %v776 = vpack.i.bf16 %v775, %v775
    %v777 = vmax.bf16 %v677, %v681
    %v778 = vmax.bf16 %v777, %v685
    %v779 = vmax.bf16 %v778, %v689
    %v780 = vunpack.i.l.bf16 %v779
    %v781 = vunpack.i.h.bf16 %v779
    %v782 = vmax.f32 %v780, %v781
    %v783 = vrot.slane %v782, 4
    %v784 = vmax.f32 %v782, %v783
    %v785 = vrot.slane %v784, 2
    %v786 = vmax.f32 %v784, %v785
    %v787 = vrot.slane %v786, 1
    %v788 = vmax.f32 %v786, %v787
    %v789 = vpack.i.bf16 %v788, %v788
    %v790 = vmax.bf16 %v690, %v694
    %v791 = vmax.bf16 %v790, %v698
    %v792 = vmax.bf16 %v791, %v702
    %v793 = vunpack.i.l.bf16 %v792
    %v794 = vunpack.i.h.bf16 %v792
    %v795 = vmax.f32 %v793, %v794
    %v796 = vrot.slane %v795, 4
    %v797 = vmax.f32 %v795, %v796
    %v798 = vrot.slane %v797, 2
    %v799 = vmax.f32 %v797, %v798
    %v800 = vrot.slane %v799, 1
    %v801 = vmax.f32 %v799, %v800
    %v802 = vpack.i.bf16 %v801, %v801
    %v803 = vmax.bf16 %v691, %v695
    %v804 = vmax.bf16 %v803, %v699
    %v805 = vmax.bf16 %v804, %v703
    %v806 = vunpack.i.l.bf16 %v805
    %v807 = vunpack.i.h.bf16 %v805
    %v808 = vmax.f32 %v806, %v807
    %v809 = vrot.slane %v808, 4
    %v810 = vmax.f32 %v808, %v809
    %v811 = vrot.slane %v810, 2
    %v812 = vmax.f32 %v810, %v811
    %v813 = vrot.slane %v812, 1
    %v814 = vmax.f32 %v812, %v813
    %v815 = vpack.i.bf16 %v814, %v814
    %v816 = vmax.bf16 %v692, %v696
    %v817 = vmax.bf16 %v816, %v700
    %v818 = vmax.bf16 %v817, %v704
    %v819 = vunpack.i.l.bf16 %v818
    %v820 = vunpack.i.h.bf16 %v818
    %v821 = vmax.f32 %v819, %v820
    %v822 = vrot.slane %v821, 4
    %v823 = vmax.f32 %v821, %v822
    %v824 = vrot.slane %v823, 2
    %v825 = vmax.f32 %v823, %v824
    %v826 = vrot.slane %v825, 1
    %v827 = vmax.f32 %v825, %v826
    %v828 = vpack.i.bf16 %v827, %v827
    %v829 = vmax.bf16 %v693, %v697
    %v830 = vmax.bf16 %v829, %v701
    %v831 = vmax.bf16 %v830, %v705
    %v832 = vunpack.i.l.bf16 %v831
    %v833 = vunpack.i.h.bf16 %v831
    %v834 = vmax.f32 %v832, %v833
    %v835 = vrot.slane %v834, 4
    %v836 = vmax.f32 %v834, %v835
    %v837 = vrot.slane %v836, 2
    %v838 = vmax.f32 %v836, %v837
    %v839 = vrot.slane %v838, 1
    %v840 = vmax.f32 %v838, %v839
    %v841 = vpack.i.bf16 %v840, %v840
    %v842 = vmax.bf16 %v750, 0
    %v843 = vmax.bf16 %v763, 0
    %v844 = vmax.bf16 %v776, 0
    %v845 = vmax.bf16 %v789, 0
    %v846 = vmax.bf16 %v802, 0
    %v847 = vmax.bf16 %v815, 0
    %v848 = vmax.bf16 %v828, 0
    %v849 = vmax.bf16 %v841, 0
    %v850 = vld [vmem:[%s4 + $0x80] sm:$0xf]
    %v851 = vld [vmem:[%s4 + $0x84] sm:$0xf]
    %v852 = vld [vmem:[%s4 + $0x88] sm:$0xf]
    %v853 = vld [vmem:[%s4 + $0x8c] sm:$0xf]
    %v854 = vld [vmem:[%s4 + $0x90] sm:$0xf]
    %v855 = vld [vmem:[%s4 + $0x94] sm:$0xf]
    %v856 = vld [vmem:[%s4 + $0x98] sm:$0xf]
    %v857 = vld [vmem:[%s4 + $0x9c] sm:$0xf]
    %v858 = vld [vmem:[%s4 + $0xa0] sm:$0xf]
    %v859 = vld [vmem:[%s4 + $0xa4] sm:$0xf]
    %v860 = vld [vmem:[%s4 + $0xa8] sm:$0xf]
    %v861 = vld [vmem:[%s4 + $0xac] sm:$0xf]
    %v862 = vld [vmem:[%s4 + $0xb0] sm:$0xf]
    %v863 = vld [vmem:[%s4 + $0xb4] sm:$0xf]
    %v864 = vld [vmem:[%s4 + $0xb8] sm:$0xf]
    %v865 = vld [vmem:[%s4 + $0xbc] sm:$0xf]
    %v866 = vld [vmem:[%s4 + $0xc0] sm:$0xf]
    %v867 = vld [vmem:[%s4 + $0xc4] sm:$0xf]
    %v868 = vld [vmem:[%s4 + $0xc8] sm:$0xf]
    %v869 = vld [vmem:[%s4 + $0xcc] sm:$0xf]
    %v870 = vld [vmem:[%s4 + $0xd0] sm:$0xf]
    %v871 = vld [vmem:[%s4 + $0xd4] sm:$0xf]
    %v872 = vld [vmem:[%s4 + $0xd8] sm:$0xf]
    %v873 = vld [vmem:[%s4 + $0xdc] sm:$0xf]
    %v874 = vld [vmem:[%s4 + $0xe0] sm:$0xf]
    %v875 = vld [vmem:[%s4 + $0xe4] sm:$0xf]
    %v876 = vld [vmem:[%s4 + $0xe8] sm:$0xf]
    %v877 = vld [vmem:[%s4 + $0xec] sm:$0xf]
    %v878 = vld [vmem:[%s4 + $0xf0] sm:$0xf]
    %v879 = vld [vmem:[%s4 + $0xf4] sm:$0xf]
    %v880 = vld [vmem:[%s4 + $0xf8] sm:$0xf]
    %v881 = vld [vmem:[%s4 + $0xfc] sm:$0xf]
    %v882 = vld [vmem:[%s4 + $0x100] sm:$0xf]
    %v883 = vld [vmem:[%s4 + $0x104] sm:$0xf]
    %v884 = vld [vmem:[%s4 + $0x108] sm:$0xf]
    %v885 = vld [vmem:[%s4 + $0x10c] sm:$0xf]
    %v886 = vld [vmem:[%s4 + $0x110] sm:$0xf]
    %v887 = vld [vmem:[%s4 + $0x114] sm:$0xf]
    %v888 = vld [vmem:[%s4 + $0x118] sm:$0xf]
    %v889 = vld [vmem:[%s4 + $0x11c] sm:$0xf]
    %v890 = vld [vmem:[%s4 + $0x120] sm:$0xf]
    %v891 = vld [vmem:[%s4 + $0x124] sm:$0xf]
    %v892 = vld [vmem:[%s4 + $0x128] sm:$0xf]
    %v893 = vld [vmem:[%s4 + $0x12c] sm:$0xf]
    %v894 = vld [vmem:[%s4 + $0x130] sm:$0xf]
    %v895 = vld [vmem:[%s4 + $0x134] sm:$0xf]
    %v896 = vld [vmem:[%s4 + $0x138] sm:$0xf]
    %v897 = vld [vmem:[%s4 + $0x13c] sm:$0xf]
    %v898 = vld [vmem:[%s4 + $0x140] sm:$0xf]
    %v899 = vld [vmem:[%s4 + $0x144] sm:$0xf]
    %v900 = vld [vmem:[%s4 + $0x148] sm:$0xf]
    %v901 = vld [vmem:[%s4 + $0x14c] sm:$0xf]
    %v902 = vld [vmem:[%s4 + $0x150] sm:$0xf]
    %v903 = vld [vmem:[%s4 + $0x154] sm:$0xf]
    %v904 = vld [vmem:[%s4 + $0x158] sm:$0xf]
    %v905 = vld [vmem:[%s4 + $0x15c] sm:$0xf]
    %v906 = vld [vmem:[%s4 + $0x160] sm:$0xf]
    %v907 = vld [vmem:[%s4 + $0x164] sm:$0xf]
    %v908 = vld [vmem:[%s4 + $0x168] sm:$0xf]
    %v909 = vld [vmem:[%s4 + $0x16c] sm:$0xf]
    %v910 = vld [vmem:[%s4 + $0x170] sm:$0xf]
    %v911 = vld [vmem:[%s4 + $0x174] sm:$0xf]
    %v912 = vld [vmem:[%s4 + $0x178] sm:$0xf]
    %v913 = vld [vmem:[%s4 + $0x17c] sm:$0xf]
    %v922 = vunpack.c.l.b16 %v842
    %v923 = vunpack.c.l.b16 %v843
    %v924 = vunpack.c.l.b16 %v844
    %v925 = vunpack.c.l.b16 %v845
    %v926 = vunpack.c.l.b16 %v846
    %v927 = vunpack.c.l.b16 %v847
    %v928 = vunpack.c.l.b16 %v848
    %v929 = vunpack.c.l.b16 %v849
    %vm930 = vcmask 1041409
    %v931 = vsel %vm930, %v926, %v922
    %v932 = vsel %vm930, %v927, %v923
    %v933 = vsel %vm930, %v928, %v924
    %v934 = vsel %vm930, %v929, %v925
    %v935 = vpack.c.b16 %v931, %v931
    %v936 = vpack.c.b16 %v932, %v932
    %v937 = vpack.c.b16 %v933, %v933
    %v938 = vpack.c.b16 %v934, %v934
    %v1007 = vunpack.c.l.b16 %v850
    %v1008 = vunpack.c.l.b16 %v851
    %v1009 = vunpack.c.l.b16 %v852
    %v1010 = vunpack.c.l.b16 %v853
    %v1011 = vunpack.c.l.b16 %v854
    %v1012 = vunpack.c.l.b16 %v855
    %v1013 = vunpack.c.l.b16 %v856
    %v1014 = vunpack.c.l.b16 %v857
    %v1015 = vunpack.c.l.b16 %v858
    %v1016 = vunpack.c.l.b16 %v859
    %v1017 = vunpack.c.l.b16 %v860
    %v1018 = vunpack.c.l.b16 %v861
    %v1019 = vunpack.c.l.b16 %v862
    %v1020 = vunpack.c.l.b16 %v863
    %v1021 = vunpack.c.l.b16 %v864
    %v1022 = vunpack.c.l.b16 %v865
    %v1023 = vunpack.c.l.b16 %v866
    %v1024 = vunpack.c.l.b16 %v867
    %v1025 = vunpack.c.l.b16 %v868
    %v1026 = vunpack.c.l.b16 %v869
    %v1027 = vunpack.c.l.b16 %v870
    %v1028 = vunpack.c.l.b16 %v871
    %v1029 = vunpack.c.l.b16 %v872
    %v1030 = vunpack.c.l.b16 %v873
    %v1031 = vunpack.c.l.b16 %v874
    %v1032 = vunpack.c.l.b16 %v875
    %v1033 = vunpack.c.l.b16 %v876
    %v1034 = vunpack.c.l.b16 %v877
    %v1035 = vunpack.c.l.b16 %v878
    %v1036 = vunpack.c.l.b16 %v879
    %v1037 = vunpack.c.l.b16 %v880
    %v1038 = vunpack.c.l.b16 %v881
    %v1039 = vunpack.c.l.b16 %v882
    %v1040 = vunpack.c.l.b16 %v883
    %v1041 = vunpack.c.l.b16 %v884
    %v1042 = vunpack.c.l.b16 %v885
    %v1043 = vunpack.c.l.b16 %v886
    %v1044 = vunpack.c.l.b16 %v887
    %v1045 = vunpack.c.l.b16 %v888
    %v1046 = vunpack.c.l.b16 %v889
    %v1047 = vunpack.c.l.b16 %v890
    %v1048 = vunpack.c.l.b16 %v891
    %v1049 = vunpack.c.l.b16 %v892
    %v1050 = vunpack.c.l.b16 %v893
    %v1051 = vunpack.c.l.b16 %v894
    %v1052 = vunpack.c.l.b16 %v895
    %v1053 = vunpack.c.l.b16 %v896
    %v1054 = vunpack.c.l.b16 %v897
    %v1055 = vunpack.c.l.b16 %v898
    %v1056 = vunpack.c.l.b16 %v899
    %v1057 = vunpack.c.l.b16 %v900
    %v1058 = vunpack.c.l.b16 %v901
    %v1059 = vunpack.c.l.b16 %v902
    %v1060 = vunpack.c.l.b16 %v903
    %v1061 = vunpack.c.l.b16 %v904
    %v1062 = vunpack.c.l.b16 %v905
    %v1063 = vunpack.c.l.b16 %v906
    %v1064 = vunpack.c.l.b16 %v907
    %v1065 = vunpack.c.l.b16 %v908
    %v1066 = vunpack.c.l.b16 %v909
    %v1067 = vunpack.c.l.b16 %v910
    %v1068 = vunpack.c.l.b16 %v911
    %v1069 = vunpack.c.l.b16 %v912
    %v1070 = vunpack.c.l.b16 %v913
    %v1071 = vpack.c.b16 %v1008, %v1007
    %v1072 = vpack.c.b16 %v1010, %v1009
    %v1073 = vpack.c.b16 %v1012, %v1011
    %v1074 = vpack.c.b16 %v1014, %v1013
    %v1075 = vpack.c.b16 %v1016, %v1015
    %v1076 = vpack.c.b16 %v1018, %v1017
    %v1077 = vpack.c.b16 %v1020, %v1019
    %v1078 = vpack.c.b16 %v1022, %v1021
    %v1079 = vpack.c.b16 %v1024, %v1023
    %v1080 = vpack.c.b16 %v1026, %v1025
    %v1081 = vpack.c.b16 %v1028, %v1027
    %v1082 = vpack.c.b16 %v1030, %v1029
    %v1083 = vpack.c.b16 %v1032, %v1031
    %v1084 = vpack.c.b16 %v1034, %v1033
    %v1085 = vpack.c.b16 %v1036, %v1035
    %v1086 = vpack.c.b16 %v1038, %v1037
    %v1087 = vpack.c.b16 %v1040, %v1039
    %v1088 = vpack.c.b16 %v1042, %v1041
    %v1089 = vpack.c.b16 %v1044, %v1043
    %v1090 = vpack.c.b16 %v1046, %v1045
    %v1091 = vpack.c.b16 %v1048, %v1047
    %v1092 = vpack.c.b16 %v1050, %v1049
    %v1093 = vpack.c.b16 %v1052, %v1051
    %v1094 = vpack.c.b16 %v1054, %v1053
    %v1095 = vpack.c.b16 %v1056, %v1055
    %v1096 = vpack.c.b16 %v1058, %v1057
    %v1097 = vpack.c.b16 %v1060, %v1059
    %v1098 = vpack.c.b16 %v1062, %v1061
    %v1099 = vpack.c.b16 %v1064, %v1063
    %v1100 = vpack.c.b16 %v1066, %v1065
    %v1101 = vpack.c.b16 %v1068, %v1067
    %v1102 = vpack.c.b16 %v1070, %v1069
    %1135 = vmatprep.subr.bf16.mxu0 0
    %1136 = vmatpush1.bf16.msra.mxu0 %v1071
    %1137 = vmatprep.subr.bf16.mxu0 0
    %1138 = vmatpush1.bf16.msra.mxu0 %v1072
    %1139 = vmatprep.subr.bf16.mxu0 0
    %1140 = vmatpush1.bf16.msra.mxu0 %v1073
    %1141 = vmatprep.subr.bf16.mxu0 0
    %1142 = vmatpush1.bf16.msra.mxu0 %v1074
    %1143 = vmatprep.subr.bf16.mxu0 0
    %1144 = vmatpush1.bf16.msra.mxu0 %v1075
    %1145 = vmatprep.subr.bf16.mxu0 0
    %1146 = vmatpush1.bf16.msra.mxu0 %v1076
    %1147 = vmatprep.subr.bf16.mxu0 0
    %1148 = vmatpush1.bf16.msra.mxu0 %v1077
    %1149 = vmatprep.subr.bf16.mxu0 0
    %1150 = vmatpush1.bf16.msra.mxu0 %v1078
    %1151 = vmatprep.subr.bf16.mxu0 0
    %1152 = vmatpush1.bf16.msra.mxu0 %v1079
    %1153 = vmatprep.subr.bf16.mxu0 0
    %1154 = vmatpush1.bf16.msra.mxu0 %v1080
    %1155 = vmatprep.subr.bf16.mxu0 0
    %1156 = vmatpush1.bf16.msra.mxu0 %v1081
    %1157 = vmatprep.subr.bf16.mxu0 0
    %1158 = vmatpush1.bf16.msra.mxu0 %v1082
    %1159 = vmatprep.subr.bf16.mxu0 0
    %1160 = vmatpush1.bf16.msra.mxu0 %v1083
    %1161 = vmatprep.subr.bf16.mxu0 0
    %1162 = vmatpush1.bf16.msra.mxu0 %v1084
    %1163 = vmatprep.subr.bf16.mxu0 0
    %1164 = vmatpush1.bf16.msra.mxu0 %v1085
    %1165 = vmatprep.subr.bf16.mxu0 0
    %1166 = vmatpush1.bf16.msra.mxu0 %v1086
    %1167 = vmatprep.mubr.bf16.mxu0 %v936
    %1168 = vmatmul.mubr.bf16.gmra.mrb[0].mxu0 %v935
    %v1169 = vpop.f32.mrb[0].mxu0
    %v1170 = vadd.f32 0.0, %v1169
    %v1171 = vpop.f32.mrb[0].mxu0
    %v1172 = vpop.f32.mrb[0].mxu0
    %v1173 = vpop.f32.mrb[0].mxu0
    %1174 = vdwg.mxu0
    %1175 = vmatprep.subr.bf16.mxu0 0
    %1176 = vmatpush1.bf16.msra.mxu0 %v1087
    %1177 = vmatprep.subr.bf16.mxu0 0
    %1178 = vmatpush1.bf16.msra.mxu0 %v1088
    %1179 = vmatprep.subr.bf16.mxu0 0
    %1180 = vmatpush1.bf16.msra.mxu0 %v1089
    %1181 = vmatprep.subr.bf16.mxu0 0
    %1182 = vmatpush1.bf16.msra.mxu0 %v1090
    %1183 = vmatprep.subr.bf16.mxu0 0
    %1184 = vmatpush1.bf16.msra.mxu0 %v1091
    %1185 = vmatprep.subr.bf16.mxu0 0
    %1186 = vmatpush1.bf16.msra.mxu0 %v1092
    %1187 = vmatprep.subr.bf16.mxu0 0
    %1188 = vmatpush1.bf16.msra.mxu0 %v1093
    %1189 = vmatprep.subr.bf16.mxu0 0
    %1190 = vmatpush1.bf16.msra.mxu0 %v1094
    %1191 = vmatprep.subr.bf16.mxu0 0
    %1192 = vmatpush1.bf16.msra.mxu0 %v1095
    %1193 = vmatprep.subr.bf16.mxu0 0
    %1194 = vmatpush1.bf16.msra.mxu0 %v1096
    %1195 = vmatprep.subr.bf16.mxu0 0
    %1196 = vmatpush1.bf16.msra.mxu0 %v1097
    %1197 = vmatprep.subr.bf16.mxu0 0
    %1198 = vmatpush1.bf16.msra.mxu0 %v1098
    %1199 = vmatprep.subr.bf16.mxu0 0
    %1200 = vmatpush1.bf16.msra.mxu0 %v1099
    %1201 = vmatprep.subr.bf16.mxu0 0
    %1202 = vmatpush1.bf16.msra.mxu0 %v1100
    %1203 = vmatprep.subr.bf16.mxu0 0
    %1204 = vmatpush1.bf16.msra.mxu0 %v1101
    %1205 = vmatprep.subr.bf16.mxu0 0
    %1206 = vmatpush1.bf16.msra.mxu0 %v1102
    %1207 = vmatprep.mubr.bf16.mxu0 %v938
    %1208 = vmatmul.mubr.bf16.gmra.mrb[0].mxu0 %v937
    %v1209 = vpop.f32.mrb[0].mxu0
    %v1210 = vadd.f32 %v1170, %v1209
    %v1211 = vpop.f32.mrb[0].mxu0
    %v1212 = vpop.f32.mrb[0].mxu0
    %v1213 = vpop.f32.mrb[0].mxu0
    %1214 = vdwg.mxu0
    %v1219 = vunpack.c.l.b16 %v510
    %v1220 = vunpack.c.l.b16 %v511
    %v1221 = vunpack.c.l.b16 %v512
    %v1222 = vunpack.c.l.b16 %v513
    %v1223 = vsel %vm930, %v1221, %v1219
    %v1224 = vsel %vm930, %v1222, %v1220
    %v1225 = vpack.c.b16 %v1223, %v1223
    %v1226 = vpack.c.b16 %v1224, %v1224
    %v1261 = vunpack.c.l.b16 %v514
    %v1262 = vunpack.c.l.b16 %v515
    %v1263 = vunpack.c.l.b16 %v516
    %v1264 = vunpack.c.l.b16 %v517
    %v1265 = vunpack.c.l.b16 %v518
    %v1266 = vunpack.c.l.b16 %v519
    %v1267 = vunpack.c.l.b16 %v520
    %v1268 = vunpack.c.l.b16 %v521
    %v1269 = vunpack.c.l.b16 %v522
    %v1270 = vunpack.c.l.b16 %v523
    %v1271 = vunpack.c.l.b16 %v524
    %v1272 = vunpack.c.l.b16 %v525
    %v1273 = vunpack.c.l.b16 %v526
    %v1274 = vunpack.c.l.b16 %v527
    %v1275 = vunpack.c.l.b16 %v528
    %v1276 = vunpack.c.l.b16 %v529
    %v1277 = vunpack.c.l.b16 %v530
    %v1278 = vunpack.c.l.b16 %v531
    %v1279 = vunpack.c.l.b16 %v532
    %v1280 = vunpack.c.l.b16 %v533
    %v1281 = vunpack.c.l.b16 %v534
    %v1282 = vunpack.c.l.b16 %v535
    %v1283 = vunpack.c.l.b16 %v536
    %v1284 = vunpack.c.l.b16 %v537
    %v1285 = vunpack.c.l.b16 %v538
    %v1286 = vunpack.c.l.b16 %v539
    %v1287 = vunpack.c.l.b16 %v540
    %v1288 = vunpack.c.l.b16 %v541
    %v1289 = vunpack.c.l.b16 %v542
    %v1290 = vunpack.c.l.b16 %v543
    %v1291 = vunpack.c.l.b16 %v544
    %v1292 = vunpack.c.l.b16 %v545
    %v1293 = vpack.c.b16 %v1262, %v1261
    %v1294 = vpack.c.b16 %v1264, %v1263
    %v1295 = vpack.c.b16 %v1266, %v1265
    %v1296 = vpack.c.b16 %v1268, %v1267
    %v1297 = vpack.c.b16 %v1270, %v1269
    %v1298 = vpack.c.b16 %v1272, %v1271
    %v1299 = vpack.c.b16 %v1274, %v1273
    %v1300 = vpack.c.b16 %v1276, %v1275
    %v1301 = vpack.c.b16 %v1278, %v1277
    %v1302 = vpack.c.b16 %v1280, %v1279
    %v1303 = vpack.c.b16 %v1282, %v1281
    %v1304 = vpack.c.b16 %v1284, %v1283
    %v1305 = vpack.c.b16 %v1286, %v1285
    %v1306 = vpack.c.b16 %v1288, %v1287
    %v1307 = vpack.c.b16 %v1290, %v1289
    %v1308 = vpack.c.b16 %v1292, %v1291
    %1325 = vmatprep.subr.bf16.mxu0 0
    %1326 = vmatpush1.bf16.msra.mxu0 %v1293
    %1327 = vmatprep.subr.bf16.mxu0 0
    %1328 = vmatpush1.bf16.msra.mxu0 %v1294
    %1329 = vmatprep.subr.bf16.mxu0 0
    %1330 = vmatpush1.bf16.msra.mxu0 %v1295
    %1331 = vmatprep.subr.bf16.mxu0 0
    %1332 = vmatpush1.bf16.msra.mxu0 %v1296
    %1333 = vmatprep.subr.bf16.mxu0 0
    %1334 = vmatpush1.bf16.msra.mxu0 %v1297
    %1335 = vmatprep.subr.bf16.mxu0 0
    %1336 = vmatpush1.bf16.msra.mxu0 %v1298
    %1337 = vmatprep.subr.bf16.mxu0 0
    %1338 = vmatpush1.bf16.msra.mxu0 %v1299
    %1339 = vmatprep.subr.bf16.mxu0 0
    %1340 = vmatpush1.bf16.msra.mxu0 %v1300
    %1341 = vmatprep.subr.bf16.mxu0 0
    %1342 = vmatpush1.bf16.msra.mxu0 %v1301
    %1343 = vmatprep.subr.bf16.mxu0 0
    %1344 = vmatpush1.bf16.msra.mxu0 %v1302
    %1345 = vmatprep.subr.bf16.mxu0 0
    %1346 = vmatpush1.bf16.msra.mxu0 %v1303
    %1347 = vmatprep.subr.bf16.mxu0 0
    %1348 = vmatpush1.bf16.msra.mxu0 %v1304
    %1349 = vmatprep.subr.bf16.mxu0 0
    %1350 = vmatpush1.bf16.msra.mxu0 %v1305
    %1351 = vmatprep.subr.bf16.mxu0 0
    %1352 = vmatpush1.bf16.msra.mxu0 %v1306
    %1353 = vmatprep.subr.bf16.mxu0 0
    %1354 = vmatpush1.bf16.msra.mxu0 %v1307
    %1355 = vmatprep.subr.bf16.mxu0 0
    %1356 = vmatpush1.bf16.msra.mxu0 %v1308
    %1357 = vmatprep.mubr.bf16.mxu0 %v1226
    %1358 = vmatmul.mubr.bf16.gmra.mrb[0].mxu0 %v1225
    %v1359 = vpop.f32.mrb[0].mxu0
    %v1360 = vadd.f32 %v1210, %v1359
    %v1361 = vpop.f32.mrb[0].mxu0
    %v1362 = vpop.f32.mrb[0].mxu0
    %v1363 = vpop.f32.mrb[0].mxu0
    %1364 = vdwg.mxu0
    %v1365 = vld [vmem:[%s2] sm:$0xff]
    %v1366 = vld [vmem:[%s2 + $0x8] sm:$0xff]
    %v1367 = vld [vmem:[%s2 + $0x10] sm:$0xff]
    %v1368 = vld [vmem:[%s2 + $0x18] sm:$0xff]
    %v1369 = vld [vmem:[%s2 + $0x20] sm:$0xff]
    %v1370 = vld [vmem:[%s2 + $0x28] sm:$0xff]
    %v1371 = vld [vmem:[%s2 + $0x30] sm:$0xff]
    %v1372 = vld [vmem:[%s2 + $0x38] sm:$0xff]
    %v1373 = vld [vmem:[%s2 + $0x40] sm:$0xff]
    %v1374 = vld [vmem:[%s2 + $0x48] sm:$0xff]
    %v1375 = vld [vmem:[%s2 + $0x50] sm:$0xff]
    %v1376 = vld [vmem:[%s2 + $0x58] sm:$0xff]
    %v1377 = vld [vmem:[%s2 + $0x60] sm:$0xff]
    %v1378 = vld [vmem:[%s2 + $0x68] sm:$0xff]
    %v1379 = vld [vmem:[%s2 + $0x70] sm:$0xff]
    %v1380 = vld [vmem:[%s2 + $0x78] sm:$0xff]
    %v1397 = vunpack.c.l.b16 %v1365
    %v1398 = vunpack.c.h.b16 %v1365
    %v1399 = vunpack.c.l.b16 %v1366
    %v1400 = vunpack.c.h.b16 %v1366
    %v1401 = vunpack.c.l.b16 %v1367
    %v1402 = vunpack.c.h.b16 %v1367
    %v1403 = vunpack.c.l.b16 %v1368
    %v1404 = vunpack.c.h.b16 %v1368
    %v1405 = vunpack.c.l.b16 %v1369
    %v1406 = vunpack.c.h.b16 %v1369
    %v1407 = vunpack.c.l.b16 %v1370
    %v1408 = vunpack.c.h.b16 %v1370
    %v1409 = vunpack.c.l.b16 %v1371
    %v1410 = vunpack.c.h.b16 %v1371
    %v1411 = vunpack.c.l.b16 %v1372
    %v1412 = vunpack.c.h.b16 %v1372
    %v1413 = vunpack.c.l.b16 %v1373
    %v1414 = vunpack.c.h.b16 %v1373
    %v1415 = vunpack.c.l.b16 %v1374
    %v1416 = vunpack.c.h.b16 %v1374
    %v1417 = vunpack.c.l.b16 %v1375
    %v1418 = vunpack.c.h.b16 %v1375
    %v1419 = vunpack.c.l.b16 %v1376
    %v1420 = vunpack.c.h.b16 %v1376
    %v1421 = vunpack.c.l.b16 %v1377
    %v1422 = vunpack.c.h.b16 %v1377
    %v1423 = vunpack.c.l.b16 %v1378
    %v1424 = vunpack.c.h.b16 %v1378
    %v1425 = vunpack.c.l.b16 %v1379
    %v1426 = vunpack.c.h.b16 %v1379
    %v1427 = vunpack.c.l.b16 %v1380
    %v1428 = vunpack.c.h.b16 %v1380
    %v1429 = vpack.c.b16 %v1405, %v1397
    %v1430 = vpack.c.b16 %v1406, %v1398
    %v1431 = vpack.c.b16 %v1407, %v1399
    %v1432 = vpack.c.b16 %v1408, %v1400
    %v1433 = vpack.c.b16 %v1409, %v1401
    %v1434 = vpack.c.b16 %v1410, %v1402
    %v1435 = vpack.c.b16 %v1411, %v1403
    %v1436 = vpack.c.b16 %v1412, %v1404
    %v1437 = vpack.c.b16 %v1421, %v1413
    %v1438 = vpack.c.b16 %v1422, %v1414
    %v1439 = vpack.c.b16 %v1423, %v1415
    %v1440 = vpack.c.b16 %v1424, %v1416
    %v1441 = vpack.c.b16 %v1425, %v1417
    %v1442 = vpack.c.b16 %v1426, %v1418
    %v1443 = vpack.c.b16 %v1427, %v1419
    %v1444 = vpack.c.b16 %v1428, %v1420
    %v1461 = vunpack.i.l.bf16 %v1429
    %v1462 = vunpack.i.h.bf16 %v1429
    %v1463 = vmax.f32 %v1461, %v1462
    %v1464 = vrot.slane %v1463, 4
    %v1465 = vmax.f32 %v1463, %v1464
    %v1466 = vrot.slane %v1465, 2
    %v1467 = vmax.f32 %v1465, %v1466
    %v1468 = vrot.slane %v1467, 1
    %v1469 = vmax.f32 %v1467, %v1468
    %v1470 = vpack.i.bf16 %v1469, %v1469
    %v1471 = vunpack.i.l.bf16 %v1430
    %v1472 = vunpack.i.h.bf16 %v1430
    %v1473 = vmax.f32 %v1471, %v1472
    %v1474 = vrot.slane %v1473, 4
    %v1475 = vmax.f32 %v1473, %v1474
    %v1476 = vrot.slane %v1475, 2
    %v1477 = vmax.f32 %v1475, %v1476
    %v1478 = vrot.slane %v1477, 1
    %v1479 = vmax.f32 %v1477, %v1478
    %v1480 = vpack.i.bf16 %v1479, %v1479
    %v1481 = vunpack.i.l.bf16 %v1431
    %v1482 = vunpack.i.h.bf16 %v1431
    %v1483 = vmax.f32 %v1481, %v1482
    %v1484 = vrot.slane %v1483, 4
    %v1485 = vmax.f32 %v1483, %v1484
    %v1486 = vrot.slane %v1485, 2
    %v1487 = vmax.f32 %v1485, %v1486
    %v1488 = vrot.slane %v1487, 1
    %v1489 = vmax.f32 %v1487, %v1488
    %v1490 = vpack.i.bf16 %v1489, %v1489
    %v1491 = vunpack.i.l.bf16 %v1432
    %v1492 = vunpack.i.h.bf16 %v1432
    %v1493 = vmax.f32 %v1491, %v1492
    %v1494 = vrot.slane %v1493, 4
    %v1495 = vmax.f32 %v1493, %v1494
    %v1496 = vrot.slane %v1495, 2
    %v1497 = vmax.f32 %v1495, %v1496
    %v1498 = vrot.slane %v1497, 1
    %v1499 = vmax.f32 %v1497, %v1498
    %v1500 = vpack.i.bf16 %v1499, %v1499
    %v1501 = vunpack.i.l.bf16 %v1433
    %v1502 = vunpack.i.h.bf16 %v1433
    %v1503 = vmax.f32 %v1501, %v1502
    %v1504 = vrot.slane %v1503, 4
    %v1505 = vmax.f32 %v1503, %v1504
    %v1506 = vrot.slane %v1505, 2
    %v1507 = vmax.f32 %v1505, %v1506
    %v1508 = vrot.slane %v1507, 1
    %v1509 = vmax.f32 %v1507, %v1508
    %v1510 = vpack.i.bf16 %v1509, %v1509
    %v1511 = vunpack.i.l.bf16 %v1434
    %v1512 = vunpack.i.h.bf16 %v1434
    %v1513 = vmax.f32 %v1511, %v1512
    %v1514 = vrot.slane %v1513, 4
    %v1515 = vmax.f32 %v1513, %v1514
    %v1516 = vrot.slane %v1515, 2
    %v1517 = vmax.f32 %v1515, %v1516
    %v1518 = vrot.slane %v1517, 1
    %v1519 = vmax.f32 %v1517, %v1518
    %v1520 = vpack.i.bf16 %v1519, %v1519
    %v1521 = vunpack.i.l.bf16 %v1435
    %v1522 = vunpack.i.h.bf16 %v1435
    %v1523 = vmax.f32 %v1521, %v1522
    %v1524 = vrot.slane %v1523, 4
    %v1525 = vmax.f32 %v1523, %v1524
    %v1526 = vrot.slane %v1525, 2
    %v1527 = vmax.f32 %v1525, %v1526
    %v1528 = vrot.slane %v1527, 1
    %v1529 = vmax.f32 %v1527, %v1528
    %v1530 = vpack.i.bf16 %v1529, %v1529
    %v1531 = vunpack.i.l.bf16 %v1436
    %v1532 = vunpack.i.h.bf16 %v1436
    %v1533 = vmax.f32 %v1531, %v1532
    %v1534 = vrot.slane %v1533, 4
    %v1535 = vmax.f32 %v1533, %v1534
    %v1536 = vrot.slane %v1535, 2
    %v1537 = vmax.f32 %v1535, %v1536
    %v1538 = vrot.slane %v1537, 1
    %v1539 = vmax.f32 %v1537, %v1538
    %v1540 = vpack.i.bf16 %v1539, %v1539
    %v1541 = vunpack.i.l.bf16 %v1437
    %v1542 = vunpack.i.h.bf16 %v1437
    %v1543 = vmax.f32 %v1541, %v1542
    %v1544 = vrot.slane %v1543, 4
    %v1545 = vmax.f32 %v1543, %v1544
    %v1546 = vrot.slane %v1545, 2
    %v1547 = vmax.f32 %v1545, %v1546
    %v1548 = vrot.slane %v1547, 1
    %v1549 = vmax.f32 %v1547, %v1548
    %v1550 = vpack.i.bf16 %v1549, %v1549
    %v1551 = vunpack.i.l.bf16 %v1438
    %v1552 = vunpack.i.h.bf16 %v1438
    %v1553 = vmax.f32 %v1551, %v1552
    %v1554 = vrot.slane %v1553, 4
    %v1555 = vmax.f32 %v1553, %v1554
    %v1556 = vrot.slane %v1555, 2
    %v1557 = vmax.f32 %v1555, %v1556
    %v1558 = vrot.slane %v1557, 1
    %v1559 = vmax.f32 %v1557, %v1558
    %v1560 = vpack.i.bf16 %v1559, %v1559
    %v1561 = vunpack.i.l.bf16 %v1439
    %v1562 = vunpack.i.h.bf16 %v1439
    %v1563 = vmax.f32 %v1561, %v1562
    %v1564 = vrot.slane %v1563, 4
    %v1565 = vmax.f32 %v1563, %v1564
    %v1566 = vrot.slane %v1565, 2
    %v1567 = vmax.f32 %v1565, %v1566
    %v1568 = vrot.slane %v1567, 1
    %v1569 = vmax.f32 %v1567, %v1568
    %v1570 = vpack.i.bf16 %v1569, %v1569
    %v1571 = vunpack.i.l.bf16 %v1440
    %v1572 = vunpack.i.h.bf16 %v1440
    %v1573 = vmax.f32 %v1571, %v1572
    %v1574 = vrot.slane %v1573, 4
    %v1575 = vmax.f32 %v1573, %v1574
    %v1576 = vrot.slane %v1575, 2
    %v1577 = vmax.f32 %v1575, %v1576
    %v1578 = vrot.slane %v1577, 1
    %v1579 = vmax.f32 %v1577, %v1578
    %v1580 = vpack.i.bf16 %v1579, %v1579
    %v1581 = vunpack.i.l.bf16 %v1441
    %v1582 = vunpack.i.h.bf16 %v1441
    %v1583 = vmax.f32 %v1581, %v1582
    %v1584 = vrot.slane %v1583, 4
    %v1585 = vmax.f32 %v1583, %v1584
    %v1586 = vrot.slane %v1585, 2
    %v1587 = vmax.f32 %v1585, %v1586
    %v1588 = vrot.slane %v1587, 1
    %v1589 = vmax.f32 %v1587, %v1588
    %v1590 = vpack.i.bf16 %v1589, %v1589
    %v1591 = vunpack.i.l.bf16 %v1442
    %v1592 = vunpack.i.h.bf16 %v1442
    %v1593 = vmax.f32 %v1591, %v1592
    %v1594 = vrot.slane %v1593, 4
    %v1595 = vmax.f32 %v1593, %v1594
    %v1596 = vrot.slane %v1595, 2
    %v1597 = vmax.f32 %v1595, %v1596
    %v1598 = vrot.slane %v1597, 1
    %v1599 = vmax.f32 %v1597, %v1598
    %v1600 = vpack.i.bf16 %v1599, %v1599
    %v1601 = vunpack.i.l.bf16 %v1443
    %v1602 = vunpack.i.h.bf16 %v1443
    %v1603 = vmax.f32 %v1601, %v1602
    %v1604 = vrot.slane %v1603, 4
    %v1605 = vmax.f32 %v1603, %v1604
    %v1606 = vrot.slane %v1605, 2
    %v1607 = vmax.f32 %v1605, %v1606
    %v1608 = vrot.slane %v1607, 1
    %v1609 = vmax.f32 %v1607, %v1608
    %v1610 = vpack.i.bf16 %v1609, %v1609
    %v1611 = vunpack.i.l.bf16 %v1444
    %v1612 = vunpack.i.h.bf16 %v1444
    %v1613 = vmax.f32 %v1611, %v1612
    %v1614 = vrot.slane %v1613, 4
    %v1615 = vmax.f32 %v1613, %v1614
    %v1616 = vrot.slane %v1615, 2
    %v1617 = vmax.f32 %v1615, %v1616
    %v1618 = vrot.slane %v1617, 1
    %v1619 = vmax.f32 %v1617, %v1618
    %v1620 = vpack.i.bf16 %v1619, %v1619
    %v1621 = vmax.bf16 %v1470, 0
    %v1622 = vmax.bf16 %v1480, 0
    %v1623 = vmax.bf16 %v1490, 0
    %v1624 = vmax.bf16 %v1500, 0
    %v1625 = vmax.bf16 %v1510, 0
    %v1626 = vmax.bf16 %v1520, 0
    %v1627 = vmax.bf16 %v1530, 0
    %v1628 = vmax.bf16 %v1540, 0
    %v1629 = vmax.bf16 %v1550, 0
    %v1630 = vmax.bf16 %v1560, 0
    %v1631 = vmax.bf16 %v1570, 0
    %v1632 = vmax.bf16 %v1580, 0
    %v1633 = vmax.bf16 %v1590, 0
    %v1634 = vmax.bf16 %v1600, 0
    %v1635 = vmax.bf16 %v1610, 0
    %v1636 = vmax.bf16 %v1620, 0
    %v1637 = vld [vmem:[%s4 + $0x180] sm:$0xf]
    %v1638 = vld [vmem:[%s4 + $0x184] sm:$0xf]
    %v1639 = vld [vmem:[%s4 + $0x188] sm:$0xf]
    %v1640 = vld [vmem:[%s4 + $0x18c] sm:$0xf]
    %v1641 = vld [vmem:[%s4 + $0x190] sm:$0xf]
    %v1642 = vld [vmem:[%s4 + $0x194] sm:$0xf]
    %v1643 = vld [vmem:[%s4 + $0x198] sm:$0xf]
    %v1644 = vld [vmem:[%s4 + $0x19c] sm:$0xf]
    %v1645 = vld [vmem:[%s4 + $0x1a0] sm:$0xf]
    %v1646 = vld [vmem:[%s4 + $0x1a4] sm:$0xf]
    %v1647 = vld [vmem:[%s4 + $0x1a8] sm:$0xf]
    %v1648 = vld [vmem:[%s4 + $0x1ac] sm:$0xf]
    %v1649 = vld [vmem:[%s4 + $0x1b0] sm:$0xf]
    %v1650 = vld [vmem:[%s4 + $0x1b4] sm:$0xf]
    %v1651 = vld [vmem:[%s4 + $0x1b8] sm:$0xf]
    %v1652 = vld [vmem:[%s4 + $0x1bc] sm:$0xf]
    %v1653 = vld [vmem:[%s4 + $0x1c0] sm:$0xf]
    %v1654 = vld [vmem:[%s4 + $0x1c4] sm:$0xf]
    %v1655 = vld [vmem:[%s4 + $0x1c8] sm:$0xf]
    %v1656 = vld [vmem:[%s4 + $0x1cc] sm:$0xf]
    %v1657 = vld [vmem:[%s4 + $0x1d0] sm:$0xf]
    %v1658 = vld [vmem:[%s4 + $0x1d4] sm:$0xf]
    %v1659 = vld [vmem:[%s4 + $0x1d8] sm:$0xf]
    %v1660 = vld [vmem:[%s4 + $0x1dc] sm:$0xf]
    %v1661 = vld [vmem:[%s4 + $0x1e0] sm:$0xf]
    %v1662 = vld [vmem:[%s4 + $0x1e4] sm:$0xf]
    %v1663 = vld [vmem:[%s4 + $0x1e8] sm:$0xf]
    %v1664 = vld [vmem:[%s4 + $0x1ec] sm:$0xf]
    %v1665 = vld [vmem:[%s4 + $0x1f0] sm:$0xf]
    %v1666 = vld [vmem:[%s4 + $0x1f4] sm:$0xf]
    %v1667 = vld [vmem:[%s4 + $0x1f8] sm:$0xf]
    %v1668 = vld [vmem:[%s4 + $0x1fc] sm:$0xf]
    %v1669 = vld [vmem:[%s4 + $0x200] sm:$0xf]
    %v1670 = vld [vmem:[%s4 + $0x204] sm:$0xf]
    %v1671 = vld [vmem:[%s4 + $0x208] sm:$0xf]
    %v1672 = vld [vmem:[%s4 + $0x20c] sm:$0xf]
    %v1673 = vld [vmem:[%s4 + $0x210] sm:$0xf]
    %v1674 = vld [vmem:[%s4 + $0x214] sm:$0xf]
    %v1675 = vld [vmem:[%s4 + $0x218] sm:$0xf]
    %v1676 = vld [vmem:[%s4 + $0x21c] sm:$0xf]
    %v1677 = vld [vmem:[%s4 + $0x220] sm:$0xf]
    %v1678 = vld [vmem:[%s4 + $0x224] sm:$0xf]
    %v1679 = vld [vmem:[%s4 + $0x228] sm:$0xf]
    %v1680 = vld [vmem:[%s4 + $0x22c] sm:$0xf]
    %v1681 = vld [vmem:[%s4 + $0x230] sm:$0xf]
    %v1682 = vld [vmem:[%s4 + $0x234] sm:$0xf]
    %v1683 = vld [vmem:[%s4 + $0x238] sm:$0xf]
    %v1684 = vld [vmem:[%s4 + $0x23c] sm:$0xf]
    %v1685 = vld [vmem:[%s4 + $0x240] sm:$0xf]
    %v1686 = vld [vmem:[%s4 + $0x244] sm:$0xf]
    %v1687 = vld [vmem:[%s4 + $0x248] sm:$0xf]
    %v1688 = vld [vmem:[%s4 + $0x24c] sm:$0xf]
    %v1689 = vld [vmem:[%s4 + $0x250] sm:$0xf]
    %v1690 = vld [vmem:[%s4 + $0x254] sm:$0xf]
    %v1691 = vld [vmem:[%s4 + $0x258] sm:$0xf]
    %v1692 = vld [vmem:[%s4 + $0x25c] sm:$0xf]
    %v1693 = vld [vmem:[%s4 + $0x260] sm:$0xf]
    %v1694 = vld [vmem:[%s4 + $0x264] sm:$0xf]
    %v1695 = vld [vmem:[%s4 + $0x268] sm:$0xf]
    %v1696 = vld [vmem:[%s4 + $0x26c] sm:$0xf]
    %v1697 = vld [vmem:[%s4 + $0x270] sm:$0xf]
    %v1698 = vld [vmem:[%s4 + $0x274] sm:$0xf]
    %v1699 = vld [vmem:[%s4 + $0x278] sm:$0xf]
    %v1700 = vld [vmem:[%s4 + $0x27c] sm:$0xf]
    %v1701 = vld [vmem:[%s4 + $0x280] sm:$0xf]
    %v1702 = vld [vmem:[%s4 + $0x284] sm:$0xf]
    %v1703 = vld [vmem:[%s4 + $0x288] sm:$0xf]
    %v1704 = vld [vmem:[%s4 + $0x28c] sm:$0xf]
    %v1705 = vld [vmem:[%s4 + $0x290] sm:$0xf]
    %v1706 = vld [vmem:[%s4 + $0x294] sm:$0xf]
    %v1707 = vld [vmem:[%s4 + $0x298] sm:$0xf]
    %v1708 = vld [vmem:[%s4 + $0x29c] sm:$0xf]
    %v1709 = vld [vmem:[%s4 + $0x2a0] sm:$0xf]
    %v1710 = vld [vmem:[%s4 + $0x2a4] sm:$0xf]
    %v1711 = vld [vmem:[%s4 + $0x2a8] sm:$0xf]
    %v1712 = vld [vmem:[%s4 + $0x2ac] sm:$0xf]
    %v1713 = vld [vmem:[%s4 + $0x2b0] sm:$0xf]
    %v1714 = vld [vmem:[%s4 + $0x2b4] sm:$0xf]
    %v1715 = vld [vmem:[%s4 + $0x2b8] sm:$0xf]
    %v1716 = vld [vmem:[%s4 + $0x2bc] sm:$0xf]
    %v1717 = vld [vmem:[%s4 + $0x2c0] sm:$0xf]
    %v1718 = vld [vmem:[%s4 + $0x2c4] sm:$0xf]
    %v1719 = vld [vmem:[%s4 + $0x2c8] sm:$0xf]
    %v1720 = vld [vmem:[%s4 + $0x2cc] sm:$0xf]
    %v1721 = vld [vmem:[%s4 + $0x2d0] sm:$0xf]
    %v1722 = vld [vmem:[%s4 + $0x2d4] sm:$0xf]
    %v1723 = vld [vmem:[%s4 + $0x2d8] sm:$0xf]
    %v1724 = vld [vmem:[%s4 + $0x2dc] sm:$0xf]
    %v1725 = vld [vmem:[%s4 + $0x2e0] sm:$0xf]
    %v1726 = vld [vmem:[%s4 + $0x2e4] sm:$0xf]
    %v1727 = vld [vmem:[%s4 + $0x2e8] sm:$0xf]
    %v1728 = vld [vmem:[%s4 + $0x2ec] sm:$0xf]
    %v1729 = vld [vmem:[%s4 + $0x2f0] sm:$0xf]
    %v1730 = vld [vmem:[%s4 + $0x2f4] sm:$0xf]
    %v1731 = vld [vmem:[%s4 + $0x2f8] sm:$0xf]
    %v1732 = vld [vmem:[%s4 + $0x2fc] sm:$0xf]
    %v1733 = vld [vmem:[%s4 + $0x300] sm:$0xf]
    %v1734 = vld [vmem:[%s4 + $0x304] sm:$0xf]
    %v1735 = vld [vmem:[%s4 + $0x308] sm:$0xf]
    %v1736 = vld [vmem:[%s4 + $0x30c] sm:$0xf]
    %v1737 = vld [vmem:[%s4 + $0x310] sm:$0xf]
    %v1738 = vld [vmem:[%s4 + $0x314] sm:$0xf]
    %v1739 = vld [vmem:[%s4 + $0x318] sm:$0xf]
    %v1740 = vld [vmem:[%s4 + $0x31c] sm:$0xf]
    %v1741 = vld [vmem:[%s4 + $0x320] sm:$0xf]
    %v1742 = vld [vmem:[%s4 + $0x324] sm:$0xf]
    %v1743 = vld [vmem:[%s4 + $0x328] sm:$0xf]
    %v1744 = vld [vmem:[%s4 + $0x32c] sm:$0xf]
    %v1745 = vld [vmem:[%s4 + $0x330] sm:$0xf]
    %v1746 = vld [vmem:[%s4 + $0x334] sm:$0xf]
    %v1747 = vld [vmem:[%s4 + $0x338] sm:$0xf]
    %v1748 = vld [vmem:[%s4 + $0x33c] sm:$0xf]
    %v1749 = vld [vmem:[%s4 + $0x340] sm:$0xf]
    %v1750 = vld [vmem:[%s4 + $0x344] sm:$0xf]
    %v1751 = vld [vmem:[%s4 + $0x348] sm:$0xf]
    %v1752 = vld [vmem:[%s4 + $0x34c] sm:$0xf]
    %v1753 = vld [vmem:[%s4 + $0x350] sm:$0xf]
    %v1754 = vld [vmem:[%s4 + $0x354] sm:$0xf]
    %v1755 = vld [vmem:[%s4 + $0x358] sm:$0xf]
    %v1756 = vld [vmem:[%s4 + $0x35c] sm:$0xf]
    %v1757 = vld [vmem:[%s4 + $0x360] sm:$0xf]
    %v1758 = vld [vmem:[%s4 + $0x364] sm:$0xf]
    %v1759 = vld [vmem:[%s4 + $0x368] sm:$0xf]
    %v1760 = vld [vmem:[%s4 + $0x36c] sm:$0xf]
    %v1761 = vld [vmem:[%s4 + $0x370] sm:$0xf]
    %v1762 = vld [vmem:[%s4 + $0x374] sm:$0xf]
    %v1763 = vld [vmem:[%s4 + $0x378] sm:$0xf]
    %v1764 = vld [vmem:[%s4 + $0x37c] sm:$0xf]
    %v1781 = vunpack.c.l.b16 %v1621
    %v1782 = vunpack.c.l.b16 %v1622
    %v1783 = vunpack.c.l.b16 %v1623
    %v1784 = vunpack.c.l.b16 %v1624
    %v1785 = vunpack.c.l.b16 %v1625
    %v1786 = vunpack.c.l.b16 %v1626
    %v1787 = vunpack.c.l.b16 %v1627
    %v1788 = vunpack.c.l.b16 %v1628
    %v1789 = vunpack.c.l.b16 %v1629
    %v1790 = vunpack.c.l.b16 %v1630
    %v1791 = vunpack.c.l.b16 %v1631
    %v1792 = vunpack.c.l.b16 %v1632
    %v1793 = vunpack.c.l.b16 %v1633
    %v1794 = vunpack.c.l.b16 %v1634
    %v1795 = vunpack.c.l.b16 %v1635
    %v1796 = vunpack.c.l.b16 %v1636
    %v1797 = vsel %vm930, %v1789, %v1781
    %v1798 = vsel %vm930, %v1790, %v1782
    %v1799 = vsel %vm930, %v1791, %v1783
    %v1800 = vsel %vm930, %v1792, %v1784
    %v1801 = vsel %vm930, %v1793, %v1785
    %v1802 = vsel %vm930, %v1794, %v1786
    %v1803 = vsel %vm930, %v1795, %v1787
    %v1804 = vsel %vm930, %v1796, %v1788
    %v1805 = vpack.c.b16 %v1797, %v1797
    %v1806 = vpack.c.b16 %v1798, %v1798
    %v1807 = vpack.c.b16 %v1799, %v1799
    %v1808 = vpack.c.b16 %v1800, %v1800
    %v1809 = vpack.c.b16 %v1801, %v1801
    %v1810 = vpack.c.b16 %v1802, %v1802
    %v1811 = vpack.c.b16 %v1803, %v1803
    %v1812 = vpack.c.b16 %v1804, %v1804
    %v1949 = vunpack.c.l.b16 %v1637
    %v1950 = vunpack.c.l.b16 %v1638
    %v1951 = vunpack.c.l.b16 %v1639
    %v1952 = vunpack.c.l.b16 %v1640
    %v1953 = vunpack.c.l.b16 %v1641
    %v1954 = vunpack.c.l.b16 %v1642
    %v1955 = vunpack.c.l.b16 %v1643
    %v1956 = vunpack.c.l.b16 %v1644
    %v1957 = vunpack.c.l.b16 %v1645
    %v1958 = vunpack.c.l.b16 %v1646
    %v1959 = vunpack.c.l.b16 %v1647
    %v1960 = vunpack.c.l.b16 %v1648
    %v1961 = vunpack.c.l.b16 %v1649
    %v1962 = vunpack.c.l.b16 %v1650
    %v1963 = vunpack.c.l.b16 %v1651
    %v1964 = vunpack.c.l.b16 %v1652
    %v1965 = vunpack.c.l.b16 %v1653
    %v1966 = vunpack.c.l.b16 %v1654
    %v1967 = vunpack.c.l.b16 %v1655
    %v1968 = vunpack.c.l.b16 %v1656
    %v1969 = vunpack.c.l.b16 %v1657
    %v1970 = vunpack.c.l.b16 %v1658
    %v1971 = vunpack.c.l.b16 %v1659
    %v1972 = vunpack.c.l.b16 %v1660
    %v1973 = vunpack.c.l.b16 %v1661
    %v1974 = vunpack.c.l.b16 %v1662
    %v1975 = vunpack.c.l.b16 %v1663
    %v1976 = vunpack.c.l.b16 %v1664
    %v1977 = vunpack.c.l.b16 %v1665
    %v1978 = vunpack.c.l.b16 %v1666
    %v1979 = vunpack.c.l.b16 %v1667
    %v1980 = vunpack.c.l.b16 %v1668
    %v1981 = vunpack.c.l.b16 %v1669
    %v1982 = vunpack.c.l.b16 %v1670
    %v1983 = vunpack.c.l.b16 %v1671
    %v1984 = vunpack.c.l.b16 %v1672
    %v1985 = vunpack.c.l.b16 %v1673
    %v1986 = vunpack.c.l.b16 %v1674
    %v1987 = vunpack.c.l.b16 %v1675
    %v1988 = vunpack.c.l.b16 %v1676
    %v1989 = vunpack.c.l.b16 %v1677
    %v1990 = vunpack.c.l.b16 %v1678
    %v1991 = vunpack.c.l.b16 %v1679
    %v1992 = vunpack.c.l.b16 %v1680
    %v1993 = vunpack.c.l.b16 %v1681
    %v1994 = vunpack.c.l.b16 %v1682
    %v1995 = vunpack.c.l.b16 %v1683
    %v1996 = vunpack.c.l.b16 %v1684
    %v1997 = vunpack.c.l.b16 %v1685
    %v1998 = vunpack.c.l.b16 %v1686
    %v1999 = vunpack.c.l.b16 %v1687
    %v2000 = vunpack.c.l.b16 %v1688
    %v2001 = vunpack.c.l.b16 %v1689
    %v2002 = vunpack.c.l.b16 %v1690
    %v2003 = vunpack.c.l.b16 %v1691
    %v2004 = vunpack.c.l.b16 %v1692
    %v2005 = vunpack.c.l.b16 %v1693
    %v2006 = vunpack.c.l.b16 %v1694
    %v2007 = vunpack.c.l.b16 %v1695
    %v2008 = vunpack.c.l.b16 %v1696
    %v2009 = vunpack.c.l.b16 %v1697
    %v2010 = vunpack.c.l.b16 %v1698
    %v2011 = vunpack.c.l.b16 %v1699
    %v2012 = vunpack.c.l.b16 %v1700
    %v2013 = vunpack.c.l.b16 %v1701
    %v2014 = vunpack.c.l.b16 %v1702
    %v2015 = vunpack.c.l.b16 %v1703
    %v2016 = vunpack.c.l.b16 %v1704
    %v2017 = vunpack.c.l.b16 %v1705
    %v2018 = vunpack.c.l.b16 %v1706
    %v2019 = vunpack.c.l.b16 %v1707
    %v2020 = vunpack.c.l.b16 %v1708
    %v2021 = vunpack.c.l.b16 %v1709
    %v2022 = vunpack.c.l.b16 %v1710
    %v2023 = vunpack.c.l.b16 %v1711
    %v2024 = vunpack.c.l.b16 %v1712
    %v2025 = vunpack.c.l.b16 %v1713
    %v2026 = vunpack.c.l.b16 %v1714
    %v2027 = vunpack.c.l.b16 %v1715
    %v2028 = vunpack.c.l.b16 %v1716
    %v2029 = vunpack.c.l.b16 %v1717
    %v2030 = vunpack.c.l.b16 %v1718
    %v2031 = vunpack.c.l.b16 %v1719
    %v2032 = vunpack.c.l.b16 %v1720
    %v2033 = vunpack.c.l.b16 %v1721
    %v2034 = vunpack.c.l.b16 %v1722
    %v2035 = vunpack.c.l.b16 %v1723
    %v2036 = vunpack.c.l.b16 %v1724
    %v2037 = vunpack.c.l.b16 %v1725
    %v2038 = vunpack.c.l.b16 %v1726
    %v2039 = vunpack.c.l.b16 %v1727
    %v2040 = vunpack.c.l.b16 %v1728
    %v2041 = vunpack.c.l.b16 %v1729
    %v2042 = vunpack.c.l.b16 %v1730
    %v2043 = vunpack.c.l.b16 %v1731
    %v2044 = vunpack.c.l.b16 %v1732
    %v2045 = vunpack.c.l.b16 %v1733
    %v2046 = vunpack.c.l.b16 %v1734
    %v2047 = vunpack.c.l.b16 %v1735
    %v2048 = vunpack.c.l.b16 %v1736
    %v2049 = vunpack.c.l.b16 %v1737
    %v2050 = vunpack.c.l.b16 %v1738
    %v2051 = vunpack.c.l.b16 %v1739
    %v2052 = vunpack.c.l.b16 %v1740
    %v2053 = vunpack.c.l.b16 %v1741
    %v2054 = vunpack.c.l.b16 %v1742
    %v2055 = vunpack.c.l.b16 %v1743
    %v2056 = vunpack.c.l.b16 %v1744
    %v2057 = vunpack.c.l.b16 %v1745
    %v2058 = vunpack.c.l.b16 %v1746
    %v2059 = vunpack.c.l.b16 %v1747
    %v2060 = vunpack.c.l.b16 %v1748
    %v2061 = vunpack.c.l.b16 %v1749
    %v2062 = vunpack.c.l.b16 %v1750
    %v2063 = vunpack.c.l.b16 %v1751
    %v2064 = vunpack.c.l.b16 %v1752
    %v2065 = vunpack.c.l.b16 %v1753
    %v2066 = vunpack.c.l.b16 %v1754
    %v2067 = vunpack.c.l.b16 %v1755
    %v2068 = vunpack.c.l.b16 %v1756
    %v2069 = vunpack.c.l.b16 %v1757
    %v2070 = vunpack.c.l.b16 %v1758
    %v2071 = vunpack.c.l.b16 %v1759
    %v2072 = vunpack.c.l.b16 %v1760
    %v2073 = vunpack.c.l.b16 %v1761
    %v2074 = vunpack.c.l.b16 %v1762
    %v2075 = vunpack.c.l.b16 %v1763
    %v2076 = vunpack.c.l.b16 %v1764
    %v2077 = vpack.c.b16 %v1950, %v1949
    %v2078 = vpack.c.b16 %v1952, %v1951
    %v2079 = vpack.c.b16 %v1954, %v1953
    %v2080 = vpack.c.b16 %v1956, %v1955
    %v2081 = vpack.c.b16 %v1958, %v1957
    %v2082 = vpack.c.b16 %v1960, %v1959
    %v2083 = vpack.c.b16 %v1962, %v1961
    %v2084 = vpack.c.b16 %v1964, %v1963
    %v2085 = vpack.c.b16 %v1966, %v1965
    %v2086 = vpack.c.b16 %v1968, %v1967
    %v2087 = vpack.c.b16 %v1970, %v1969
    %v2088 = vpack.c.b16 %v1972, %v1971
    %v2089 = vpack.c.b16 %v1974, %v1973
    %v2090 = vpack.c.b16 %v1976, %v1975
    %v2091 = vpack.c.b16 %v1978, %v1977
    %v2092 = vpack.c.b16 %v1980, %v1979
    %v2093 = vpack.c.b16 %v1982, %v1981
    %v2094 = vpack.c.b16 %v1984, %v1983
    %v2095 = vpack.c.b16 %v1986, %v1985
    %v2096 = vpack.c.b16 %v1988, %v1987
    %v2097 = vpack.c.b16 %v1990, %v1989
    %v2098 = vpack.c.b16 %v1992, %v1991
    %v2099 = vpack.c.b16 %v1994, %v1993
    %v2100 = vpack.c.b16 %v1996, %v1995
    %v2101 = vpack.c.b16 %v1998, %v1997
    %v2102 = vpack.c.b16 %v2000, %v1999
    %v2103 = vpack.c.b16 %v2002, %v2001
    %v2104 = vpack.c.b16 %v2004, %v2003
    %v2105 = vpack.c.b16 %v2006, %v2005
    %v2106 = vpack.c.b16 %v2008, %v2007
    %v2107 = vpack.c.b16 %v2010, %v2009
    %v2108 = vpack.c.b16 %v2012, %v2011
    %v2109 = vpack.c.b16 %v2014, %v2013
    %v2110 = vpack.c.b16 %v2016, %v2015
    %v2111 = vpack.c.b16 %v2018, %v2017
    %v2112 = vpack.c.b16 %v2020, %v2019
    %v2113 = vpack.c.b16 %v2022, %v2021
    %v2114 = vpack.c.b16 %v2024, %v2023
    %v2115 = vpack.c.b16 %v2026, %v2025
    %v2116 = vpack.c.b16 %v2028, %v2027
    %v2117 = vpack.c.b16 %v2030, %v2029
    %v2118 = vpack.c.b16 %v2032, %v2031
    %v2119 = vpack.c.b16 %v2034, %v2033
    %v2120 = vpack.c.b16 %v2036, %v2035
    %v2121 = vpack.c.b16 %v2038, %v2037
    %v2122 = vpack.c.b16 %v2040, %v2039
    %v2123 = vpack.c.b16 %v2042, %v2041
    %v2124 = vpack.c.b16 %v2044, %v2043
    %v2125 = vpack.c.b16 %v2046, %v2045
    %v2126 = vpack.c.b16 %v2048, %v2047
    %v2127 = vpack.c.b16 %v2050, %v2049
    %v2128 = vpack.c.b16 %v2052, %v2051
    %v2129 = vpack.c.b16 %v2054, %v2053
    %v2130 = vpack.c.b16 %v2056, %v2055
    %v2131 = vpack.c.b16 %v2058, %v2057
    %v2132 = vpack.c.b16 %v2060, %v2059
    %v2133 = vpack.c.b16 %v2062, %v2061
    %v2134 = vpack.c.b16 %v2064, %v2063
    %v2135 = vpack.c.b16 %v2066, %v2065
    %v2136 = vpack.c.b16 %v2068, %v2067
    %v2137 = vpack.c.b16 %v2070, %v2069
    %v2138 = vpack.c.b16 %v2072, %v2071
    %v2139 = vpack.c.b16 %v2074, %v2073
    %v2140 = vpack.c.b16 %v2076, %v2075
    %2205 = vmatprep.subr.bf16.mxu0 0
    %2206 = vmatpush1.bf16.msra.mxu0 %v2077
    %2207 = vmatprep.subr.bf16.mxu0 0
    %2208 = vmatpush1.bf16.msra.mxu0 %v2078
    %2209 = vmatprep.subr.bf16.mxu0 0
    %2210 = vmatpush1.bf16.msra.mxu0 %v2079
    %2211 = vmatprep.subr.bf16.mxu0 0
    %2212 = vmatpush1.bf16.msra.mxu0 %v2080
    %2213 = vmatprep.subr.bf16.mxu0 0
    %2214 = vmatpush1.bf16.msra.mxu0 %v2081
    %2215 = vmatprep.subr.bf16.mxu0 0
    %2216 = vmatpush1.bf16.msra.mxu0 %v2082
    %2217 = vmatprep.subr.bf16.mxu0 0
    %2218 = vmatpush1.bf16.msra.mxu0 %v2083
    %2219 = vmatprep.subr.bf16.mxu0 0
    %2220 = vmatpush1.bf16.msra.mxu0 %v2084
    %2221 = vmatprep.subr.bf16.mxu0 0
    %2222 = vmatpush1.bf16.msra.mxu0 %v2085
    %2223 = vmatprep.subr.bf16.mxu0 0
    %2224 = vmatpush1.bf16.msra.mxu0 %v2086
    %2225 = vmatprep.subr.bf16.mxu0 0
    %2226 = vmatpush1.bf16.msra.mxu0 %v2087
    %2227 = vmatprep.subr.bf16.mxu0 0
    %2228 = vmatpush1.bf16.msra.mxu0 %v2088
    %2229 = vmatprep.subr.bf16.mxu0 0
    %2230 = vmatpush1.bf16.msra.mxu0 %v2089
    %2231 = vmatprep.subr.bf16.mxu0 0
    %2232 = vmatpush1.bf16.msra.mxu0 %v2090
    %2233 = vmatprep.subr.bf16.mxu0 0
    %2234 = vmatpush1.bf16.msra.mxu0 %v2091
    %2235 = vmatprep.subr.bf16.mxu0 0
    %2236 = vmatpush1.bf16.msra.mxu0 %v2092
    %2237 = vmatprep.mubr.bf16.mxu0 %v1806
    %2238 = vmatmul.mubr.bf16.gmra.mrb[0].mxu0 %v1805
    %v2239 = vpop.f32.mrb[0].mxu0
    %v2240 = vadd.f32 0.0, %v2239
    %v2241 = vpop.f32.mrb[0].mxu0
    %v2242 = vpop.f32.mrb[0].mxu0
    %v2243 = vpop.f32.mrb[0].mxu0
    %2244 = vdwg.mxu0
    %2245 = vmatprep.subr.bf16.mxu0 0
    %2246 = vmatpush1.bf16.msra.mxu0 %v2093
    %2247 = vmatprep.subr.bf16.mxu0 0
    %2248 = vmatpush1.bf16.msra.mxu0 %v2094
    %2249 = vmatprep.subr.bf16.mxu0 0
    %2250 = vmatpush1.bf16.msra.mxu0 %v2095
    %2251 = vmatprep.subr.bf16.mxu0 0
    %2252 = vmatpush1.bf16.msra.mxu0 %v2096
    %2253 = vmatprep.subr.bf16.mxu0 0
    %2254 = vmatpush1.bf16.msra.mxu0 %v2097
    %2255 = vmatprep.subr.bf16.mxu0 0
    %2256 = vmatpush1.bf16.msra.mxu0 %v2098
    %2257 = vmatprep.subr.bf16.mxu0 0
    %2258 = vmatpush1.bf16.msra.mxu0 %v2099
    %2259 = vmatprep.subr.bf16.mxu0 0
    %2260 = vmatpush1.bf16.msra.mxu0 %v2100
    %2261 = vmatprep.subr.bf16.mxu0 0
    %2262 = vmatpush1.bf16.msra.mxu0 %v2101
    %2263 = vmatprep.subr.bf16.mxu0 0
    %2264 = vmatpush1.bf16.msra.mxu0 %v2102
    %2265 = vmatprep.subr.bf16.mxu0 0
    %2266 = vmatpush1.bf16.msra.mxu0 %v2103
    %2267 = vmatprep.subr.bf16.mxu0 0
    %2268 = vmatpush1.bf16.msra.mxu0 %v2104
    %2269 = vmatprep.subr.bf16.mxu0 0
    %2270 = vmatpush1.bf16.msra.mxu0 %v2105
    %2271 = vmatprep.subr.bf16.mxu0 0
    %2272 = vmatpush1.bf16.msra.mxu0 %v2106
    %2273 = vmatprep.subr.bf16.mxu0 0
    %2274 = vmatpush1.bf16.msra.mxu0 %v2107
    %2275 = vmatprep.subr.bf16.mxu0 0
    %2276 = vmatpush1.bf16.msra.mxu0 %v2108
    %2277 = vmatprep.mubr.bf16.mxu0 %v1808
    %2278 = vmatmul.mubr.bf16.gmra.mrb[0].mxu0 %v1807
    %v2279 = vpop.f32.mrb[0].mxu0
    %v2280 = vadd.f32 %v2240, %v2279
    %v2281 = vpop.f32.mrb[0].mxu0
    %v2282 = vpop.f32.mrb[0].mxu0
    %v2283 = vpop.f32.mrb[0].mxu0
    %2284 = vdwg.mxu0
    %2285 = vmatprep.subr.bf16.mxu0 0
    %2286 = vmatpush1.bf16.msra.mxu0 %v2109
    %2287 = vmatprep.subr.bf16.mxu0 0
    %2288 = vmatpush1.bf16.msra.mxu0 %v2110
    %2289 = vmatprep.subr.bf16.mxu0 0
    %2290 = vmatpush1.bf16.msra.mxu0 %v2111
    %2291 = vmatprep.subr.bf16.mxu0 0
    %2292 = vmatpush1.bf16.msra.mxu0 %v2112
    %2293 = vmatprep.subr.bf16.mxu0 0
    %2294 = vmatpush1.bf16.msra.mxu0 %v2113
    %2295 = vmatprep.subr.bf16.mxu0 0
    %2296 = vmatpush1.bf16.msra.mxu0 %v2114
    %2297 = vmatprep.subr.bf16.mxu0 0
    %2298 = vmatpush1.bf16.msra.mxu0 %v2115
    %2299 = vmatprep.subr.bf16.mxu0 0
    %2300 = vmatpush1.bf16.msra.mxu0 %v2116
    %2301 = vmatprep.subr.bf16.mxu0 0
    %2302 = vmatpush1.bf16.msra.mxu0 %v2117
    %2303 = vmatprep.subr.bf16.mxu0 0
    %2304 = vmatpush1.bf16.msra.mxu0 %v2118
    %2305 = vmatprep.subr.bf16.mxu0 0
    %2306 = vmatpush1.bf16.msra.mxu0 %v2119
    %2307 = vmatprep.subr.bf16.mxu0 0
    %2308 = vmatpush1.bf16.msra.mxu0 %v2120
    %2309 = vmatprep.subr.bf16.mxu0 0
    %2310 = vmatpush1.bf16.msra.mxu0 %v2121
    %2311 = vmatprep.subr.bf16.mxu0 0
    %2312 = vmatpush1.bf16.msra.mxu0 %v2122
    %2313 = vmatprep.subr.bf16.mxu0 0
    %2314 = vmatpush1.bf16.msra.mxu0 %v2123
    %2315 = vmatprep.subr.bf16.mxu0 0
    %2316 = vmatpush1.bf16.msra.mxu0 %v2124
    %2317 = vmatprep.mubr.bf16.mxu0 %v1810
    %2318 = vmatmul.mubr.bf16.gmra.mrb[0].mxu0 %v1809
    %v2319 = vpop.f32.mrb[0].mxu0
    %v2320 = vadd.f32 %v2280, %v2319
    %v2321 = vpop.f32.mrb[0].mxu0
    %v2322 = vpop.f32.mrb[0].mxu0
    %v2323 = vpop.f32.mrb[0].mxu0
    %2324 = vdwg.mxu0
    %2325 = vmatprep.subr.bf16.mxu0 0
    %2326 = vmatpush1.bf16.msra.mxu0 %v2125
    %2327 = vmatprep.subr.bf16.mxu0 0
    %2328 = vmatpush1.bf16.msra.mxu0 %v2126
    %2329 = vmatprep.subr.bf16.mxu0 0
    %2330 = vmatpush1.bf16.msra.mxu0 %v2127
    %2331 = vmatprep.subr.bf16.mxu0 0
    %2332 = vmatpush1.bf16.msra.mxu0 %v2128
    %2333 = vmatprep.subr.bf16.mxu0 0
    %2334 = vmatpush1.bf16.msra.mxu0 %v2129
    %2335 = vmatprep.subr.bf16.mxu0 0
    %2336 = vmatpush1.bf16.msra.mxu0 %v2130
    %2337 = vmatprep.subr.bf16.mxu0 0
    %2338 = vmatpush1.bf16.msra.mxu0 %v2131
    %2339 = vmatprep.subr.bf16.mxu0 0
    %2340 = vmatpush1.bf16.msra.mxu0 %v2132
    %2341 = vmatprep.subr.bf16.mxu0 0
    %2342 = vmatpush1.bf16.msra.mxu0 %v2133
    %2343 = vmatprep.subr.bf16.mxu0 0
    %2344 = vmatpush1.bf16.msra.mxu0 %v2134
    %2345 = vmatprep.subr.bf16.mxu0 0
    %2346 = vmatpush1.bf16.msra.mxu0 %v2135
    %2347 = vmatprep.subr.bf16.mxu0 0
    %2348 = vmatpush1.bf16.msra.mxu0 %v2136
    %2349 = vmatprep.subr.bf16.mxu0 0
    %2350 = vmatpush1.bf16.msra.mxu0 %v2137
    %2351 = vmatprep.subr.bf16.mxu0 0
    %2352 = vmatpush1.bf16.msra.mxu0 %v2138
    %2353 = vmatprep.subr.bf16.mxu0 0
    %2354 = vmatpush1.bf16.msra.mxu0 %v2139
    %2355 = vmatprep.subr.bf16.mxu0 0
    %2356 = vmatpush1.bf16.msra.mxu0 %v2140
    %2357 = vmatprep.mubr.bf16.mxu0 %v1812
    %2358 = vmatmul.mubr.bf16.gmra.mrb[0].mxu0 %v1811
    %v2359 = vpop.f32.mrb[0].mxu0
    %v2360 = vadd.f32 %v2320, %v2359
    %v2361 = vpop.f32.mrb[0].mxu0
    %v2362 = vpop.f32.mrb[0].mxu0
    %v2363 = vpop.f32.mrb[0].mxu0
    %2364 = vdwg.mxu0
    %v2365 = vadd.f32 %v1360, %v2360
    %v2366 = vld [vmem:[%s3] sm:$0xff]
    %v2367 = vld [vmem:[%s3 + $0x8] sm:$0xff]
    %v2368 = vld [vmem:[%s3 + $0x10] sm:$0xff]
    %v2369 = vld [vmem:[%s3 + $0x18] sm:$0xff]
    %v2370 = vld [vmem:[%s3 + $0x20] sm:$0xff]
    %v2371 = vld [vmem:[%s3 + $0x28] sm:$0xff]
    %v2372 = vld [vmem:[%s3 + $0x30] sm:$0xff]
    %v2373 = vld [vmem:[%s3 + $0x38] sm:$0xff]
    %v2382 = vcombine.high %v2366, %v2366
    %v2384 = vunpack.c.l.s4 1983009808
    %v2385 = vunpack.c.0.s8 %v2384
    %v2386 = vlaneseq
    %v2387 = vshrl.u32 %v2386, 7
    %v2388 = vsub.s32 %v2385, %v2387
    %v2389 = vrot.slane %v2366, %v2388
    %v2391 = vunpack.c.l.s4 1983009808
    %v2392 = vunpack.c.0.s8 %v2391
    %v2393 = vlaneseq
    %v2394 = vshrl.u32 %v2393, 7
    %v2395 = vsub.s32 %v2392, %v2394
    %v2396 = vrot.slane %v2382, %v2395
    %v2397 = vcombine.high %v2389, %v2389
    %v2398 = vcombine.high %v2396, %v2396
    %v2399 = vcombine.high %v2367, %v2367
    %v2401 = vunpack.c.l.s4 1983009808
    %v2402 = vunpack.c.0.s8 %v2401
    %v2403 = vlaneseq
    %v2404 = vshrl.u32 %v2403, 7
    %v2405 = vsub.s32 %v2402, %v2404
    %v2406 = vrot.slane %v2367, %v2405
    %v2408 = vunpack.c.l.s4 1983009808
    %v2409 = vunpack.c.0.s8 %v2408
    %v2410 = vlaneseq
    %v2411 = vshrl.u32 %v2410, 7
    %v2412 = vsub.s32 %v2409, %v2411
    %v2413 = vrot.slane %v2399, %v2412
    %v2414 = vcombine.high %v2406, %v2406
    %v2415 = vcombine.high %v2413, %v2413
    %v2416 = vcombine.high %v2368, %v2368
    %v2418 = vunpack.c.l.s4 1983009808
    %v2419 = vunpack.c.0.s8 %v2418
    %v2420 = vlaneseq
    %v2421 = vshrl.u32 %v2420, 7
    %v2422 = vsub.s32 %v2419, %v2421
    %v2423 = vrot.slane %v2368, %v2422
    %v2425 = vunpack.c.l.s4 1983009808
    %v2426 = vunpack.c.0.s8 %v2425
    %v2427 = vlaneseq
    %v2428 = vshrl.u32 %v2427, 7
    %v2429 = vsub.s32 %v2426, %v2428
    %v2430 = vrot.slane %v2416, %v2429
    %v2431 = vcombine.high %v2423, %v2423
    %v2432 = vcombine.high %v2430, %v2430
    %v2433 = vcombine.high %v2369, %v2369
    %v2435 = vunpack.c.l.s4 1983009808
    %v2436 = vunpack.c.0.s8 %v2435
    %v2437 = vlaneseq
    %v2438 = vshrl.u32 %v2437, 7
    %v2439 = vsub.s32 %v2436, %v2438
    %v2440 = vrot.slane %v2369, %v2439
    %v2442 = vunpack.c.l.s4 1983009808
    %v2443 = vunpack.c.0.s8 %v2442
    %v2444 = vlaneseq
    %v2445 = vshrl.u32 %v2444, 7
    %v2446 = vsub.s32 %v2443, %v2445
    %v2447 = vrot.slane %v2433, %v2446
    %v2448 = vcombine.high %v2440, %v2440
    %v2449 = vcombine.high %v2447, %v2447
    %v2450 = vcombine.high %v2370, %v2370
    %v2452 = vunpack.c.l.s4 1983009808
    %v2453 = vunpack.c.0.s8 %v2452
    %v2454 = vlaneseq
    %v2455 = vshrl.u32 %v2454, 7
    %v2456 = vsub.s32 %v2453, %v2455
    %v2457 = vrot.slane %v2370, %v2456
    %v2459 = vunpack.c.l.s4 1983009808
    %v2460 = vunpack.c.0.s8 %v2459
    %v2461 = vlaneseq
    %v2462 = vshrl.u32 %v2461, 7
    %v2463 = vsub.s32 %v2460, %v2462
    %v2464 = vrot.slane %v2450, %v2463
    %v2465 = vcombine.high %v2457, %v2457
    %v2466 = vcombine.high %v2464, %v2464
    %v2467 = vcombine.high %v2371, %v2371
    %v2469 = vunpack.c.l.s4 1983009808
    %v2470 = vunpack.c.0.s8 %v2469
    %v2471 = vlaneseq
    %v2472 = vshrl.u32 %v2471, 7
    %v2473 = vsub.s32 %v2470, %v2472
    %v2474 = vrot.slane %v2371, %v2473
    %v2476 = vunpack.c.l.s4 1983009808
    %v2477 = vunpack.c.0.s8 %v2476
    %v2478 = vlaneseq
    %v2479 = vshrl.u32 %v2478, 7
    %v2480 = vsub.s32 %v2477, %v2479
    %v2481 = vrot.slane %v2467, %v2480
    %v2482 = vcombine.high %v2474, %v2474
    %v2483 = vcombine.high %v2481, %v2481
    %v2484 = vcombine.high %v2372, %v2372
    %v2486 = vunpack.c.l.s4 1983009808
    %v2487 = vunpack.c.0.s8 %v2486
    %v2488 = vlaneseq
    %v2489 = vshrl.u32 %v2488, 7
    %v2490 = vsub.s32 %v2487, %v2489
    %v2491 = vrot.slane %v2372, %v2490
    %v2493 = vunpack.c.l.s4 1983009808
    %v2494 = vunpack.c.0.s8 %v2493
    %v2495 = vlaneseq
    %v2496 = vshrl.u32 %v2495, 7
    %v2497 = vsub.s32 %v2494, %v2496
    %v2498 = vrot.slane %v2484, %v2497
    %v2499 = vcombine.high %v2491, %v2491
    %v2500 = vcombine.high %v2498, %v2498
    %v2501 = vcombine.high %v2373, %v2373
    %v2503 = vunpack.c.l.s4 1983009808
    %v2504 = vunpack.c.0.s8 %v2503
    %v2505 = vlaneseq
    %v2506 = vshrl.u32 %v2505, 7
    %v2507 = vsub.s32 %v2504, %v2506
    %v2508 = vrot.slane %v2373, %v2507
    %v2510 = vunpack.c.l.s4 1983009808
    %v2511 = vunpack.c.0.s8 %v2510
    %v2512 = vlaneseq
    %v2513 = vshrl.u32 %v2512, 7
    %v2514 = vsub.s32 %v2511, %v2513
    %v2515 = vrot.slane %v2501, %v2514
    %v2516 = vcombine.high %v2508, %v2508
    %v2517 = vcombine.high %v2515, %v2515
    %vm2518 = vcmask 1041408
    %v2521 = vsel %vm2518, %v2389, 4286644096
    %v2523 = vunpack.i.l.bf16 %v2521
    %v2524 = vunpack.i.h.bf16 %v2521
    %v2525 = vmax.f32 %v2523, %v2524
    %v2526 = vrot.slane %v2525, 4
    %v2527 = vmax.f32 %v2525, %v2526
    %v2528 = vrot.slane %v2527, 2
    %v2529 = vmax.f32 %v2527, %v2528
    %v2530 = vrot.slane %v2529, 1
    %v2531 = vmax.f32 %v2529, %v2530
    %v2532 = vpack.i.bf16 %v2531, %v2531
    %v2534 = vsel %vm2518, %v2397, 4286644096
    %v2536 = vunpack.i.l.bf16 %v2534
    %v2537 = vunpack.i.h.bf16 %v2534
    %v2538 = vmax.f32 %v2536, %v2537
    %v2539 = vrot.slane %v2538, 4
    %v2540 = vmax.f32 %v2538, %v2539
    %v2541 = vrot.slane %v2540, 2
    %v2542 = vmax.f32 %v2540, %v2541
    %v2543 = vrot.slane %v2542, 1
    %v2544 = vmax.f32 %v2542, %v2543
    %v2545 = vpack.i.bf16 %v2544, %v2544
    %v2547 = vsel %vm2518, %v2396, 4286644096
    %v2549 = vunpack.i.l.bf16 %v2547
    %v2550 = vunpack.i.h.bf16 %v2547
    %v2551 = vmax.f32 %v2549, %v2550
    %v2552 = vrot.slane %v2551, 4
    %v2553 = vmax.f32 %v2551, %v2552
    %v2554 = vrot.slane %v2553, 2
    %v2555 = vmax.f32 %v2553, %v2554
    %v2556 = vrot.slane %v2555, 1
    %v2557 = vmax.f32 %v2555, %v2556
    %v2558 = vpack.i.bf16 %v2557, %v2557
    %v2560 = vsel %vm2518, %v2398, 4286644096
    %v2562 = vunpack.i.l.bf16 %v2560
    %v2563 = vunpack.i.h.bf16 %v2560
    %v2564 = vmax.f32 %v2562, %v2563
    %v2565 = vrot.slane %v2564, 4
    %v2566 = vmax.f32 %v2564, %v2565
    %v2567 = vrot.slane %v2566, 2
    %v2568 = vmax.f32 %v2566, %v2567
    %v2569 = vrot.slane %v2568, 1
    %v2570 = vmax.f32 %v2568, %v2569
    %v2571 = vpack.i.bf16 %v2570, %v2570
    %v2573 = vsel %vm2518, %v2406, 4286644096
    %v2575 = vunpack.i.l.bf16 %v2573
    %v2576 = vunpack.i.h.bf16 %v2573
    %v2577 = vmax.f32 %v2575, %v2576
    %v2578 = vrot.slane %v2577, 4
    %v2579 = vmax.f32 %v2577, %v2578
    %v2580 = vrot.slane %v2579, 2
    %v2581 = vmax.f32 %v2579, %v2580
    %v2582 = vrot.slane %v2581, 1
    %v2583 = vmax.f32 %v2581, %v2582
    %v2584 = vpack.i.bf16 %v2583, %v2583
    %v2586 = vsel %vm2518, %v2414, 4286644096
    %v2588 = vunpack.i.l.bf16 %v2586
    %v2589 = vunpack.i.h.bf16 %v2586
    %v2590 = vmax.f32 %v2588, %v2589
    %v2591 = vrot.slane %v2590, 4
    %v2592 = vmax.f32 %v2590, %v2591
    %v2593 = vrot.slane %v2592, 2
    %v2594 = vmax.f32 %v2592, %v2593
    %v2595 = vrot.slane %v2594, 1
    %v2596 = vmax.f32 %v2594, %v2595
    %v2597 = vpack.i.bf16 %v2596, %v2596
    %v2599 = vsel %vm2518, %v2413, 4286644096
    %v2601 = vunpack.i.l.bf16 %v2599
    %v2602 = vunpack.i.h.bf16 %v2599
    %v2603 = vmax.f32 %v2601, %v2602
    %v2604 = vrot.slane %v2603, 4
    %v2605 = vmax.f32 %v2603, %v2604
    %v2606 = vrot.slane %v2605, 2
    %v2607 = vmax.f32 %v2605, %v2606
    %v2608 = vrot.slane %v2607, 1
    %v2609 = vmax.f32 %v2607, %v2608
    %v2610 = vpack.i.bf16 %v2609, %v2609
    %v2612 = vsel %vm2518, %v2415, 4286644096
    %v2614 = vunpack.i.l.bf16 %v2612
    %v2615 = vunpack.i.h.bf16 %v2612
    %v2616 = vmax.f32 %v2614, %v2615
    %v2617 = vrot.slane %v2616, 4
    %v2618 = vmax.f32 %v2616, %v2617
    %v2619 = vrot.slane %v2618, 2
    %v2620 = vmax.f32 %v2618, %v2619
    %v2621 = vrot.slane %v2620, 1
    %v2622 = vmax.f32 %v2620, %v2621
    %v2623 = vpack.i.bf16 %v2622, %v2622
    %v2625 = vsel %vm2518, %v2423, 4286644096
    %v2627 = vunpack.i.l.bf16 %v2625
    %v2628 = vunpack.i.h.bf16 %v2625
    %v2629 = vmax.f32 %v2627, %v2628
    %v2630 = vrot.slane %v2629, 4
    %v2631 = vmax.f32 %v2629, %v2630
    %v2632 = vrot.slane %v2631, 2
    %v2633 = vmax.f32 %v2631, %v2632
    %v2634 = vrot.slane %v2633, 1
    %v2635 = vmax.f32 %v2633, %v2634
    %v2636 = vpack.i.bf16 %v2635, %v2635
    %v2638 = vsel %vm2518, %v2431, 4286644096
    %v2640 = vunpack.i.l.bf16 %v2638
    %v2641 = vunpack.i.h.bf16 %v2638
    %v2642 = vmax.f32 %v2640, %v2641
    %v2643 = vrot.slane %v2642, 4
    %v2644 = vmax.f32 %v2642, %v2643
    %v2645 = vrot.slane %v2644, 2
    %v2646 = vmax.f32 %v2644, %v2645
    %v2647 = vrot.slane %v2646, 1
    %v2648 = vmax.f32 %v2646, %v2647
    %v2649 = vpack.i.bf16 %v2648, %v2648
    %v2651 = vsel %vm2518, %v2430, 4286644096
    %v2653 = vunpack.i.l.bf16 %v2651
    %v2654 = vunpack.i.h.bf16 %v2651
    %v2655 = vmax.f32 %v2653, %v2654
    %v2656 = vrot.slane %v2655, 4
    %v2657 = vmax.f32 %v2655, %v2656
    %v2658 = vrot.slane %v2657, 2
    %v2659 = vmax.f32 %v2657, %v2658
    %v2660 = vrot.slane %v2659, 1
    %v2661 = vmax.f32 %v2659, %v2660
    %v2662 = vpack.i.bf16 %v2661, %v2661
    %v2664 = vsel %vm2518, %v2432, 4286644096
    %v2666 = vunpack.i.l.bf16 %v2664
    %v2667 = vunpack.i.h.bf16 %v2664
    %v2668 = vmax.f32 %v2666, %v2667
    %v2669 = vrot.slane %v2668, 4
    %v2670 = vmax.f32 %v2668, %v2669
    %v2671 = vrot.slane %v2670, 2
    %v2672 = vmax.f32 %v2670, %v2671
    %v2673 = vrot.slane %v2672, 1
    %v2674 = vmax.f32 %v2672, %v2673
    %v2675 = vpack.i.bf16 %v2674, %v2674
    %v2677 = vsel %vm2518, %v2440, 4286644096
    %v2679 = vunpack.i.l.bf16 %v2677
    %v2680 = vunpack.i.h.bf16 %v2677
    %v2681 = vmax.f32 %v2679, %v2680
    %v2682 = vrot.slane %v2681, 4
    %v2683 = vmax.f32 %v2681, %v2682
    %v2684 = vrot.slane %v2683, 2
    %v2685 = vmax.f32 %v2683, %v2684
    %v2686 = vrot.slane %v2685, 1
    %v2687 = vmax.f32 %v2685, %v2686
    %v2688 = vpack.i.bf16 %v2687, %v2687
    %v2690 = vsel %vm2518, %v2448, 4286644096
    %v2692 = vunpack.i.l.bf16 %v2690
    %v2693 = vunpack.i.h.bf16 %v2690
    %v2694 = vmax.f32 %v2692, %v2693
    %v2695 = vrot.slane %v2694, 4
    %v2696 = vmax.f32 %v2694, %v2695
    %v2697 = vrot.slane %v2696, 2
    %v2698 = vmax.f32 %v2696, %v2697
    %v2699 = vrot.slane %v2698, 1
    %v2700 = vmax.f32 %v2698, %v2699
    %v2701 = vpack.i.bf16 %v2700, %v2700
    %v2703 = vsel %vm2518, %v2447, 4286644096
    %v2705 = vunpack.i.l.bf16 %v2703
    %v2706 = vunpack.i.h.bf16 %v2703
    %v2707 = vmax.f32 %v2705, %v2706
    %v2708 = vrot.slane %v2707, 4
    %v2709 = vmax.f32 %v2707, %v2708
    %v2710 = vrot.slane %v2709, 2
    %v2711 = vmax.f32 %v2709, %v2710
    %v2712 = vrot.slane %v2711, 1
    %v2713 = vmax.f32 %v2711, %v2712
    %v2714 = vpack.i.bf16 %v2713, %v2713
    %v2716 = vsel %vm2518, %v2449, 4286644096
    %v2718 = vunpack.i.l.bf16 %v2716
    %v2719 = vunpack.i.h.bf16 %v2716
    %v2720 = vmax.f32 %v2718, %v2719
    %v2721 = vrot.slane %v2720, 4
    %v2722 = vmax.f32 %v2720, %v2721
    %v2723 = vrot.slane %v2722, 2
    %v2724 = vmax.f32 %v2722, %v2723
    %v2725 = vrot.slane %v2724, 1
    %v2726 = vmax.f32 %v2724, %v2725
    %v2727 = vpack.i.bf16 %v2726, %v2726
    %v2729 = vsel %vm2518, %v2457, 4286644096
    %v2731 = vunpack.i.l.bf16 %v2729
    %v2732 = vunpack.i.h.bf16 %v2729
    %v2733 = vmax.f32 %v2731, %v2732
    %v2734 = vrot.slane %v2733, 4
    %v2735 = vmax.f32 %v2733, %v2734
    %v2736 = vrot.slane %v2735, 2
    %v2737 = vmax.f32 %v2735, %v2736
    %v2738 = vrot.slane %v2737, 1
    %v2739 = vmax.f32 %v2737, %v2738
    %v2740 = vpack.i.bf16 %v2739, %v2739
    %v2742 = vsel %vm2518, %v2465, 4286644096
    %v2744 = vunpack.i.l.bf16 %v2742
    %v2745 = vunpack.i.h.bf16 %v2742
    %v2746 = vmax.f32 %v2744, %v2745
    %v2747 = vrot.slane %v2746, 4
    %v2748 = vmax.f32 %v2746, %v2747
    %v2749 = vrot.slane %v2748, 2
    %v2750 = vmax.f32 %v2748, %v2749
    %v2751 = vrot.slane %v2750, 1
    %v2752 = vmax.f32 %v2750, %v2751
    %v2753 = vpack.i.bf16 %v2752, %v2752
    %v2755 = vsel %vm2518, %v2464, 4286644096
    %v2757 = vunpack.i.l.bf16 %v2755
    %v2758 = vunpack.i.h.bf16 %v2755
    %v2759 = vmax.f32 %v2757, %v2758
    %v2760 = vrot.slane %v2759, 4
    %v2761 = vmax.f32 %v2759, %v2760
    %v2762 = vrot.slane %v2761, 2
    %v2763 = vmax.f32 %v2761, %v2762
    %v2764 = vrot.slane %v2763, 1
    %v2765 = vmax.f32 %v2763, %v2764
    %v2766 = vpack.i.bf16 %v2765, %v2765
    %v2768 = vsel %vm2518, %v2466, 4286644096
    %v2770 = vunpack.i.l.bf16 %v2768
    %v2771 = vunpack.i.h.bf16 %v2768
    %v2772 = vmax.f32 %v2770, %v2771
    %v2773 = vrot.slane %v2772, 4
    %v2774 = vmax.f32 %v2772, %v2773
    %v2775 = vrot.slane %v2774, 2
    %v2776 = vmax.f32 %v2774, %v2775
    %v2777 = vrot.slane %v2776, 1
    %v2778 = vmax.f32 %v2776, %v2777
    %v2779 = vpack.i.bf16 %v2778, %v2778
    %v2781 = vsel %vm2518, %v2474, 4286644096
    %v2783 = vunpack.i.l.bf16 %v2781
    %v2784 = vunpack.i.h.bf16 %v2781
    %v2785 = vmax.f32 %v2783, %v2784
    %v2786 = vrot.slane %v2785, 4
    %v2787 = vmax.f32 %v2785, %v2786
    %v2788 = vrot.slane %v2787, 2
    %v2789 = vmax.f32 %v2787, %v2788
    %v2790 = vrot.slane %v2789, 1
    %v2791 = vmax.f32 %v2789, %v2790
    %v2792 = vpack.i.bf16 %v2791, %v2791
    %v2794 = vsel %vm2518, %v2482, 4286644096
    %v2796 = vunpack.i.l.bf16 %v2794
    %v2797 = vunpack.i.h.bf16 %v2794
    %v2798 = vmax.f32 %v2796, %v2797
    %v2799 = vrot.slane %v2798, 4
    %v2800 = vmax.f32 %v2798, %v2799
    %v2801 = vrot.slane %v2800, 2
    %v2802 = vmax.f32 %v2800, %v2801
    %v2803 = vrot.slane %v2802, 1
    %v2804 = vmax.f32 %v2802, %v2803
    %v2805 = vpack.i.bf16 %v2804, %v2804
    %v2807 = vsel %vm2518, %v2481, 4286644096
    %v2809 = vunpack.i.l.bf16 %v2807
    %v2810 = vunpack.i.h.bf16 %v2807
    %v2811 = vmax.f32 %v2809, %v2810
    %v2812 = vrot.slane %v2811, 4
    %v2813 = vmax.f32 %v2811, %v2812
    %v2814 = vrot.slane %v2813, 2
    %v2815 = vmax.f32 %v2813, %v2814
    %v2816 = vrot.slane %v2815, 1
    %v2817 = vmax.f32 %v2815, %v2816
    %v2818 = vpack.i.bf16 %v2817, %v2817
    %v2820 = vsel %vm2518, %v2483, 4286644096
    %v2822 = vunpack.i.l.bf16 %v2820
    %v2823 = vunpack.i.h.bf16 %v2820
    %v2824 = vmax.f32 %v2822, %v2823
    %v2825 = vrot.slane %v2824, 4
    %v2826 = vmax.f32 %v2824, %v2825
    %v2827 = vrot.slane %v2826, 2
    %v2828 = vmax.f32 %v2826, %v2827
    %v2829 = vrot.slane %v2828, 1
    %v2830 = vmax.f32 %v2828, %v2829
    %v2831 = vpack.i.bf16 %v2830, %v2830
    %v2833 = vsel %vm2518, %v2491, 4286644096
    %v2835 = vunpack.i.l.bf16 %v2833
    %v2836 = vunpack.i.h.bf16 %v2833
    %v2837 = vmax.f32 %v2835, %v2836
    %v2838 = vrot.slane %v2837, 4
    %v2839 = vmax.f32 %v2837, %v2838
    %v2840 = vrot.slane %v2839, 2
    %v2841 = vmax.f32 %v2839, %v2840
    %v2842 = vrot.slane %v2841, 1
    %v2843 = vmax.f32 %v2841, %v2842
    %v2844 = vpack.i.bf16 %v2843, %v2843
    %v2846 = vsel %vm2518, %v2499, 4286644096
    %v2848 = vunpack.i.l.bf16 %v2846
    %v2849 = vunpack.i.h.bf16 %v2846
    %v2850 = vmax.f32 %v2848, %v2849
    %v2851 = vrot.slane %v2850, 4
    %v2852 = vmax.f32 %v2850, %v2851
    %v2853 = vrot.slane %v2852, 2
    %v2854 = vmax.f32 %v2852, %v2853
    %v2855 = vrot.slane %v2854, 1
    %v2856 = vmax.f32 %v2854, %v2855
    %v2857 = vpack.i.bf16 %v2856, %v2856
    %v2859 = vsel %vm2518, %v2498, 4286644096
    %v2861 = vunpack.i.l.bf16 %v2859
    %v2862 = vunpack.i.h.bf16 %v2859
    %v2863 = vmax.f32 %v2861, %v2862
    %v2864 = vrot.slane %v2863, 4
    %v2865 = vmax.f32 %v2863, %v2864
    %v2866 = vrot.slane %v2865, 2
    %v2867 = vmax.f32 %v2865, %v2866
    %v2868 = vrot.slane %v2867, 1
    %v2869 = vmax.f32 %v2867, %v2868
    %v2870 = vpack.i.bf16 %v2869, %v2869
    %v2872 = vsel %vm2518, %v2500, 4286644096
    %v2874 = vunpack.i.l.bf16 %v2872
    %v2875 = vunpack.i.h.bf16 %v2872
    %v2876 = vmax.f32 %v2874, %v2875
    %v2877 = vrot.slane %v2876, 4
    %v2878 = vmax.f32 %v2876, %v2877
    %v2879 = vrot.slane %v2878, 2
    %v2880 = vmax.f32 %v2878, %v2879
    %v2881 = vrot.slane %v2880, 1
    %v2882 = vmax.f32 %v2880, %v2881
    %v2883 = vpack.i.bf16 %v2882, %v2882
    %v2885 = vsel %vm2518, %v2508, 4286644096
    %v2887 = vunpack.i.l.bf16 %v2885
    %v2888 = vunpack.i.h.bf16 %v2885
    %v2889 = vmax.f32 %v2887, %v2888
    %v2890 = vrot.slane %v2889, 4
    %v2891 = vmax.f32 %v2889, %v2890
    %v2892 = vrot.slane %v2891, 2
    %v2893 = vmax.f32 %v2891, %v2892
    %v2894 = vrot.slane %v2893, 1
    %v2895 = vmax.f32 %v2893, %v2894
    %v2896 = vpack.i.bf16 %v2895, %v2895
    %v2898 = vsel %vm2518, %v2516, 4286644096
    %v2900 = vunpack.i.l.bf16 %v2898
    %v2901 = vunpack.i.h.bf16 %v2898
    %v2902 = vmax.f32 %v2900, %v2901
    %v2903 = vrot.slane %v2902, 4
    %v2904 = vmax.f32 %v2902, %v2903
    %v2905 = vrot.slane %v2904, 2
    %v2906 = vmax.f32 %v2904, %v2905
    %v2907 = vrot.slane %v2906, 1
    %v2908 = vmax.f32 %v2906, %v2907
    %v2909 = vpack.i.bf16 %v2908, %v2908
    %v2911 = vsel %vm2518, %v2515, 4286644096
    %v2913 = vunpack.i.l.bf16 %v2911
    %v2914 = vunpack.i.h.bf16 %v2911
    %v2915 = vmax.f32 %v2913, %v2914
    %v2916 = vrot.slane %v2915, 4
    %v2917 = vmax.f32 %v2915, %v2916
    %v2918 = vrot.slane %v2917, 2
    %v2919 = vmax.f32 %v2917, %v2918
    %v2920 = vrot.slane %v2919, 1
    %v2921 = vmax.f32 %v2919, %v2920
    %v2922 = vpack.i.bf16 %v2921, %v2921
    %v2924 = vsel %vm2518, %v2517, 4286644096
    %v2926 = vunpack.i.l.bf16 %v2924
    %v2927 = vunpack.i.h.bf16 %v2924
    %v2928 = vmax.f32 %v2926, %v2927
    %v2929 = vrot.slane %v2928, 4
    %v2930 = vmax.f32 %v2928, %v2929
    %v2931 = vrot.slane %v2930, 2
    %v2932 = vmax.f32 %v2930, %v2931
    %v2933 = vrot.slane %v2932, 1
    %v2934 = vmax.f32 %v2932, %v2933
    %v2935 = vpack.i.bf16 %v2934, %v2934
    %v2936 = vmax.bf16 %v2532, 0
    %v2937 = vmax.bf16 %v2545, 0
    %v2938 = vmax.bf16 %v2558, 0
    %v2939 = vmax.bf16 %v2571, 0
    %v2940 = vmax.bf16 %v2584, 0
    %v2941 = vmax.bf16 %v2597, 0
    %v2942 = vmax.bf16 %v2610, 0
    %v2943 = vmax.bf16 %v2623, 0
    %v2944 = vmax.bf16 %v2636, 0
    %v2945 = vmax.bf16 %v2649, 0
    %v2946 = vmax.bf16 %v2662, 0
    %v2947 = vmax.bf16 %v2675, 0
    %v2948 = vmax.bf16 %v2688, 0
    %v2949 = vmax.bf16 %v2701, 0
    %v2950 = vmax.bf16 %v2714, 0
    %v2951 = vmax.bf16 %v2727, 0
    %v2952 = vmax.bf16 %v2740, 0
    %v2953 = vmax.bf16 %v2753, 0
    %v2954 = vmax.bf16 %v2766, 0
    %v2955 = vmax.bf16 %v2779, 0
    %v2956 = vmax.bf16 %v2792, 0
    %v2957 = vmax.bf16 %v2805, 0
    %v2958 = vmax.bf16 %v2818, 0
    %v2959 = vmax.bf16 %v2831, 0
    %v2960 = vmax.bf16 %v2844, 0
    %v2961 = vmax.bf16 %v2857, 0
    %v2962 = vmax.bf16 %v2870, 0
    %v2963 = vmax.bf16 %v2883, 0
    %v2964 = vmax.bf16 %v2896, 0
    %v2965 = vmax.bf16 %v2909, 0
    %v2966 = vmax.bf16 %v2922, 0
    %v2967 = vmax.bf16 %v2935, 0
    %v2968 = vld [vmem:[%s4 + $0x380] sm:$0xf]
    %v2969 = vld [vmem:[%s4 + $0x384] sm:$0xf]
    %v2970 = vld [vmem:[%s4 + $0x388] sm:$0xf]
    %v2971 = vld [vmem:[%s4 + $0x38c] sm:$0xf]
    %v2972 = vld [vmem:[%s4 + $0x390] sm:$0xf]
    %v2973 = vld [vmem:[%s4 + $0x394] sm:$0xf]
    %v2974 = vld [vmem:[%s4 + $0x398] sm:$0xf]
    %v2975 = vld [vmem:[%s4 + $0x39c] sm:$0xf]
    %v2976 = vld [vmem:[%s4 + $0x3a0] sm:$0xf]
    %v2977 = vld [vmem:[%s4 + $0x3a4] sm:$0xf]
    %v2978 = vld [vmem:[%s4 + $0x3a8] sm:$0xf]
    %v2979 = vld [vmem:[%s4 + $0x3ac] sm:$0xf]
    %v2980 = vld [vmem:[%s4 + $0x3b0] sm:$0xf]
    %v2981 = vld [vmem:[%s4 + $0x3b4] sm:$0xf]
    %v2982 = vld [vmem:[%s4 + $0x3b8] sm:$0xf]
    %v2983 = vld [vmem:[%s4 + $0x3bc] sm:$0xf]
    %v2984 = vld [vmem:[%s4 + $0x3c0] sm:$0xf]
    %v2985 = vld [vmem:[%s4 + $0x3c4] sm:$0xf]
    %v2986 = vld [vmem:[%s4 + $0x3c8] sm:$0xf]
    %v2987 = vld [vmem:[%s4 + $0x3cc] sm:$0xf]
    %v2988 = vld [vmem:[%s4 + $0x3d0] sm:$0xf]
    %v2989 = vld [vmem:[%s4 + $0x3d4] sm:$0xf]
    %v2990 = vld [vmem:[%s4 + $0x3d8] sm:$0xf]
    %v2991 = vld [vmem:[%s4 + $0x3dc] sm:$0xf]
    %v2992 = vld [vmem:[%s4 + $0x3e0] sm:$0xf]
    %v2993 = vld [vmem:[%s4 + $0x3e4] sm:$0xf]
    %v2994 = vld [vmem:[%s4 + $0x3e8] sm:$0xf]
    %v2995 = vld [vmem:[%s4 + $0x3ec] sm:$0xf]
    %v2996 = vld [vmem:[%s4 + $0x3f0] sm:$0xf]
    %v2997 = vld [vmem:[%s4 + $0x3f4] sm:$0xf]
    %v2998 = vld [vmem:[%s4 + $0x3f8] sm:$0xf]
    %v2999 = vld [vmem:[%s4 + $0x3fc] sm:$0xf]
    %v3000 = vld [vmem:[%s4 + $0x400] sm:$0xf]
    %v3001 = vld [vmem:[%s4 + $0x404] sm:$0xf]
    %v3002 = vld [vmem:[%s4 + $0x408] sm:$0xf]
    %v3003 = vld [vmem:[%s4 + $0x40c] sm:$0xf]
    %v3004 = vld [vmem:[%s4 + $0x410] sm:$0xf]
    %v3005 = vld [vmem:[%s4 + $0x414] sm:$0xf]
    %v3006 = vld [vmem:[%s4 + $0x418] sm:$0xf]
    %v3007 = vld [vmem:[%s4 + $0x41c] sm:$0xf]
    %v3008 = vld [vmem:[%s4 + $0x420] sm:$0xf]
    %v3009 = vld [vmem:[%s4 + $0x424] sm:$0xf]
    %v3010 = vld [vmem:[%s4 + $0x428] sm:$0xf]
    %v3011 = vld [vmem:[%s4 + $0x42c] sm:$0xf]
    %v3012 = vld [vmem:[%s4 + $0x430] sm:$0xf]
    %v3013 = vld [vmem:[%s4 + $0x434] sm:$0xf]
    %v3014 = vld [vmem:[%s4 + $0x438] sm:$0xf]
    %v3015 = vld [vmem:[%s4 + $0x43c] sm:$0xf]
    %v3016 = vld [vmem:[%s4 + $0x440] sm:$0xf]
    %v3017 = vld [vmem:[%s4 + $0x444] sm:$0xf]
    %v3018 = vld [vmem:[%s4 + $0x448] sm:$0xf]
    %v3019 = vld [vmem:[%s4 + $0x44c] sm:$0xf]
    %v3020 = vld [vmem:[%s4 + $0x450] sm:$0xf]
    %v3021 = vld [vmem:[%s4 + $0x454] sm:$0xf]
    %v3022 = vld [vmem:[%s4 + $0x458] sm:$0xf]
    %v3023 = vld [vmem:[%s4 + $0x45c] sm:$0xf]
    %v3024 = vld [vmem:[%s4 + $0x460] sm:$0xf]
    %v3025 = vld [vmem:[%s4 + $0x464] sm:$0xf]
    %v3026 = vld [vmem:[%s4 + $0x468] sm:$0xf]
    %v3027 = vld [vmem:[%s4 + $0x46c] sm:$0xf]
    %v3028 = vld [vmem:[%s4 + $0x470] sm:$0xf]
    %v3029 = vld [vmem:[%s4 + $0x474] sm:$0xf]
    %v3030 = vld [vmem:[%s4 + $0x478] sm:$0xf]
    %v3031 = vld [vmem:[%s4 + $0x47c] sm:$0xf]
    %v3032 = vld [vmem:[%s4 + $0x480] sm:$0xf]
    %v3033 = vld [vmem:[%s4 + $0x484] sm:$0xf]
    %v3034 = vld [vmem:[%s4 + $0x488] sm:$0xf]
    %v3035 = vld [vmem:[%s4 + $0x48c] sm:$0xf]
    %v3036 = vld [vmem:[%s4 + $0x490] sm:$0xf]
    %v3037 = vld [vmem:[%s4 + $0x494] sm:$0xf]
    %v3038 = vld [vmem:[%s4 + $0x498] sm:$0xf]
    %v3039 = vld [vmem:[%s4 + $0x49c] sm:$0xf]
    %v3040 = vld [vmem:[%s4 + $0x4a0] sm:$0xf]
    %v3041 = vld [vmem:[%s4 + $0x4a4] sm:$0xf]
    %v3042 = vld [vmem:[%s4 + $0x4a8] sm:$0xf]
    %v3043 = vld [vmem:[%s4 + $0x4ac] sm:$0xf]
    %v3044 = vld [vmem:[%s4 + $0x4b0] sm:$0xf]
    %v3045 = vld [vmem:[%s4 + $0x4b4] sm:$0xf]
    %v3046 = vld [vmem:[%s4 + $0x4b8] sm:$0xf]
    %v3047 = vld [vmem:[%s4 + $0x4bc] sm:$0xf]
    %v3048 = vld [vmem:[%s4 + $0x4c0] sm:$0xf]
    %v3049 = vld [vmem:[%s4 + $0x4c4] sm:$0xf]
    %v3050 = vld [vmem:[%s4 + $0x4c8] sm:$0xf]
    %v3051 = vld [vmem:[%s4 + $0x4cc] sm:$0xf]
    %v3052 = vld [vmem:[%s4 + $0x4d0] sm:$0xf]
    %v3053 = vld [vmem:[%s4 + $0x4d4] sm:$0xf]
    %v3054 = vld [vmem:[%s4 + $0x4d8] sm:$0xf]
    %v3055 = vld [vmem:[%s4 + $0x4dc] sm:$0xf]
    %v3056 = vld [vmem:[%s4 + $0x4e0] sm:$0xf]
    %v3057 = vld [vmem:[%s4 + $0x4e4] sm:$0xf]
    %v3058 = vld [vmem:[%s4 + $0x4e8] sm:$0xf]
    %v3059 = vld [vmem:[%s4 + $0x4ec] sm:$0xf]
    %v3060 = vld [vmem:[%s4 + $0x4f0] sm:$0xf]
    %v3061 = vld [vmem:[%s4 + $0x4f4] sm:$0xf]
    %v3062 = vld [vmem:[%s4 + $0x4f8] sm:$0xf]
    %v3063 = vld [vmem:[%s4 + $0x4fc] sm:$0xf]
    %v3064 = vld [vmem:[%s4 + $0x500] sm:$0xf]
    %v3065 = vld [vmem:[%s4 + $0x504] sm:$0xf]
    %v3066 = vld [vmem:[%s4 + $0x508] sm:$0xf]
    %v3067 = vld [vmem:[%s4 + $0x50c] sm:$0xf]
    %v3068 = vld [vmem:[%s4 + $0x510] sm:$0xf]
    %v3069 = vld [vmem:[%s4 + $0x514] sm:$0xf]
    %v3070 = vld [vmem:[%s4 + $0x518] sm:$0xf]
    %v3071 = vld [vmem:[%s4 + $0x51c] sm:$0xf]
    %v3072 = vld [vmem:[%s4 + $0x520] sm:$0xf]
    %v3073 = vld [vmem:[%s4 + $0x524] sm:$0xf]
    %v3074 = vld [vmem:[%s4 + $0x528] sm:$0xf]
    %v3075 = vld [vmem:[%s4 + $0x52c] sm:$0xf]
    %v3076 = vld [vmem:[%s4 + $0x530] sm:$0xf]
    %v3077 = vld [vmem:[%s4 + $0x534] sm:$0xf]
    %v3078 = vld [vmem:[%s4 + $0x538] sm:$0xf]
    %v3079 = vld [vmem:[%s4 + $0x53c] sm:$0xf]
    %v3080 = vld [vmem:[%s4 + $0x540] sm:$0xf]
    %v3081 = vld [vmem:[%s4 + $0x544] sm:$0xf]
    %v3082 = vld [vmem:[%s4 + $0x548] sm:$0xf]
    %v3083 = vld [vmem:[%s4 + $0x54c] sm:$0xf]
    %v3084 = vld [vmem:[%s4 + $0x550] sm:$0xf]
    %v3085 = vld [vmem:[%s4 + $0x554] sm:$0xf]
    %v3086 = vld [vmem:[%s4 + $0x558] sm:$0xf]
    %v3087 = vld [vmem:[%s4 + $0x55c] sm:$0xf]
    %v3088 = vld [vmem:[%s4 + $0x560] sm:$0xf]
    %v3089 = vld [vmem:[%s4 + $0x564] sm:$0xf]
    %v3090 = vld [vmem:[%s4 + $0x568] sm:$0xf]
    %v3091 = vld [vmem:[%s4 + $0x56c] sm:$0xf]
    %v3092 = vld [vmem:[%s4 + $0x570] sm:$0xf]
    %v3093 = vld [vmem:[%s4 + $0x574] sm:$0xf]
    %v3094 = vld [vmem:[%s4 + $0x578] sm:$0xf]
    %v3095 = vld [vmem:[%s4 + $0x57c] sm:$0xf]
    %v3096 = vld [vmem:[%s4 + $0x580] sm:$0xf]
    %v3097 = vld [vmem:[%s4 + $0x584] sm:$0xf]
    %v3098 = vld [vmem:[%s4 + $0x588] sm:$0xf]
    %v3099 = vld [vmem:[%s4 + $0x58c] sm:$0xf]
    %v3100 = vld [vmem:[%s4 + $0x590] sm:$0xf]
    %v3101 = vld [vmem:[%s4 + $0x594] sm:$0xf]
    %v3102 = vld [vmem:[%s4 + $0x598] sm:$0xf]
    %v3103 = vld [vmem:[%s4 + $0x59c] sm:$0xf]
    %v3104 = vld [vmem:[%s4 + $0x5a0] sm:$0xf]
    %v3105 = vld [vmem:[%s4 + $0x5a4] sm:$0xf]
    %v3106 = vld [vmem:[%s4 + $0x5a8] sm:$0xf]
    %v3107 = vld [vmem:[%s4 + $0x5ac] sm:$0xf]
    %v3108 = vld [vmem:[%s4 + $0x5b0] sm:$0xf]
    %v3109 = vld [vmem:[%s4 + $0x5b4] sm:$0xf]
    %v3110 = vld [vmem:[%s4 + $0x5b8] sm:$0xf]
    %v3111 = vld [vmem:[%s4 + $0x5bc] sm:$0xf]
    %v3112 = vld [vmem:[%s4 + $0x5c0] sm:$0xf]
    %v3113 = vld [vmem:[%s4 + $0x5c4] sm:$0xf]
    %v3114 = vld [vmem:[%s4 + $0x5c8] sm:$0xf]
    %v3115 = vld [vmem:[%s4 + $0x5cc] sm:$0xf]
    %v3116 = vld [vmem:[%s4 + $0x5d0] sm:$0xf]
    %v3117 = vld [vmem:[%s4 + $0x5d4] sm:$0xf]
    %v3118 = vld [vmem:[%s4 + $0x5d8] sm:$0xf]
    %v3119 = vld [vmem:[%s4 + $0x5dc] sm:$0xf]
    %v3120 = vld [vmem:[%s4 + $0x5e0] sm:$0xf]
    %v3121 = vld [vmem:[%s4 + $0x5e4] sm:$0xf]
    %v3122 = vld [vmem:[%s4 + $0x5e8] sm:$0xf]
    %v3123 = vld [vmem:[%s4 + $0x5ec] sm:$0xf]
    %v3124 = vld [vmem:[%s4 + $0x5f0] sm:$0xf]
    %v3125 = vld [vmem:[%s4 + $0x5f4] sm:$0xf]
    %v3126 = vld [vmem:[%s4 + $0x5f8] sm:$0xf]
    %v3127 = vld [vmem:[%s4 + $0x5fc] sm:$0xf]
    %v3128 = vld [vmem:[%s4 + $0x600] sm:$0xf]
    %v3129 = vld [vmem:[%s4 + $0x604] sm:$0xf]
    %v3130 = vld [vmem:[%s4 + $0x608] sm:$0xf]
    %v3131 = vld [vmem:[%s4 + $0x60c] sm:$0xf]
    %v3132 = vld [vmem:[%s4 + $0x610] sm:$0xf]
    %v3133 = vld [vmem:[%s4 + $0x614] sm:$0xf]
    %v3134 = vld [vmem:[%s4 + $0x618] sm:$0xf]
    %v3135 = vld [vmem:[%s4 + $0x61c] sm:$0xf]
    %v3136 = vld [vmem:[%s4 + $0x620] sm:$0xf]
    %v3137 = vld [vmem:[%s4 + $0x624] sm:$0xf]
    %v3138 = vld [vmem:[%s4 + $0x628] sm:$0xf]
    %v3139 = vld [vmem:[%s4 + $0x62c] sm:$0xf]
    %v3140 = vld [vmem:[%s4 + $0x630] sm:$0xf]
    %v3141 = vld [vmem:[%s4 + $0x634] sm:$0xf]
    %v3142 = vld [vmem:[%s4 + $0x638] sm:$0xf]
    %v3143 = vld [vmem:[%s4 + $0x63c] sm:$0xf]
    %v3144 = vld [vmem:[%s4 + $0x640] sm:$0xf]
    %v3145 = vld [vmem:[%s4 + $0x644] sm:$0xf]
    %v3146 = vld [vmem:[%s4 + $0x648] sm:$0xf]
    %v3147 = vld [vmem:[%s4 + $0x64c] sm:$0xf]
    %v3148 = vld [vmem:[%s4 + $0x650] sm:$0xf]
    %v3149 = vld [vmem:[%s4 + $0x654] sm:$0xf]
    %v3150 = vld [vmem:[%s4 + $0x658] sm:$0xf]
    %v3151 = vld [vmem:[%s4 + $0x65c] sm:$0xf]
    %v3152 = vld [vmem:[%s4 + $0x660] sm:$0xf]
    %v3153 = vld [vmem:[%s4 + $0x664] sm:$0xf]
    %v3154 = vld [vmem:[%s4 + $0x668] sm:$0xf]
    %v3155 = vld [vmem:[%s4 + $0x66c] sm:$0xf]
    %v3156 = vld [vmem:[%s4 + $0x670] sm:$0xf]
    %v3157 = vld [vmem:[%s4 + $0x674] sm:$0xf]
    %v3158 = vld [vmem:[%s4 + $0x678] sm:$0xf]
    %v3159 = vld [vmem:[%s4 + $0x67c] sm:$0xf]
    %v3160 = vld [vmem:[%s4 + $0x680] sm:$0xf]
    %v3161 = vld [vmem:[%s4 + $0x684] sm:$0xf]
    %v3162 = vld [vmem:[%s4 + $0x688] sm:$0xf]
    %v3163 = vld [vmem:[%s4 + $0x68c] sm:$0xf]
    %v3164 = vld [vmem:[%s4 + $0x690] sm:$0xf]
    %v3165 = vld [vmem:[%s4 + $0x694] sm:$0xf]
    %v3166 = vld [vmem:[%s4 + $0x698] sm:$0xf]
    %v3167 = vld [vmem:[%s4 + $0x69c] sm:$0xf]
    %v3168 = vld [vmem:[%s4 + $0x6a0] sm:$0xf]
    %v3169 = vld [vmem:[%s4 + $0x6a4] sm:$0xf]
    %v3170 = vld [vmem:[%s4 + $0x6a8] sm:$0xf]
    %v3171 = vld [vmem:[%s4 + $0x6ac] sm:$0xf]
    %v3172 = vld [vmem:[%s4 + $0x6b0] sm:$0xf]
    %v3173 = vld [vmem:[%s4 + $0x6b4] sm:$0xf]
    %v3174 = vld [vmem:[%s4 + $0x6b8] sm:$0xf]
    %v3175 = vld [vmem:[%s4 + $0x6bc] sm:$0xf]
    %v3176 = vld [vmem:[%s4 + $0x6c0] sm:$0xf]
    %v3177 = vld [vmem:[%s4 + $0x6c4] sm:$0xf]
    %v3178 = vld [vmem:[%s4 + $0x6c8] sm:$0xf]
    %v3179 = vld [vmem:[%s4 + $0x6cc] sm:$0xf]
    %v3180 = vld [vmem:[%s4 + $0x6d0] sm:$0xf]
    %v3181 = vld [vmem:[%s4 + $0x6d4] sm:$0xf]
    %v3182 = vld [vmem:[%s4 + $0x6d8] sm:$0xf]
    %v3183 = vld [vmem:[%s4 + $0x6dc] sm:$0xf]
    %v3184 = vld [vmem:[%s4 + $0x6e0] sm:$0xf]
    %v3185 = vld [vmem:[%s4 + $0x6e4] sm:$0xf]
    %v3186 = vld [vmem:[%s4 + $0x6e8] sm:$0xf]
    %v3187 = vld [vmem:[%s4 + $0x6ec] sm:$0xf]
    %v3188 = vld [vmem:[%s4 + $0x6f0] sm:$0xf]
    %v3189 = vld [vmem:[%s4 + $0x6f4] sm:$0xf]
    %v3190 = vld [vmem:[%s4 + $0x6f8] sm:$0xf]
    %v3191 = vld [vmem:[%s4 + $0x6fc] sm:$0xf]
    %v3192 = vld [vmem:[%s4 + $0x700] sm:$0xf]
    %v3193 = vld [vmem:[%s4 + $0x704] sm:$0xf]
    %v3194 = vld [vmem:[%s4 + $0x708] sm:$0xf]
    %v3195 = vld [vmem:[%s4 + $0x70c] sm:$0xf]
    %v3196 = vld [vmem:[%s4 + $0x710] sm:$0xf]
    %v3197 = vld [vmem:[%s4 + $0x714] sm:$0xf]
    %v3198 = vld [vmem:[%s4 + $0x718] sm:$0xf]
    %v3199 = vld [vmem:[%s4 + $0x71c] sm:$0xf]
    %v3200 = vld [vmem:[%s4 + $0x720] sm:$0xf]
    %v3201 = vld [vmem:[%s4 + $0x724] sm:$0xf]
    %v3202 = vld [vmem:[%s4 + $0x728] sm:$0xf]
    %v3203 = vld [vmem:[%s4 + $0x72c] sm:$0xf]
    %v3204 = vld [vmem:[%s4 + $0x730] sm:$0xf]
    %v3205 = vld [vmem:[%s4 + $0x734] sm:$0xf]
    %v3206 = vld [vmem:[%s4 + $0x738] sm:$0xf]
    %v3207 = vld [vmem:[%s4 + $0x73c] sm:$0xf]
    %v3208 = vld [vmem:[%s4 + $0x740] sm:$0xf]
    %v3209 = vld [vmem:[%s4 + $0x744] sm:$0xf]
    %v3210 = vld [vmem:[%s4 + $0x748] sm:$0xf]
    %v3211 = vld [vmem:[%s4 + $0x74c] sm:$0xf]
    %v3212 = vld [vmem:[%s4 + $0x750] sm:$0xf]
    %v3213 = vld [vmem:[%s4 + $0x754] sm:$0xf]
    %v3214 = vld [vmem:[%s4 + $0x758] sm:$0xf]
    %v3215 = vld [vmem:[%s4 + $0x75c] sm:$0xf]
    %v3216 = vld [vmem:[%s4 + $0x760] sm:$0xf]
    %v3217 = vld [vmem:[%s4 + $0x764] sm:$0xf]
    %v3218 = vld [vmem:[%s4 + $0x768] sm:$0xf]
    %v3219 = vld [vmem:[%s4 + $0x76c] sm:$0xf]
    %v3220 = vld [vmem:[%s4 + $0x770] sm:$0xf]
    %v3221 = vld [vmem:[%s4 + $0x774] sm:$0xf]
    %v3222 = vld [vmem:[%s4 + $0x778] sm:$0xf]
    %v3223 = vld [vmem:[%s4 + $0x77c] sm:$0xf]
    %v3256 = vunpack.c.l.b16 %v2936
    %v3257 = vunpack.c.l.b16 %v2937
    %v3258 = vunpack.c.l.b16 %v2938
    %v3259 = vunpack.c.l.b16 %v2939
    %v3260 = vunpack.c.l.b16 %v2940
    %v3261 = vunpack.c.l.b16 %v2941
    %v3262 = vunpack.c.l.b16 %v2942
    %v3263 = vunpack.c.l.b16 %v2943
    %v3264 = vunpack.c.l.b16 %v2944
    %v3265 = vunpack.c.l.b16 %v2945
    %v3266 = vunpack.c.l.b16 %v2946
    %v3267 = vunpack.c.l.b16 %v2947
    %v3268 = vunpack.c.l.b16 %v2948
    %v3269 = vunpack.c.l.b16 %v2949
    %v3270 = vunpack.c.l.b16 %v2950
    %v3271 = vunpack.c.l.b16 %v2951
    %v3272 = vunpack.c.l.b16 %v2952
    %v3273 = vunpack.c.l.b16 %v2953
    %v3274 = vunpack.c.l.b16 %v2954
    %v3275 = vunpack.c.l.b16 %v2955
    %v3276 = vunpack.c.l.b16 %v2956
    %v3277 = vunpack.c.l.b16 %v2957
    %v3278 = vunpack.c.l.b16 %v2958
    %v3279 = vunpack.c.l.b16 %v2959
    %v3280 = vunpack.c.l.b16 %v2960
    %v3281 = vunpack.c.l.b16 %v2961
    %v3282 = vunpack.c.l.b16 %v2962
    %v3283 = vunpack.c.l.b16 %v2963
    %v3284 = vunpack.c.l.b16 %v2964
    %v3285 = vunpack.c.l.b16 %v2965
    %v3286 = vunpack.c.l.b16 %v2966
    %v3287 = vunpack.c.l.b16 %v2967
    %v3288 = vsel %vm930, %v3272, %v3256
    %v3289 = vsel %vm930, %v3273, %v3257
    %v3290 = vsel %vm930, %v3274, %v3258
    %v3291 = vsel %vm930, %v3275, %v3259
    %v3292 = vsel %vm930, %v3276, %v3260
    %v3293 = vsel %vm930, %v3277, %v3261
    %v3294 = vsel %vm930, %v3278, %v3262
    %v3295 = vsel %vm930, %v3279, %v3263
    %v3296 = vsel %vm930, %v3280, %v3264
    %v3297 = vsel %vm930, %v3281, %v3265
    %v3298 = vsel %vm930, %v3282, %v3266
    %v3299 = vsel %vm930, %v3283, %v3267
    %v3300 = vsel %vm930, %v3284, %v3268
    %v3301 = vsel %vm930, %v3285, %v3269
    %v3302 = vsel %vm930, %v3286, %v3270
    %v3303 = vsel %vm930, %v3287, %v3271
    %v3304 = vpack.c.b16 %v3288, %v3288
    %v3305 = vpack.c.b16 %v3289, %v3289
    %v3306 = vpack.c.b16 %v3290, %v3290
    %v3307 = vpack.c.b16 %v3291, %v3291
    %v3308 = vpack.c.b16 %v3292, %v3292
    %v3309 = vpack.c.b16 %v3293, %v3293
    %v3310 = vpack.c.b16 %v3294, %v3294
    %v3311 = vpack.c.b16 %v3295, %v3295
    %v3312 = vpack.c.b16 %v3296, %v3296
    %v3313 = vpack.c.b16 %v3297, %v3297
    %v3314 = vpack.c.b16 %v3298, %v3298
    %v3315 = vpack.c.b16 %v3299, %v3299
    %v3316 = vpack.c.b16 %v3300, %v3300
    %v3317 = vpack.c.b16 %v3301, %v3301
    %v3318 = vpack.c.b16 %v3302, %v3302
    %v3319 = vpack.c.b16 %v3303, %v3303
    %v3592 = vunpack.c.l.b16 %v2968
    %v3593 = vunpack.c.l.b16 %v2969
    %v3594 = vunpack.c.l.b16 %v2970
    %v3595 = vunpack.c.l.b16 %v2971
    %v3596 = vunpack.c.l.b16 %v2972
    %v3597 = vunpack.c.l.b16 %v2973
    %v3598 = vunpack.c.l.b16 %v2974
    %v3599 = vunpack.c.l.b16 %v2975
    %v3600 = vunpack.c.l.b16 %v2976
    %v3601 = vunpack.c.l.b16 %v2977
    %v3602 = vunpack.c.l.b16 %v2978
    %v3603 = vunpack.c.l.b16 %v2979
    %v3604 = vunpack.c.l.b16 %v2980
    %v3605 = vunpack.c.l.b16 %v2981
    %v3606 = vunpack.c.l.b16 %v2982
    %v3607 = vunpack.c.l.b16 %v2983
    %v3608 = vunpack.c.l.b16 %v2984
    %v3609 = vunpack.c.l.b16 %v2985
    %v3610 = vunpack.c.l.b16 %v2986
    %v3611 = vunpack.c.l.b16 %v2987
    %v3612 = vunpack.c.l.b16 %v2988
    %v3613 = vunpack.c.l.b16 %v2989
    %v3614 = vunpack.c.l.b16 %v2990
    %v3615 = vunpack.c.l.b16 %v2991
    %v3616 = vunpack.c.l.b16 %v2992
    %v3617 = vunpack.c.l.b16 %v2993
    %v3618 = vunpack.c.l.b16 %v2994
    %v3619 = vunpack.c.l.b16 %v2995
    %v3620 = vunpack.c.l.b16 %v2996
    %v3621 = vunpack.c.l.b16 %v2997
    %v3622 = vunpack.c.l.b16 %v2998
    %v3623 = vunpack.c.l.b16 %v2999
    %v3624 = vunpack.c.l.b16 %v3000
    %v3625 = vunpack.c.l.b16 %v3001
    %v3626 = vunpack.c.l.b16 %v3002
    %v3627 = vunpack.c.l.b16 %v3003
    %v3628 = vunpack.c.l.b16 %v3004
    %v3629 = vunpack.c.l.b16 %v3005
    %v3630 = vunpack.c.l.b16 %v3006
    %v3631 = vunpack.c.l.b16 %v3007
    %v3632 = vunpack.c.l.b16 %v3008
    %v3633 = vunpack.c.l.b16 %v3009
    %v3634 = vunpack.c.l.b16 %v3010
    %v3635 = vunpack.c.l.b16 %v3011
    %v3636 = vunpack.c.l.b16 %v3012
    %v3637 = vunpack.c.l.b16 %v3013
    %v3638 = vunpack.c.l.b16 %v3014
    %v3639 = vunpack.c.l.b16 %v3015
    %v3640 = vunpack.c.l.b16 %v3016
    %v3641 = vunpack.c.l.b16 %v3017
    %v3642 = vunpack.c.l.b16 %v3018
    %v3643 = vunpack.c.l.b16 %v3019
    %v3644 = vunpack.c.l.b16 %v3020
    %v3645 = vunpack.c.l.b16 %v3021
    %v3646 = vunpack.c.l.b16 %v3022
    %v3647 = vunpack.c.l.b16 %v3023
    %v3648 = vunpack.c.l.b16 %v3024
    %v3649 = vunpack.c.l.b16 %v3025
    %v3650 = vunpack.c.l.b16 %v3026
    %v3651 = vunpack.c.l.b16 %v3027
    %v3652 = vunpack.c.l.b16 %v3028
    %v3653 = vunpack.c.l.b16 %v3029
    %v3654 = vunpack.c.l.b16 %v3030
    %v3655 = vunpack.c.l.b16 %v3031
    %v3656 = vunpack.c.l.b16 %v3032
    %v3657 = vunpack.c.l.b16 %v3033
    %v3658 = vunpack.c.l.b16 %v3034
    %v3659 = vunpack.c.l.b16 %v3035
    %v3660 = vunpack.c.l.b16 %v3036
    %v3661 = vunpack.c.l.b16 %v3037
    %v3662 = vunpack.c.l.b16 %v3038
    %v3663 = vunpack.c.l.b16 %v3039
    %v3664 = vunpack.c.l.b16 %v3040
    %v3665 = vunpack.c.l.b16 %v3041
    %v3666 = vunpack.c.l.b16 %v3042
    %v3667 = vunpack.c.l.b16 %v3043
    %v3668 = vunpack.c.l.b16 %v3044
    %v3669 = vunpack.c.l.b16 %v3045
    %v3670 = vunpack.c.l.b16 %v3046
    %v3671 = vunpack.c.l.b16 %v3047
    %v3672 = vunpack.c.l.b16 %v3048
    %v3673 = vunpack.c.l.b16 %v3049
    %v3674 = vunpack.c.l.b16 %v3050
    %v3675 = vunpack.c.l.b16 %v3051
    %v3676 = vunpack.c.l.b16 %v3052
    %v3677 = vunpack.c.l.b16 %v3053
    %v3678 = vunpack.c.l.b16 %v3054
    %v3679 = vunpack.c.l.b16 %v3055
    %v3680 = vunpack.c.l.b16 %v3056
    %v3681 = vunpack.c.l.b16 %v3057
    %v3682 = vunpack.c.l.b16 %v3058
    %v3683 = vunpack.c.l.b16 %v3059
    %v3684 = vunpack.c.l.b16 %v3060
    %v3685 = vunpack.c.l.b16 %v3061
    %v3686 = vunpack.c.l.b16 %v3062
    %v3687 = vunpack.c.l.b16 %v3063
    %v3688 = vunpack.c.l.b16 %v3064
    %v3689 = vunpack.c.l.b16 %v3065
    %v3690 = vunpack.c.l.b16 %v3066
    %v3691 = vunpack.c.l.b16 %v3067
    %v3692 = vunpack.c.l.b16 %v3068
    %v3693 = vunpack.c.l.b16 %v3069
    %v3694 = vunpack.c.l.b16 %v3070
    %v3695 = vunpack.c.l.b16 %v3071
    %v3696 = vunpack.c.l.b16 %v3072
    %v3697 = vunpack.c.l.b16 %v3073
    %v3698 = vunpack.c.l.b16 %v3074
    %v3699 = vunpack.c.l.b16 %v3075
    %v3700 = vunpack.c.l.b16 %v3076
    %v3701 = vunpack.c.l.b16 %v3077
    %v3702 = vunpack.c.l.b16 %v3078
    %v3703 = vunpack.c.l.b16 %v3079
    %v3704 = vunpack.c.l.b16 %v3080
    %v3705 = vunpack.c.l.b16 %v3081
    %v3706 = vunpack.c.l.b16 %v3082
    %v3707 = vunpack.c.l.b16 %v3083
    %v3708 = vunpack.c.l.b16 %v3084
    %v3709 = vunpack.c.l.b16 %v3085
    %v3710 = vunpack.c.l.b16 %v3086
    %v3711 = vunpack.c.l.b16 %v3087
    %v3712 = vunpack.c.l.b16 %v3088
    %v3713 = vunpack.c.l.b16 %v3089
    %v3714 = vunpack.c.l.b16 %v3090
    %v3715 = vunpack.c.l.b16 %v3091
    %v3716 = vunpack.c.l.b16 %v3092
    %v3717 = vunpack.c.l.b16 %v3093
    %v3718 = vunpack.c.l.b16 %v3094
    %v3719 = vunpack.c.l.b16 %v3095
    %v3720 = vunpack.c.l.b16 %v3096
    %v3721 = vunpack.c.l.b16 %v3097
    %v3722 = vunpack.c.l.b16 %v3098
    %v3723 = vunpack.c.l.b16 %v3099
    %v3724 = vunpack.c.l.b16 %v3100
    %v3725 = vunpack.c.l.b16 %v3101
    %v3726 = vunpack.c.l.b16 %v3102
    %v3727 = vunpack.c.l.b16 %v3103
    %v3728 = vunpack.c.l.b16 %v3104
    %v3729 = vunpack.c.l.b16 %v3105
    %v3730 = vunpack.c.l.b16 %v3106
    %v3731 = vunpack.c.l.b16 %v3107
    %v3732 = vunpack.c.l.b16 %v3108
    %v3733 = vunpack.c.l.b16 %v3109
    %v3734 = vunpack.c.l.b16 %v3110
    %v3735 = vunpack.c.l.b16 %v3111
    %v3736 = vunpack.c.l.b16 %v3112
    %v3737 = vunpack.c.l.b16 %v3113
    %v3738 = vunpack.c.l.b16 %v3114
    %v3739 = vunpack.c.l.b16 %v3115
    %v3740 = vunpack.c.l.b16 %v3116
    %v3741 = vunpack.c.l.b16 %v3117
    %v3742 = vunpack.c.l.b16 %v3118
    %v3743 = vunpack.c.l.b16 %v3119
    %v3744 = vunpack.c.l.b16 %v3120
    %v3745 = vunpack.c.l.b16 %v3121
    %v3746 = vunpack.c.l.b16 %v3122
    %v3747 = vunpack.c.l.b16 %v3123
    %v3748 = vunpack.c.l.b16 %v3124
    %v3749 = vunpack.c.l.b16 %v3125
    %v3750 = vunpack.c.l.b16 %v3126
    %v3751 = vunpack.c.l.b16 %v3127
    %v3752 = vunpack.c.l.b16 %v3128
    %v3753 = vunpack.c.l.b16 %v3129
    %v3754 = vunpack.c.l.b16 %v3130
    %v3755 = vunpack.c.l.b16 %v3131
    %v3756 = vunpack.c.l.b16 %v3132
    %v3757 = vunpack.c.l.b16 %v3133
    %v3758 = vunpack.c.l.b16 %v3134
    %v3759 = vunpack.c.l.b16 %v3135
    %v3760 = vunpack.c.l.b16 %v3136
    %v3761 = vunpack.c.l.b16 %v3137
    %v3762 = vunpack.c.l.b16 %v3138
    %v3763 = vunpack.c.l.b16 %v3139
    %v3764 = vunpack.c.l.b16 %v3140
    %v3765 = vunpack.c.l.b16 %v3141
    %v3766 = vunpack.c.l.b16 %v3142
    %v3767 = vunpack.c.l.b16 %v3143
    %v3768 = vunpack.c.l.b16 %v3144
    %v3769 = vunpack.c.l.b16 %v3145
    %v3770 = vunpack.c.l.b16 %v3146
    %v3771 = vunpack.c.l.b16 %v3147
    %v3772 = vunpack.c.l.b16 %v3148
    %v3773 = vunpack.c.l.b16 %v3149
    %v3774 = vunpack.c.l.b16 %v3150
    %v3775 = vunpack.c.l.b16 %v3151
    %v3776 = vunpack.c.l.b16 %v3152
    %v3777 = vunpack.c.l.b16 %v3153
    %v3778 = vunpack.c.l.b16 %v3154
    %v3779 = vunpack.c.l.b16 %v3155
    %v3780 = vunpack.c.l.b16 %v3156
    %v3781 = vunpack.c.l.b16 %v3157
    %v3782 = vunpack.c.l.b16 %v3158
    %v3783 = vunpack.c.l.b16 %v3159
    %v3784 = vunpack.c.l.b16 %v3160
    %v3785 = vunpack.c.l.b16 %v3161
    %v3786 = vunpack.c.l.b16 %v3162
    %v3787 = vunpack.c.l.b16 %v3163
    %v3788 = vunpack.c.l.b16 %v3164
    %v3789 = vunpack.c.l.b16 %v3165
    %v3790 = vunpack.c.l.b16 %v3166
    %v3791 = vunpack.c.l.b16 %v3167
    %v3792 = vunpack.c.l.b16 %v3168
    %v3793 = vunpack.c.l.b16 %v3169
    %v3794 = vunpack.c.l.b16 %v3170
    %v3795 = vunpack.c.l.b16 %v3171
    %v3796 = vunpack.c.l.b16 %v3172
    %v3797 = vunpack.c.l.b16 %v3173
    %v3798 = vunpack.c.l.b16 %v3174
    %v3799 = vunpack.c.l.b16 %v3175
    %v3800 = vunpack.c.l.b16 %v3176
    %v3801 = vunpack.c.l.b16 %v3177
    %v3802 = vunpack.c.l.b16 %v3178
    %v3803 = vunpack.c.l.b16 %v3179
    %v3804 = vunpack.c.l.b16 %v3180
    %v3805 = vunpack.c.l.b16 %v3181
    %v3806 = vunpack.c.l.b16 %v3182
    %v3807 = vunpack.c.l.b16 %v3183
    %v3808 = vunpack.c.l.b16 %v3184
    %v3809 = vunpack.c.l.b16 %v3185
    %v3810 = vunpack.c.l.b16 %v3186
    %v3811 = vunpack.c.l.b16 %v3187
    %v3812 = vunpack.c.l.b16 %v3188
    %v3813 = vunpack.c.l.b16 %v3189
    %v3814 = vunpack.c.l.b16 %v3190
    %v3815 = vunpack.c.l.b16 %v3191
    %v3816 = vunpack.c.l.b16 %v3192
    %v3817 = vunpack.c.l.b16 %v3193
    %v3818 = vunpack.c.l.b16 %v3194
    %v3819 = vunpack.c.l.b16 %v3195
    %v3820 = vunpack.c.l.b16 %v3196
    %v3821 = vunpack.c.l.b16 %v3197
    %v3822 = vunpack.c.l.b16 %v3198
    %v3823 = vunpack.c.l.b16 %v3199
    %v3824 = vunpack.c.l.b16 %v3200
    %v3825 = vunpack.c.l.b16 %v3201
    %v3826 = vunpack.c.l.b16 %v3202
    %v3827 = vunpack.c.l.b16 %v3203
    %v3828 = vunpack.c.l.b16 %v3204
    %v3829 = vunpack.c.l.b16 %v3205
    %v3830 = vunpack.c.l.b16 %v3206
    %v3831 = vunpack.c.l.b16 %v3207
    %v3832 = vunpack.c.l.b16 %v3208
    %v3833 = vunpack.c.l.b16 %v3209
    %v3834 = vunpack.c.l.b16 %v3210
    %v3835 = vunpack.c.l.b16 %v3211
    %v3836 = vunpack.c.l.b16 %v3212
    %v3837 = vunpack.c.l.b16 %v3213
    %v3838 = vunpack.c.l.b16 %v3214
    %v3839 = vunpack.c.l.b16 %v3215
    %v3840 = vunpack.c.l.b16 %v3216
    %v3841 = vunpack.c.l.b16 %v3217
    %v3842 = vunpack.c.l.b16 %v3218
    %v3843 = vunpack.c.l.b16 %v3219
    %v3844 = vunpack.c.l.b16 %v3220
    %v3845 = vunpack.c.l.b16 %v3221
    %v3846 = vunpack.c.l.b16 %v3222
    %v3847 = vunpack.c.l.b16 %v3223
    %v3848 = vpack.c.b16 %v3593, %v3592
    %v3849 = vpack.c.b16 %v3595, %v3594
    %v3850 = vpack.c.b16 %v3597, %v3596
    %v3851 = vpack.c.b16 %v3599, %v3598
    %v3852 = vpack.c.b16 %v3601, %v3600
    %v3853 = vpack.c.b16 %v3603, %v3602
    %v3854 = vpack.c.b16 %v3605, %v3604
    %v3855 = vpack.c.b16 %v3607, %v3606
    %v3856 = vpack.c.b16 %v3609, %v3608
    %v3857 = vpack.c.b16 %v3611, %v3610
    %v3858 = vpack.c.b16 %v3613, %v3612
    %v3859 = vpack.c.b16 %v3615, %v3614
    %v3860 = vpack.c.b16 %v3617, %v3616
    %v3861 = vpack.c.b16 %v3619, %v3618
    %v3862 = vpack.c.b16 %v3621, %v3620
    %v3863 = vpack.c.b16 %v3623, %v3622
    %v3864 = vpack.c.b16 %v3625, %v3624
    %v3865 = vpack.c.b16 %v3627, %v3626
    %v3866 = vpack.c.b16 %v3629, %v3628
    %v3867 = vpack.c.b16 %v3631, %v3630
    %v3868 = vpack.c.b16 %v3633, %v3632
    %v3869 = vpack.c.b16 %v3635, %v3634
    %v3870 = vpack.c.b16 %v3637, %v3636
    %v3871 = vpack.c.b16 %v3639, %v3638
    %v3872 = vpack.c.b16 %v3641, %v3640
    %v3873 = vpack.c.b16 %v3643, %v3642
    %v3874 = vpack.c.b16 %v3645, %v3644
    %v3875 = vpack.c.b16 %v3647, %v3646
    %v3876 = vpack.c.b16 %v3649, %v3648
    %v3877 = vpack.c.b16 %v3651, %v3650
    %v3878 = vpack.c.b16 %v3653, %v3652
    %v3879 = vpack.c.b16 %v3655, %v3654
    %v3880 = vpack.c.b16 %v3657, %v3656
    %v3881 = vpack.c.b16 %v3659, %v3658
    %v3882 = vpack.c.b16 %v3661, %v3660
    %v3883 = vpack.c.b16 %v3663, %v3662
    %v3884 = vpack.c.b16 %v3665, %v3664
    %v3885 = vpack.c.b16 %v3667, %v3666
    %v3886 = vpack.c.b16 %v3669, %v3668
    %v3887 = vpack.c.b16 %v3671, %v3670
    %v3888 = vpack.c.b16 %v3673, %v3672
    %v3889 = vpack.c.b16 %v3675, %v3674
    %v3890 = vpack.c.b16 %v3677, %v3676
    %v3891 = vpack.c.b16 %v3679, %v3678
    %v3892 = vpack.c.b16 %v3681, %v3680
    %v3893 = vpack.c.b16 %v3683, %v3682
    %v3894 = vpack.c.b16 %v3685, %v3684
    %v3895 = vpack.c.b16 %v3687, %v3686
    %v3896 = vpack.c.b16 %v3689, %v3688
    %v3897 = vpack.c.b16 %v3691, %v3690
    %v3898 = vpack.c.b16 %v3693, %v3692
    %v3899 = vpack.c.b16 %v3695, %v3694
    %v3900 = vpack.c.b16 %v3697, %v3696
    %v3901 = vpack.c.b16 %v3699, %v3698
    %v3902 = vpack.c.b16 %v3701, %v3700
    %v3903 = vpack.c.b16 %v3703, %v3702
    %v3904 = vpack.c.b16 %v3705, %v3704
    %v3905 = vpack.c.b16 %v3707, %v3706
    %v3906 = vpack.c.b16 %v3709, %v3708
    %v3907 = vpack.c.b16 %v3711, %v3710
    %v3908 = vpack.c.b16 %v3713, %v3712
    %v3909 = vpack.c.b16 %v3715, %v3714
    %v3910 = vpack.c.b16 %v3717, %v3716
    %v3911 = vpack.c.b16 %v3719, %v3718
    %v3912 = vpack.c.b16 %v3721, %v3720
    %v3913 = vpack.c.b16 %v3723, %v3722
    %v3914 = vpack.c.b16 %v3725, %v3724
    %v3915 = vpack.c.b16 %v3727, %v3726
    %v3916 = vpack.c.b16 %v3729, %v3728
    %v3917 = vpack.c.b16 %v3731, %v3730
    %v3918 = vpack.c.b16 %v3733, %v3732
    %v3919 = vpack.c.b16 %v3735, %v3734
    %v3920 = vpack.c.b16 %v3737, %v3736
    %v3921 = vpack.c.b16 %v3739, %v3738
    %v3922 = vpack.c.b16 %v3741, %v3740
    %v3923 = vpack.c.b16 %v3743, %v3742
    %v3924 = vpack.c.b16 %v3745, %v3744
    %v3925 = vpack.c.b16 %v3747, %v3746
    %v3926 = vpack.c.b16 %v3749, %v3748
    %v3927 = vpack.c.b16 %v3751, %v3750
    %v3928 = vpack.c.b16 %v3753, %v3752
    %v3929 = vpack.c.b16 %v3755, %v3754
    %v3930 = vpack.c.b16 %v3757, %v3756
    %v3931 = vpack.c.b16 %v3759, %v3758
    %v3932 = vpack.c.b16 %v3761, %v3760
    %v3933 = vpack.c.b16 %v3763, %v3762
    %v3934 = vpack.c.b16 %v3765, %v3764
    %v3935 = vpack.c.b16 %v3767, %v3766
    %v3936 = vpack.c.b16 %v3769, %v3768
    %v3937 = vpack.c.b16 %v3771, %v3770
    %v3938 = vpack.c.b16 %v3773, %v3772
    %v3939 = vpack.c.b16 %v3775, %v3774
    %v3940 = vpack.c.b16 %v3777, %v3776
    %v3941 = vpack.c.b16 %v3779, %v3778
    %v3942 = vpack.c.b16 %v3781, %v3780
    %v3943 = vpack.c.b16 %v3783, %v3782
    %v3944 = vpack.c.b16 %v3785, %v3784
    %v3945 = vpack.c.b16 %v3787, %v3786
    %v3946 = vpack.c.b16 %v3789, %v3788
    %v3947 = vpack.c.b16 %v3791, %v3790
    %v3948 = vpack.c.b16 %v3793, %v3792
    %v3949 = vpack.c.b16 %v3795, %v3794
    %v3950 = vpack.c.b16 %v3797, %v3796
    %v3951 = vpack.c.b16 %v3799, %v3798
    %v3952 = vpack.c.b16 %v3801, %v3800
    %v3953 = vpack.c.b16 %v3803, %v3802
    %v3954 = vpack.c.b16 %v3805, %v3804
    %v3955 = vpack.c.b16 %v3807, %v3806
    %v3956 = vpack.c.b16 %v3809, %v3808
    %v3957 = vpack.c.b16 %v3811, %v3810
    %v3958 = vpack.c.b16 %v3813, %v3812
    %v3959 = vpack.c.b16 %v3815, %v3814
    %v3960 = vpack.c.b16 %v3817, %v3816
    %v3961 = vpack.c.b16 %v3819, %v3818
    %v3962 = vpack.c.b16 %v3821, %v3820
    %v3963 = vpack.c.b16 %v3823, %v3822
    %v3964 = vpack.c.b16 %v3825, %v3824
    %v3965 = vpack.c.b16 %v3827, %v3826
    %v3966 = vpack.c.b16 %v3829, %v3828
    %v3967 = vpack.c.b16 %v3831, %v3830
    %v3968 = vpack.c.b16 %v3833, %v3832
    %v3969 = vpack.c.b16 %v3835, %v3834
    %v3970 = vpack.c.b16 %v3837, %v3836
    %v3971 = vpack.c.b16 %v3839, %v3838
    %v3972 = vpack.c.b16 %v3841, %v3840
    %v3973 = vpack.c.b16 %v3843, %v3842
    %v3974 = vpack.c.b16 %v3845, %v3844
    %v3975 = vpack.c.b16 %v3847, %v3846
    %4104 = vmatprep.subr.bf16.mxu0 0
    %4105 = vmatpush1.bf16.msra.mxu0 %v3848
    %4106 = vmatprep.subr.bf16.mxu0 0
    %4107 = vmatpush1.bf16.msra.mxu0 %v3849
    %4108 = vmatprep.subr.bf16.mxu0 0
    %4109 = vmatpush1.bf16.msra.mxu0 %v3850
    %4110 = vmatprep.subr.bf16.mxu0 0
    %4111 = vmatpush1.bf16.msra.mxu0 %v3851
    %4112 = vmatprep.subr.bf16.mxu0 0
    %4113 = vmatpush1.bf16.msra.mxu0 %v3852
    %4114 = vmatprep.subr.bf16.mxu0 0
    %4115 = vmatpush1.bf16.msra.mxu0 %v3853
    %4116 = vmatprep.subr.bf16.mxu0 0
    %4117 = vmatpush1.bf16.msra.mxu0 %v3854
    %4118 = vmatprep.subr.bf16.mxu0 0
    %4119 = vmatpush1.bf16.msra.mxu0 %v3855
    %4120 = vmatprep.subr.bf16.mxu0 0
    %4121 = vmatpush1.bf16.msra.mxu0 %v3856
    %4122 = vmatprep.subr.bf16.mxu0 0
    %4123 = vmatpush1.bf16.msra.mxu0 %v3857
    %4124 = vmatprep.subr.bf16.mxu0 0
    %4125 = vmatpush1.bf16.msra.mxu0 %v3858
    %4126 = vmatprep.subr.bf16.mxu0 0
    %4127 = vmatpush1.bf16.msra.mxu0 %v3859
    %4128 = vmatprep.subr.bf16.mxu0 0
    %4129 = vmatpush1.bf16.msra.mxu0 %v3860
    %4130 = vmatprep.subr.bf16.mxu0 0
    %4131 = vmatpush1.bf16.msra.mxu0 %v3861
    %4132 = vmatprep.subr.bf16.mxu0 0
    %4133 = vmatpush1.bf16.msra.mxu0 %v3862
    %4134 = vmatprep.subr.bf16.mxu0 0
    %4135 = vmatpush1.bf16.msra.mxu0 %v3863
    %4136 = vmatprep.mubr.bf16.mxu0 %v3305
    %4137 = vmatmul.mubr.bf16.gmra.mrb[0].mxu0 %v3304
    %v4138 = vpop.f32.mrb[0].mxu0
    %v4139 = vadd.f32 0.0, %v4138
    %v4140 = vpop.f32.mrb[0].mxu0
    %v4141 = vpop.f32.mrb[0].mxu0
    %v4142 = vpop.f32.mrb[0].mxu0
    %4143 = vdwg.mxu0
    %4144 = vmatprep.subr.bf16.mxu0 0
    %4145 = vmatpush1.bf16.msra.mxu0 %v3864
    %4146 = vmatprep.subr.bf16.mxu0 0
    %4147 = vmatpush1.bf16.msra.mxu0 %v3865
    %4148 = vmatprep.subr.bf16.mxu0 0
    %4149 = vmatpush1.bf16.msra.mxu0 %v3866
    %4150 = vmatprep.subr.bf16.mxu0 0
    %4151 = vmatpush1.bf16.msra.mxu0 %v3867
    %4152 = vmatprep.subr.bf16.mxu0 0
    %4153 = vmatpush1.bf16.msra.mxu0 %v3868
    %4154 = vmatprep.subr.bf16.mxu0 0
    %4155 = vmatpush1.bf16.msra.mxu0 %v3869
    %4156 = vmatprep.subr.bf16.mxu0 0
    %4157 = vmatpush1.bf16.msra.mxu0 %v3870
    %4158 = vmatprep.subr.bf16.mxu0 0
    %4159 = vmatpush1.bf16.msra.mxu0 %v3871
    %4160 = vmatprep.subr.bf16.mxu0 0
    %4161 = vmatpush1.bf16.msra.mxu0 %v3872
    %4162 = vmatprep.subr.bf16.mxu0 0
    %4163 = vmatpush1.bf16.msra.mxu0 %v3873
    %4164 = vmatprep.subr.bf16.mxu0 0
    %4165 = vmatpush1.bf16.msra.mxu0 %v3874
    %4166 = vmatprep.subr.bf16.mxu0 0
    %4167 = vmatpush1.bf16.msra.mxu0 %v3875
    %4168 = vmatprep.subr.bf16.mxu0 0
    %4169 = vmatpush1.bf16.msra.mxu0 %v3876
    %4170 = vmatprep.subr.bf16.mxu0 0
    %4171 = vmatpush1.bf16.msra.mxu0 %v3877
    %4172 = vmatprep.subr.bf16.mxu0 0
    %4173 = vmatpush1.bf16.msra.mxu0 %v3878
    %4174 = vmatprep.subr.bf16.mxu0 0
    %4175 = vmatpush1.bf16.msra.mxu0 %v3879
    %4176 = vmatprep.mubr.bf16.mxu0 %v3307
    %4177 = vmatmul.mubr.bf16.gmra.mrb[0].mxu0 %v3306
    %v4178 = vpop.f32.mrb[0].mxu0
    %v4179 = vadd.f32 %v4139, %v4178
    %v4180 = vpop.f32.mrb[0].mxu0
    %v4181 = vpop.f32.mrb[0].mxu0
    %v4182 = vpop.f32.mrb[0].mxu0
    %4183 = vdwg.mxu0
    %4184 = vmatprep.subr.bf16.mxu0 0
    %4185 = vmatpush1.bf16.msra.mxu0 %v3880
    %4186 = vmatprep.subr.bf16.mxu0 0
    %4187 = vmatpush1.bf16.msra.mxu0 %v3881
    %4188 = vmatprep.subr.bf16.mxu0 0
    %4189 = vmatpush1.bf16.msra.mxu0 %v3882
    %4190 = vmatprep.subr.bf16.mxu0 0
    %4191 = vmatpush1.bf16.msra.mxu0 %v3883
    %4192 = vmatprep.subr.bf16.mxu0 0
    %4193 = vmatpush1.bf16.msra.mxu0 %v3884
    %4194 = vmatprep.subr.bf16.mxu0 0
    %4195 = vmatpush1.bf16.msra.mxu0 %v3885
    %4196 = vmatprep.subr.bf16.mxu0 0
    %4197 = vmatpush1.bf16.msra.mxu0 %v3886
    %4198 = vmatprep.subr.bf16.mxu0 0
    %4199 = vmatpush1.bf16.msra.mxu0 %v3887
    %4200 = vmatprep.subr.bf16.mxu0 0
    %4201 = vmatpush1.bf16.msra.mxu0 %v3888
    %4202 = vmatprep.subr.bf16.mxu0 0
    %4203 = vmatpush1.bf16.msra.mxu0 %v3889
    %4204 = vmatprep.subr.bf16.mxu0 0
    %4205 = vmatpush1.bf16.msra.mxu0 %v3890
    %4206 = vmatprep.subr.bf16.mxu0 0
    %4207 = vmatpush1.bf16.msra.mxu0 %v3891
    %4208 = vmatprep.subr.bf16.mxu0 0
    %4209 = vmatpush1.bf16.msra.mxu0 %v3892
    %4210 = vmatprep.subr.bf16.mxu0 0
    %4211 = vmatpush1.bf16.msra.mxu0 %v3893
    %4212 = vmatprep.subr.bf16.mxu0 0
    %4213 = vmatpush1.bf16.msra.mxu0 %v3894
    %4214 = vmatprep.subr.bf16.mxu0 0
    %4215 = vmatpush1.bf16.msra.mxu0 %v3895
    %4216 = vmatprep.mubr.bf16.mxu0 %v3309
    %4217 = vmatmul.mubr.bf16.gmra.mrb[0].mxu0 %v3308
    %v4218 = vpop.f32.mrb[0].mxu0
    %v4219 = vadd.f32 %v4179, %v4218
    %v4220 = vpop.f32.mrb[0].mxu0
    %v4221 = vpop.f32.mrb[0].mxu0
    %v4222 = vpop.f32.mrb[0].mxu0
    %4223 = vdwg.mxu0
    %4224 = vmatprep.subr.bf16.mxu0 0
    %4225 = vmatpush1.bf16.msra.mxu0 %v3896
    %4226 = vmatprep.subr.bf16.mxu0 0
    %4227 = vmatpush1.bf16.msra.mxu0 %v3897
    %4228 = vmatprep.subr.bf16.mxu0 0
    %4229 = vmatpush1.bf16.msra.mxu0 %v3898
    %4230 = vmatprep.subr.bf16.mxu0 0
    %4231 = vmatpush1.bf16.msra.mxu0 %v3899
    %4232 = vmatprep.subr.bf16.mxu0 0
    %4233 = vmatpush1.bf16.msra.mxu0 %v3900
    %4234 = vmatprep.subr.bf16.mxu0 0
    %4235 = vmatpush1.bf16.msra.mxu0 %v3901
    %4236 = vmatprep.subr.bf16.mxu0 0
    %4237 = vmatpush1.bf16.msra.mxu0 %v3902
    %4238 = vmatprep.subr.bf16.mxu0 0
    %4239 = vmatpush1.bf16.msra.mxu0 %v3903
    %4240 = vmatprep.subr.bf16.mxu0 0
    %4241 = vmatpush1.bf16.msra.mxu0 %v3904
    %4242 = vmatprep.subr.bf16.mxu0 0
    %4243 = vmatpush1.bf16.msra.mxu0 %v3905
    %4244 = vmatprep.subr.bf16.mxu0 0
    %4245 = vmatpush1.bf16.msra.mxu0 %v3906
    %4246 = vmatprep.subr.bf16.mxu0 0
    %4247 = vmatpush1.bf16.msra.mxu0 %v3907
    %4248 = vmatprep.subr.bf16.mxu0 0
    %4249 = vmatpush1.bf16.msra.mxu0 %v3908
    %4250 = vmatprep.subr.bf16.mxu0 0
    %4251 = vmatpush1.bf16.msra.mxu0 %v3909
    %4252 = vmatprep.subr.bf16.mxu0 0
    %4253 = vmatpush1.bf16.msra.mxu0 %v3910
    %4254 = vmatprep.subr.bf16.mxu0 0
    %4255 = vmatpush1.bf16.msra.mxu0 %v3911
    %4256 = vmatprep.mubr.bf16.mxu0 %v3311
    %4257 = vmatmul.mubr.bf16.gmra.mrb[0].mxu0 %v3310
    %v4258 = vpop.f32.mrb[0].mxu0
    %v4259 = vadd.f32 %v4219, %v4258
    %v4260 = vpop.f32.mrb[0].mxu0
    %v4261 = vpop.f32.mrb[0].mxu0
    %v4262 = vpop.f32.mrb[0].mxu0
    %4263 = vdwg.mxu0
    %4264 = vmatprep.subr.bf16.mxu0 0
    %4265 = vmatpush1.bf16.msra.mxu0 %v3912
    %4266 = vmatprep.subr.bf16.mxu0 0
    %4267 = vmatpush1.bf16.msra.mxu0 %v3913
    %4268 = vmatprep.subr.bf16.mxu0 0
    %4269 = vmatpush1.bf16.msra.mxu0 %v3914
    %4270 = vmatprep.subr.bf16.mxu0 0
    %4271 = vmatpush1.bf16.msra.mxu0 %v3915
    %4272 = vmatprep.subr.bf16.mxu0 0
    %4273 = vmatpush1.bf16.msra.mxu0 %v3916
    %4274 = vmatprep.subr.bf16.mxu0 0
    %4275 = vmatpush1.bf16.msra.mxu0 %v3917
    %4276 = vmatprep.subr.bf16.mxu0 0
    %4277 = vmatpush1.bf16.msra.mxu0 %v3918
    %4278 = vmatprep.subr.bf16.mxu0 0
    %4279 = vmatpush1.bf16.msra.mxu0 %v3919
    %4280 = vmatprep.subr.bf16.mxu0 0
    %4281 = vmatpush1.bf16.msra.mxu0 %v3920
    %4282 = vmatprep.subr.bf16.mxu0 0
    %4283 = vmatpush1.bf16.msra.mxu0 %v3921
    %4284 = vmatprep.subr.bf16.mxu0 0
    %4285 = vmatpush1.bf16.msra.mxu0 %v3922
    %4286 = vmatprep.subr.bf16.mxu0 0
    %4287 = vmatpush1.bf16.msra.mxu0 %v3923
    %4288 = vmatprep.subr.bf16.mxu0 0
    %4289 = vmatpush1.bf16.msra.mxu0 %v3924
    %4290 = vmatprep.subr.bf16.mxu0 0
    %4291 = vmatpush1.bf16.msra.mxu0 %v3925
    %4292 = vmatprep.subr.bf16.mxu0 0
    %4293 = vmatpush1.bf16.msra.mxu0 %v3926
    %4294 = vmatprep.subr.bf16.mxu0 0
    %4295 = vmatpush1.bf16.msra.mxu0 %v3927
    %4296 = vmatprep.mubr.bf16.mxu0 %v3313
    %4297 = vmatmul.mubr.bf16.gmra.mrb[0].mxu0 %v3312
    %v4298 = vpop.f32.mrb[0].mxu0
    %v4299 = vadd.f32 %v4259, %v4298
    %v4300 = vpop.f32.mrb[0].mxu0
    %v4301 = vpop.f32.mrb[0].mxu0
    %v4302 = vpop.f32.mrb[0].mxu0
    %4303 = vdwg.mxu0
    %4304 = vmatprep.subr.bf16.mxu0 0
    %4305 = vmatpush1.bf16.msra.mxu0 %v3928
    %4306 = vmatprep.subr.bf16.mxu0 0
    %4307 = vmatpush1.bf16.msra.mxu0 %v3929
    %4308 = vmatprep.subr.bf16.mxu0 0
    %4309 = vmatpush1.bf16.msra.mxu0 %v3930
    %4310 = vmatprep.subr.bf16.mxu0 0
    %4311 = vmatpush1.bf16.msra.mxu0 %v3931
    %4312 = vmatprep.subr.bf16.mxu0 0
    %4313 = vmatpush1.bf16.msra.mxu0 %v3932
    %4314 = vmatprep.subr.bf16.mxu0 0
    %4315 = vmatpush1.bf16.msra.mxu0 %v3933
    %4316 = vmatprep.subr.bf16.mxu0 0
    %4317 = vmatpush1.bf16.msra.mxu0 %v3934
    %4318 = vmatprep.subr.bf16.mxu0 0
    %4319 = vmatpush1.bf16.msra.mxu0 %v3935
    %4320 = vmatprep.subr.bf16.mxu0 0
    %4321 = vmatpush1.bf16.msra.mxu0 %v3936
    %4322 = vmatprep.subr.bf16.mxu0 0
    %4323 = vmatpush1.bf16.msra.mxu0 %v3937
    %4324 = vmatprep.subr.bf16.mxu0 0
    %4325 = vmatpush1.bf16.msra.mxu0 %v3938
    %4326 = vmatprep.subr.bf16.mxu0 0
    %4327 = vmatpush1.bf16.msra.mxu0 %v3939
    %4328 = vmatprep.subr.bf16.mxu0 0
    %4329 = vmatpush1.bf16.msra.mxu0 %v3940
    %4330 = vmatprep.subr.bf16.mxu0 0
    %4331 = vmatpush1.bf16.msra.mxu0 %v3941
    %4332 = vmatprep.subr.bf16.mxu0 0
    %4333 = vmatpush1.bf16.msra.mxu0 %v3942
    %4334 = vmatprep.subr.bf16.mxu0 0
    %4335 = vmatpush1.bf16.msra.mxu0 %v3943
    %4336 = vmatprep.mubr.bf16.mxu0 %v3315
    %4337 = vmatmul.mubr.bf16.gmra.mrb[0].mxu0 %v3314
    %v4338 = vpop.f32.mrb[0].mxu0
    %v4339 = vadd.f32 %v4299, %v4338
    %v4340 = vpop.f32.mrb[0].mxu0
    %v4341 = vpop.f32.mrb[0].mxu0
    %v4342 = vpop.f32.mrb[0].mxu0
    %4343 = vdwg.mxu0
    %4344 = vmatprep.subr.bf16.mxu0 0
    %4345 = vmatpush1.bf16.msra.mxu0 %v3944
    %4346 = vmatprep.subr.bf16.mxu0 0
    %4347 = vmatpush1.bf16.msra.mxu0 %v3945
    %4348 = vmatprep.subr.bf16.mxu0 0
    %4349 = vmatpush1.bf16.msra.mxu0 %v3946
    %4350 = vmatprep.subr.bf16.mxu0 0
    %4351 = vmatpush1.bf16.msra.mxu0 %v3947
    %4352 = vmatprep.subr.bf16.mxu0 0
    %4353 = vmatpush1.bf16.msra.mxu0 %v3948
    %4354 = vmatprep.subr.bf16.mxu0 0
    %4355 = vmatpush1.bf16.msra.mxu0 %v3949
    %4356 = vmatprep.subr.bf16.mxu0 0
    %4357 = vmatpush1.bf16.msra.mxu0 %v3950
    %4358 = vmatprep.subr.bf16.mxu0 0
    %4359 = vmatpush1.bf16.msra.mxu0 %v3951
    %4360 = vmatprep.subr.bf16.mxu0 0
    %4361 = vmatpush1.bf16.msra.mxu0 %v3952
    %4362 = vmatprep.subr.bf16.mxu0 0
    %4363 = vmatpush1.bf16.msra.mxu0 %v3953
    %4364 = vmatprep.subr.bf16.mxu0 0
    %4365 = vmatpush1.bf16.msra.mxu0 %v3954
    %4366 = vmatprep.subr.bf16.mxu0 0
    %4367 = vmatpush1.bf16.msra.mxu0 %v3955
    %4368 = vmatprep.subr.bf16.mxu0 0
    %4369 = vmatpush1.bf16.msra.mxu0 %v3956
    %4370 = vmatprep.subr.bf16.mxu0 0
    %4371 = vmatpush1.bf16.msra.mxu0 %v3957
    %4372 = vmatprep.subr.bf16.mxu0 0
    %4373 = vmatpush1.bf16.msra.mxu0 %v3958
    %4374 = vmatprep.subr.bf16.mxu0 0
    %4375 = vmatpush1.bf16.msra.mxu0 %v3959
    %4376 = vmatprep.mubr.bf16.mxu0 %v3317
    %4377 = vmatmul.mubr.bf16.gmra.mrb[0].mxu0 %v3316
    %v4378 = vpop.f32.mrb[0].mxu0
    %v4379 = vadd.f32 %v4339, %v4378
    %v4380 = vpop.f32.mrb[0].mxu0
    %v4381 = vpop.f32.mrb[0].mxu0
    %v4382 = vpop.f32.mrb[0].mxu0
    %4383 = vdwg.mxu0
    %4384 = vmatprep.subr.bf16.mxu0 0
    %4385 = vmatpush1.bf16.msra.mxu0 %v3960
    %4386 = vmatprep.subr.bf16.mxu0 0
    %4387 = vmatpush1.bf16.msra.mxu0 %v3961
    %4388 = vmatprep.subr.bf16.mxu0 0
    %4389 = vmatpush1.bf16.msra.mxu0 %v3962
    %4390 = vmatprep.subr.bf16.mxu0 0
    %4391 = vmatpush1.bf16.msra.mxu0 %v3963
    %4392 = vmatprep.subr.bf16.mxu0 0
    %4393 = vmatpush1.bf16.msra.mxu0 %v3964
    %4394 = vmatprep.subr.bf16.mxu0 0
    %4395 = vmatpush1.bf16.msra.mxu0 %v3965
    %4396 = vmatprep.subr.bf16.mxu0 0
    %4397 = vmatpush1.bf16.msra.mxu0 %v3966
    %4398 = vmatprep.subr.bf16.mxu0 0
    %4399 = vmatpush1.bf16.msra.mxu0 %v3967
    %4400 = vmatprep.subr.bf16.mxu0 0
    %4401 = vmatpush1.bf16.msra.mxu0 %v3968
    %4402 = vmatprep.subr.bf16.mxu0 0
    %4403 = vmatpush1.bf16.msra.mxu0 %v3969
    %4404 = vmatprep.subr.bf16.mxu0 0
    %4405 = vmatpush1.bf16.msra.mxu0 %v3970
    %4406 = vmatprep.subr.bf16.mxu0 0
    %4407 = vmatpush1.bf16.msra.mxu0 %v3971
    %4408 = vmatprep.subr.bf16.mxu0 0
    %4409 = vmatpush1.bf16.msra.mxu0 %v3972
    %4410 = vmatprep.subr.bf16.mxu0 0
    %4411 = vmatpush1.bf16.msra.mxu0 %v3973
    %4412 = vmatprep.subr.bf16.mxu0 0
    %4413 = vmatpush1.bf16.msra.mxu0 %v3974
    %4414 = vmatprep.subr.bf16.mxu0 0
    %4415 = vmatpush1.bf16.msra.mxu0 %v3975
    %4416 = vmatprep.mubr.bf16.mxu0 %v3319
    %4417 = vmatmul.mubr.bf16.gmra.mrb[0].mxu0 %v3318
    %v4418 = vpop.f32.mrb[0].mxu0
    %v4419 = vadd.f32 %v4379, %v4418
    %v4420 = vpop.f32.mrb[0].mxu0
    %v4421 = vpop.f32.mrb[0].mxu0
    %v4422 = vpop.f32.mrb[0].mxu0
    %4423 = vdwg.mxu0
    %v4424 = vadd.f32 %v2365, %v4419
    %v4425 = vld [vmem:[%s5] sm:$0x1]
    %v4427 = vlaneseq
    %v4428 = vshrl.u32 %v4427, 7
    %v4429 = vsub.s32 0, %v4428
    %v4430 = vrot.slane %v4425, %v4429
    %v4432 = vadd.f32 %v4424, %v4430
    %v4433 = vmul.f32 %v4432, %v4432
    %v4434 = vsel %vm2518, %v4433, 0.0
    %4435 = vadd.xlane.f32.xlu0 %v4434
    %v4436 = vpop.xlane.xlu0 %4435
    %v4437 = vrsqrt.pop %v4436
    %v4438 = vmul.f32 %v4432, %v4437
    %4439 = vst [vmem:[#allocation2] sm:$0x3] %v4438
    // Predicated region
    $region26: #{embedding_net_image_forward.1} parent=1 // pred_check
      _
    $region27: #{embedding_net_image_forward.1} parent=1 // pred_check_branch
      %4441 = sbr.rel (0) target = $region29
    $region28: #{embedding_net_image_forward.1} parent=1 // pred_region
      %s4443 = ssub.s32 32, 32
      %4444 = vsyncadd [#allocation3], %s4443
      %s4446 = sshll.u32 [#allocation2], 4
      %s4447 = int_to_ptr.vmem [resolvable:$true] %s4446
      %4449 = dma.vmem_to_hbm [thread:$0]  %s4447, 32, %s6, [#allocation3]
    $region29: #{embedding_net_image_forward.1} parent=1 // pred_fallthru
      _
    // Predicated region
    $region30: #{embedding_net_image_forward.1} parent=1 // pred_check
      _
    $region31: #{embedding_net_image_forward.1} parent=1 // pred_check_branch
      %4451 = sbr.rel (0) target = $region33
    $region32: #{embedding_net_image_forward.1} parent=1 // pred_region
      %4452 = dma.done [#allocation3], 32
    $region33: #{embedding_net_image_forward.1} parent=1 // pred_fallthru
      _
    %4453 = vsyncpa [#allocation3], 1

</llo_original>
